<compile_context>
chip_gen: v7x
topology: tpu7x:2x2x1
jax: 0.10.0
libtpu: 0.0.40
codegen_flags: <defaults>
</compile_context>

<pallas_src>
import jax
import jax.numpy as jnp
import numpy as np
from jax.experimental import pallas as pl
from jax.experimental.pallas import tpu as pltpu


# ------------------------------ Pallas kernel ------------------------------ #

def adaatt_core_kernel(xt_ref, fc_ref, hprev_ref, cprev_ref, att_ref, patt_ref,
                       wlstm_ref, blstm_ref, w1_ref, b1_ref, wemb_ref, bemb_ref,
                       walpha_ref, balpha_ref, watt2h_ref, batt2h_ref,
                       out_ref, h_ref, c_ref):
    f32 = jnp.float32
    bf16 = jnp.bfloat16

    xt = xt_ref[...]          # (B, E)  f32
    fc = fc_ref[...]          # (B, Fc) f32
    hp = hprev_ref[...]       # (B, D)  f32
    cp = cprev_ref[...]       # (B, D)  f32
    d = hp.shape[-1]

    # ---- max-out LSTM step + visual sentinel: one fused K=3E matmul ---------
    # bf16 operands on the MXU, f32 accumulation; activations stay f32 (v5e-safe).
    x_all = jnp.concatenate([xt, fc, hp], axis=1)                            # (B, 3E)
    g_all = (jnp.dot(x_all.astype(bf16), wlstm_ref[...],
                     preferred_element_type=f32) + blstm_ref[...])           # (B, 6D) f32

    sig = jax.nn.sigmoid(g_all[:, :3 * d])
    in_gate = sig[:, 0:d]
    forget_gate = sig[:, d:2 * d]
    out_gate = sig[:, 2 * d:3 * d]
    in_transform = jnp.maximum(g_all[:, 3 * d:4 * d], g_all[:, 4 * d:5 * d])  # max-out

    next_c = forget_gate * cp + in_gate * in_transform
    tanh_c = jnp.tanh(next_c)
    top_h = out_gate * tanh_c
    sentinel = jax.nn.sigmoid(g_all[:, 5 * d:6 * d]) * tanh_c                # fake region

    h_ref[...] = top_h
    c_ref[...] = next_c

    # ---- adaptive attention (whole batch, lane-dense) -----------------------
    # stage 1: [sentinel | top_h] @ blockdiag(wfr, who) -> [fr_pre | h_pre]
    x1 = jnp.concatenate([sentinel, top_h], axis=1)                          # (B, 2D)
    pre = (jnp.dot(x1.astype(bf16), w1_ref[...],
                   preferred_element_type=f32) + b1_ref[...])                # (B, 2E)
    e = d
    fr = jnp.maximum(pre[:, :e], 0.0)                                        # relu  (B, E)
    h_lin = jnp.tanh(pre[:, e:])                                             # tanh  (B, E)

    # stage 2: [fr | h_lin] @ [[wfre 0];[whoe whoe]] -> [fr_emb+h_emb | h_emb]
    fr_hl = jnp.concatenate([fr, h_lin], axis=1)                             # (B, 2E)
    emb = (jnp.dot(fr_hl.astype(bf16), wemb_ref[...],
                   preferred_element_type=f32) + bemb_ref[...])              # (B, 2A)
    a = walpha_ref.shape[-1]
    fake_emb = emb[:, :a]                                                    # fr_emb + h_emb
    h_emb = emb[:, a:]                                                       # h_emb

    walpha = walpha_ref[...]                                                 # (1, A) f32
    balpha = balpha_ref[...]                                                 # (1, 1) f32

    hA_fake = jnp.tanh(fake_emb)                                             # (B, A)   f32
    hA_conv = jnp.tanh(patt_ref[...] + h_emb[:, None, :])                    # (B, L, A) f32
    # TODO(synk): on v6e/v7x this tanh + walpha contraction could run in bf16 or
    #             on the idle MXU if the bundle dump ever shows EUP/VALU binding.

    s_fake = jnp.sum(hA_fake * walpha, axis=-1, keepdims=True) + balpha      # (B, 1)
    s_conv = jnp.sum(hA_conv * walpha, axis=-1) + balpha                     # (B, L)

    # lane-packed softmax over the L+1 candidates: one unmasked 128-lane vector
    # [s_conv (L) | s_fake (1) | -1e30 padding]; exp of pad lanes underflows to 0.
    b_rows, l = s_conv.shape
    lanes = ((l + 1 + 127) // 128) * 128
    npad = lanes - (l + 1)
    parts = [s_conv, s_fake]
    if npad > 0:
        parts.append(jnp.full((b_rows, npad), -1e30, f32))
    scores = jnp.concatenate(parts, axis=1)                                  # (B, lanes)

    m = jnp.max(scores, axis=-1, keepdims=True)                              # (B, 1)
    exps = jnp.exp(scores - m)                                               # (B, lanes)
    inv_den = pl.reciprocal(jnp.sum(exps, axis=-1, keepdims=True),
                            approx=True)                                     # (B, 1), EUP
    pi_conv = exps[:, :l] * inv_den                                          # (B, L)
    pi_fake = jnp.exp(s_fake - m) * inv_den                                  # (B, 1)

    # visAtt = PI @ [fake_region ; spatial features]
    # TODO(synk): the pi_conv lane->sublane broadcast is the remaining XLU relayout;
    #             could be moved to the idle MXU as a batched matvec if it binds.
    vis = pi_fake * fr + jnp.sum(pi_conv[:, :, None] * att_ref[...], axis=1)  # (B, D) f32
    atten_out = vis + h_lin

    out_ref[...] = jnp.tanh(
        jnp.dot(atten_out.astype(bf16), watt2h_ref[...],
                preferred_element_type=f32) + batt2h_ref[...])


# ------------------------------ JAX wrappers ------------------------------- #

def _full_spec(shape):
    zeros = (0,) * len(shape)
    return pl.BlockSpec(shape, lambda i, _z=zeros: _z)


def pack_params(p):
    """Pack per-Linear weights into fused / block-structured matrices.

    Large matmul weights are stored in bf16 (MXU-native, half the HBM DMA);
    biases and the attention vector walpha stay in f32 (added post-accumulation).
    """
    f32, bf16 = jnp.float32, jnp.bfloat16
    wlstm = jnp.concatenate([
        jnp.concatenate([p["wx"], p["rx"]], axis=1),
        jnp.concatenate([p["wv"], p["rv"]], axis=1),
        jnp.concatenate([p["wh"], p["rh"]], axis=1)], axis=0)               # (3E, 6D)
    blstm = jnp.concatenate([p["bg"], p["rb"]], axis=1).astype(f32)         # (1, 6D)

    d, e = p["wfr"].shape
    a = p["wfre"].shape[1]
    zde = jnp.zeros((d, e), f32)
    zea = jnp.zeros((e, a), f32)
    w1 = jnp.concatenate([
        jnp.concatenate([p["wfr"], zde], axis=1),
        jnp.concatenate([zde, p["who"]], axis=1)], axis=0)                  # (2D, 2E)
    b1 = jnp.concatenate([p["bfr"], p["bho"]], axis=1)                      # (1, 2E)
    wemb = jnp.concatenate([
        jnp.concatenate([p["wfre"], zea], axis=1),
        jnp.concatenate([p["whoe"], p["whoe"]], axis=1)], axis=0)           # (2E, 2A)
    bemb = jnp.concatenate([p["bfre"] + p["bhoe"], p["bhoe"]], axis=1)      # (1, 2A)

    # TODO(synk): on v7x, fp8 weight quantization would halve weight DMA again.
    return {"wlstm": wlstm.astype(bf16), "blstm": blstm,
            "w1": w1.astype(bf16), "b1": b1.astype(f32),
            "wemb": wemb.astype(bf16), "bemb": bemb.astype(f32),
            "walpha": p["walpha"].astype(f32), "balpha": p["balpha"].astype(f32),
            "watt2h": p["watt2h"].astype(bf16), "batt2h": p["batt2h"].astype(f32)}


def ada_att_core(xt, fc_feats, att_feats, p_att_feats, state, step, packed):
    """Fused forward of AdaAttCore: returns (atten_out, new_state)."""
    # TODO(synk): `step` and training-mode dropout are not modeled (eval forward);
    # a VMEM-resident multi-token decode loop (weights loaded once, (h,c) carried
    # in scratch) is the next-level optimization but changes the per-step API.
    del step
    h_prev = state[0][0]   # num_layers == 1
    c_prev = state[1][0]
    b, d = h_prev.shape

    # Feature tensors travel in bf16 (callers should pre-cast once per image).
    att_bf = att_feats.astype(jnp.bfloat16)
    patt_bf = p_att_feats.astype(jnp.bfloat16)

    ins = [xt, fc_feats, h_prev, c_prev, att_bf, patt_bf,
           packed["wlstm"], packed["blstm"], packed["w1"], packed["b1"],
           packed["wemb"], packed["bemb"], packed["walpha"], packed["balpha"],
           packed["watt2h"], packed["batt2h"]]

    atten_out, next_h, next_c = pl.pallas_call(
        adaatt_core_kernel,
        grid=(1,),
        in_specs=[_full_spec(x.shape) for x in ins],
        out_specs=(_full_spec((b, d)),) * 3,
        out_shape=(jax.ShapeDtypeStruct((b, d), jnp.float32),) * 3,
        # P8: update the recurrent state in place (h_prev -> h_out, c_prev -> c_out).
        input_output_aliases={2: 1, 3: 2},
        compiler_params=pltpu.CompilerParams(dimension_semantics=("arbitrary",)),
        # NOTE: at B=8 only one TensorCore is useful; for batch/beam >= 16 on v7x,
        # add a leading "parallel" grid axis over B.
    )(*ins)
    return atten_out, (next_h[None, ...], next_c[None, ...])


# --------------------------- pure-JAX reference ----------------------------- #

def reference_core(xt, fc, att, patt, state, p):
    hp, cp = state[0][0], state[1][0]
    d = hp.shape[-1]
    gates = xt @ p["wx"] + fc @ p["wv"] + hp @ p["wh"] + p["bg"]
    sig = jax.nn.sigmoid(gates[:, :3 * d])
    in_g, f_g, o_g = sig[:, :d], sig[:, d:2 * d], sig[:, 2 * d:3 * d]
    in_t = jnp.maximum(gates[:, 3 * d:4 * d], gates[:, 4 * d:5 * d])
    next_c = f_g * cp + in_g * in_t
    tanh_c = jnp.tanh(next_c)
    top_h = o_g * tanh_c
    n5 = xt @ p["rx"] + fc @ p["rv"] + hp @ p["rh"] + p["rb"]
    sent = jax.nn.sigmoid(n5) * tanh_c

    fr = jax.nn.relu(sent @ p["wfr"] + p["bfr"])
    fr_emb = fr @ p["wfre"] + p["bfre"]
    h_lin = jnp.tanh(top_h @ p["who"] + p["bho"])
    h_emb = h_lin @ p["whoe"] + p["bhoe"]

    img_all = jnp.concatenate([fr[:, None, :], att], axis=1)           # (B, L+1, D)
    img_all_emb = jnp.concatenate([fr_emb[:, None, :], patt], axis=1)  # (B, L+1, A)
    hA = jnp.tanh(img_all_emb + h_emb[:, None, :])
    scores = jnp.einsum("bla,a->bl", hA, p["walpha"][0]) + p["balpha"][0, 0]
    pi = jax.nn.softmax(scores, axis=1)
    vis = jnp.einsum("bl,bld->bd", pi, img_all)
    atten_out = vis + h_lin
    return jnp.tanh(atten_out @ p["watt2h"] + p["batt2h"]), (top_h[None], next_c[None])


# ---------------------------------- main ------------------------------------ #

if __name__ == "__main__":
    B, E, Fc, D, A, L = 8, 128, 128, 128, 128, 64   # E == D == A (required by the model)

    key = jax.random.PRNGKey(0)
    ks = iter(jax.random.split(key, 32))
    rnd = lambda shape, s=0.05: (s * jax.random.normal(next(ks), shape)).astype(jnp.float32)

    params = {
        # LSTM (single layer, max-out -> 5*D gates); Linear biases folded into bg.
        "wx": rnd((E, 5 * D)), "wv": rnd((Fc, 5 * D)), "wh": rnd((D, 5 * D)), "bg": rnd((1, 5 * D)),
        # sentinel gate
        "rx": rnd((E, D)), "rv": rnd((Fc, D)), "rh": rnd((D, D)), "rb": rnd((1, D)),
        # attention
        "wfr": rnd((D, E)), "bfr": rnd((1, E)),
        "wfre": rnd((E, A)), "bfre": rnd((1, A)),
        "who": rnd((D, E)), "bho": rnd((1, E)),
        "whoe": rnd((E, A)), "bhoe": rnd((1, A)),
        "walpha": rnd((1, A)), "balpha": rnd((1, 1)),
        "watt2h": rnd((D, D)), "batt2h": rnd((1, D)),
    }
    packed = pack_params(params)   # done once (outside the decode loop), bf16 weights

    xt = rnd((B, E), 1.0)
    fc_feats = rnd((B, Fc), 1.0)
    att_feats = rnd((B, L, D), 1.0)
    p_att_feats = rnd((B, L, A), 1.0)
    state = (rnd((1, B, D), 0.5), rnd((1, B, D), 0.5))

    core = jax.jit(ada_att_core)
    atten_out, new_state = core(xt, fc_feats, att_feats, p_att_feats, state, 0, packed)
    jax.block_until_ready(atten_out)
    jax.block_until_ready(new_state)

    ref_out, ref_state = reference_core(xt, fc_feats, att_feats, p_att_feats, state, params)
    # bf16 matmul operands + approx reciprocal -> compare against f32 reference at 2e-2.
    np.testing.assert_allclose(np.asarray(atten_out), np.asarray(ref_out), rtol=2e-2, atol=2e-2)
    np.testing.assert_allclose(np.asarray(new_state[0]), np.asarray(ref_state[0]), rtol=2e-2, atol=2e-2)
    np.testing.assert_allclose(np.asarray(new_state[1]), np.asarray(ref_state[1]), rtol=2e-2, atol=2e-2)

    print("KERNEL_OK")
</pallas_src>

<mosaic_0001>
module attributes {stable_mosaic.version = 11 : i64} {
  func.func @adaatt_core_kernel(%arg0: i32, %arg1: memref<8x128xf32, #tpu.memory_space<vmem>>, %arg2: memref<8x128xf32, #tpu.memory_space<vmem>>, %arg3: memref<8x128xf32, #tpu.memory_space<vmem>>, %arg4: memref<8x128xf32, #tpu.memory_space<vmem>>, %arg5: memref<8x64x128xbf16, #tpu.memory_space<vmem>>, %arg6: memref<8x64x128xbf16, #tpu.memory_space<vmem>>, %arg7: memref<384x768xbf16, #tpu.memory_space<vmem>>, %arg8: memref<1x768xf32, #tpu.memory_space<vmem>>, %arg9: memref<256x256xbf16, #tpu.memory_space<vmem>>, %arg10: memref<1x256xf32, #tpu.memory_space<vmem>>, %arg11: memref<256x256xbf16, #tpu.memory_space<vmem>>, %arg12: memref<1x256xf32, #tpu.memory_space<vmem>>, %arg13: memref<1x128xf32, #tpu.memory_space<vmem>>, %arg14: memref<1x1xf32, #tpu.memory_space<vmem>>, %arg15: memref<128x128xbf16, #tpu.memory_space<vmem>>, %arg16: memref<1x128xf32, #tpu.memory_space<vmem>>, %arg17: memref<8x128xf32, #tpu.memory_space<vmem>>, %arg18: memref<8x128xf32, #tpu.memory_space<vmem>>, %arg19: memref<8x128xf32, #tpu.memory_space<vmem>>) attributes {dimension_semantics = [#tpu.dimension_semantics<arbitrary>], iteration_bounds = array<i64: 1>, scalar_prefetch = 0 : i64, scratch_operands = 0 : i64, tpu.core_type = #tpu.core_type<tc>, window_params = [{pipeline_mode = #tpu.pipeline_mode<synchronous>, transform_indices = @transform_0, window_bounds = array<i64: 8, 128>}, {pipeline_mode = #tpu.pipeline_mode<synchronous>, transform_indices = @transform_1, window_bounds = array<i64: 8, 128>}, {pipeline_mode = #tpu.pipeline_mode<synchronous>, transform_indices = @transform_2, window_bounds = array<i64: 8, 128>}, {pipeline_mode = #tpu.pipeline_mode<synchronous>, transform_indices = @transform_3, window_bounds = array<i64: 8, 128>}, {pipeline_mode = #tpu.pipeline_mode<synchronous>, transform_indices = @transform_4, window_bounds = array<i64: 8, 64, 128>}, {pipeline_mode = #tpu.pipeline_mode<synchronous>, transform_indices = @transform_5, window_bounds = array<i64: 8, 64, 128>}, {pipeline_mode = #tpu.pipeline_mode<synchronous>, transform_indices = @transform_6, window_bounds = array<i64: 384, 768>}, {pipeline_mode = #tpu.pipeline_mode<synchronous>, transform_indices = @transform_7, window_bounds = array<i64: 1, 768>}, {pipeline_mode = #tpu.pipeline_mode<synchronous>, transform_indices = @transform_8, window_bounds = array<i64: 256, 256>}, {pipeline_mode = #tpu.pipeline_mode<synchronous>, transform_indices = @transform_9, window_bounds = array<i64: 1, 256>}, {pipeline_mode = #tpu.pipeline_mode<synchronous>, transform_indices = @transform_10, window_bounds = array<i64: 256, 256>}, {pipeline_mode = #tpu.pipeline_mode<synchronous>, transform_indices = @transform_11, window_bounds = array<i64: 1, 256>}, {pipeline_mode = #tpu.pipeline_mode<synchronous>, transform_indices = @transform_12, window_bounds = array<i64: 1, 128>}, {pipeline_mode = #tpu.pipeline_mode<synchronous>, transform_indices = @transform_13, window_bounds = array<i64: 1, 1>}, {pipeline_mode = #tpu.pipeline_mode<synchronous>, transform_indices = @transform_14, window_bounds = array<i64: 128, 128>}, {pipeline_mode = #tpu.pipeline_mode<synchronous>, transform_indices = @transform_15, window_bounds = array<i64: 1, 128>}, {pipeline_mode = #tpu.pipeline_mode<synchronous>, transform_indices = @transform_16, window_bounds = array<i64: 8, 128>}, {pipeline_mode = #tpu.pipeline_mode<synchronous>, transform_indices = @transform_17, window_bounds = array<i64: 8, 128>}, {pipeline_mode = #tpu.pipeline_mode<synchronous>, transform_indices = @transform_18, window_bounds = array<i64: 8, 128>}]} {
    %c0 = arith.constant 0 : index
    %c0_0 = arith.constant 0 : index
    %0 = vector.load %arg1[%c0, %c0_0] : memref<8x128xf32, #tpu.memory_space<vmem>>, vector<8x128xf32>
    %c0_1 = arith.constant 0 : index
    %c0_2 = arith.constant 0 : index
    %1 = vector.load %arg2[%c0_1, %c0_2] : memref<8x128xf32, #tpu.memory_space<vmem>>, vector<8x128xf32>
    %c0_3 = arith.constant 0 : index
    %c0_4 = arith.constant 0 : index
    %2 = vector.load %arg3[%c0_3, %c0_4] : memref<8x128xf32, #tpu.memory_space<vmem>>, vector<8x128xf32>
    %c0_5 = arith.constant 0 : index
    %c0_6 = arith.constant 0 : index
    %3 = vector.load %arg4[%c0_5, %c0_6] : memref<8x128xf32, #tpu.memory_space<vmem>>, vector<8x128xf32>
    %4 = tpu.concatenate %0, %1, %2 in 1 : vector<8x128xf32>, vector<8x128xf32>, vector<8x128xf32> -> vector<8x384xf32>
    %5 = arith.truncf %4 : vector<8x384xf32> to vector<8x384xbf16>
    %c0_7 = arith.constant 0 : index
    %c0_8 = arith.constant 0 : index
    %6 = vector.load %arg7[%c0_7, %c0_8] : memref<384x768xbf16, #tpu.memory_space<vmem>>, vector<384x768xbf16>
    %cst = arith.constant dense<0.000000e+00> : vector<8x768xf32>
    %7 = tpu.matmul %5, %6, %cst {dimension_numbers = #tpu.dot_dimension_numbers<[1], [0], [0], [1], [0, 0, 1, 1], [], []>} : vector<8x384xbf16>, vector<384x768xbf16>, vector<8x768xf32> -> vector<8x768xf32>
    %c0_9 = arith.constant 0 : index
    %c0_10 = arith.constant 0 : index
    %8 = vector.load %arg8[%c0_9, %c0_10] : memref<1x768xf32, #tpu.memory_space<vmem>>, vector<1x768xf32>
    %9 = vector.broadcast %8 : vector<1x768xf32> to vector<8x768xf32>
    %10 = arith.addf %7, %9 : vector<8x768xf32>
    %11 = vector.extract_strided_slice %10 {offsets = [0, 0], sizes = [8, 384], strides = [1, 1]} : vector<8x768xf32> to vector<8x384xf32>
    %12 = arith.negf %11 : vector<8x384xf32>
    %13 = math.exp %12 : vector<8x384xf32>
    %cst_11 = arith.constant 1.000000e+00 : f32
    %14 = vector.broadcast %cst_11 : f32 to vector<8x384xf32>
    %15 = arith.addf %14, %13 : vector<8x384xf32>
    %16 = arith.divf %14, %15 : vector<8x384xf32>
    %17 = vector.extract_strided_slice %16 {offsets = [0, 0], sizes = [8, 128], strides = [1, 1]} : vector<8x384xf32> to vector<8x128xf32>
    %18 = vector.extract_strided_slice %16 {offsets = [0, 128], sizes = [8, 128], strides = [1, 1]} : vector<8x384xf32> to vector<8x128xf32>
    %19 = vector.extract_strided_slice %16 {offsets = [0, 256], sizes = [8, 128], strides = [1, 1]} : vector<8x384xf32> to vector<8x128xf32>
    %20 = vector.extract_strided_slice %10 {offsets = [0, 384], sizes = [8, 128], strides = [1, 1]} : vector<8x768xf32> to vector<8x128xf32>
    %21 = vector.extract_strided_slice %10 {offsets = [0, 512], sizes = [8, 128], strides = [1, 1]} : vector<8x768xf32> to vector<8x128xf32>
    %22 = arith.maximumf %20, %21 : vector<8x128xf32>
    %23 = arith.mulf %18, %3 : vector<8x128xf32>
    %24 = arith.mulf %17, %22 : vector<8x128xf32>
    %25 = arith.addf %23, %24 : vector<8x128xf32>
    %26 = math.tanh %25 : vector<8x128xf32>
    %27 = arith.mulf %19, %26 : vector<8x128xf32>
    %28 = vector.extract_strided_slice %10 {offsets = [0, 640], sizes = [8, 128], strides = [1, 1]} : vector<8x768xf32> to vector<8x128xf32>
    %29 = arith.negf %28 : vector<8x128xf32>
    %30 = math.exp %29 : vector<8x128xf32>
    %cst_12 = arith.constant 1.000000e+00 : f32
    %31 = vector.broadcast %cst_12 : f32 to vector<8x128xf32>
    %32 = arith.addf %31, %30 : vector<8x128xf32>
    %33 = arith.divf %31, %32 : vector<8x128xf32>
    %34 = arith.mulf %33, %26 : vector<8x128xf32>
    %c0_13 = arith.constant 0 : index
    %c0_14 = arith.constant 0 : index
    %35 = vector.load %arg18[%c0_13, %c0_14] : memref<8x128xf32, #tpu.memory_space<vmem>>, vector<8x128xf32>
    tpu.vector_store %arg18[%c0_13, %c0_14], %27 {strides = array<i32>} : memref<8x128xf32, #tpu.memory_space<vmem>>, vector<8x128xf32>,
    %c0_15 = arith.constant 0 : index
    %c0_16 = arith.constant 0 : index
    %36 = vector.load %arg19[%c0_15, %c0_16] : memref<8x128xf32, #tpu.memory_space<vmem>>, vector<8x128xf32>
    tpu.vector_store %arg19[%c0_15, %c0_16], %25 {strides = array<i32>} : memref<8x128xf32, #tpu.memory_space<vmem>>, vector<8x128xf32>,
    %37 = tpu.concatenate %34, %27 in 1 : vector<8x128xf32>, vector<8x128xf32> -> vector<8x256xf32>
    %38 = arith.truncf %37 : vector<8x256xf32> to vector<8x256xbf16>
    %c0_17 = arith.constant 0 : index
    %c0_18 = arith.constant 0 : index
    %39 = vector.load %arg9[%c0_17, %c0_18] : memref<256x256xbf16, #tpu.memory_space<vmem>>, vector<256x256xbf16>
    %cst_19 = arith.constant dense<0.000000e+00> : vector<8x256xf32>
    %40 = tpu.matmul %38, %39, %cst_19 {dimension_numbers = #tpu.dot_dimension_numbers<[1], [0], [0], [1], [0, 0, 1, 1], [], []>} : vector<8x256xbf16>, vector<256x256xbf16>, vector<8x256xf32> -> vector<8x256xf32>
    %c0_20 = arith.constant 0 : index
    %c0_21 = arith.constant 0 : index
    %41 = vector.load %arg10[%c0_20, %c0_21] : memref<1x256xf32, #tpu.memory_space<vmem>>, vector<1x256xf32>
    %42 = vector.broadcast %41 : vector<1x256xf32> to vector<8x256xf32>
    %43 = arith.addf %40, %42 : vector<8x256xf32>
    %44 = vector.extract_strided_slice %43 {offsets = [0, 0], sizes = [8, 128], strides = [1, 1]} : vector<8x256xf32> to vector<8x128xf32>
    %cst_22 = arith.constant 0.000000e+00 : f32
    %45 = vector.broadcast %cst_22 : f32 to vector<8x128xf32>
    %46 = arith.maximumf %44, %45 : vector<8x128xf32>
    %47 = vector.extract_strided_slice %43 {offsets = [0, 128], sizes = [8, 128], strides = [1, 1]} : vector<8x256xf32> to vector<8x128xf32>
    %48 = math.tanh %47 : vector<8x128xf32>
    %49 = tpu.concatenate %46, %48 in 1 : vector<8x128xf32>, vector<8x128xf32> -> vector<8x256xf32>
    %50 = arith.truncf %49 : vector<8x256xf32> to vector<8x256xbf16>
    %c0_23 = arith.constant 0 : index
    %c0_24 = arith.constant 0 : index
    %51 = vector.load %arg11[%c0_23, %c0_24] : memref<256x256xbf16, #tpu.memory_space<vmem>>, vector<256x256xbf16>
    %cst_25 = arith.constant dense<0.000000e+00> : vector<8x256xf32>
    %52 = tpu.matmul %50, %51, %cst_25 {dimension_numbers = #tpu.dot_dimension_numbers<[1], [0], [0], [1], [0, 0, 1, 1], [], []>} : vector<8x256xbf16>, vector<256x256xbf16>, vector<8x256xf32> -> vector<8x256xf32>
    %c0_26 = arith.constant 0 : index
    %c0_27 = arith.constant 0 : index
    %53 = vector.load %arg12[%c0_26, %c0_27] : memref<1x256xf32, #tpu.memory_space<vmem>>, vector<1x256xf32>
    %54 = vector.broadcast %53 : vector<1x256xf32> to vector<8x256xf32>
    %55 = arith.addf %52, %54 : vector<8x256xf32>
    %56 = vector.extract_strided_slice %55 {offsets = [0, 0], sizes = [8, 128], strides = [1, 1]} : vector<8x256xf32> to vector<8x128xf32>
    %57 = vector.extract_strided_slice %55 {offsets = [0, 128], sizes = [8, 128], strides = [1, 1]} : vector<8x256xf32> to vector<8x128xf32>
    %c0_28 = arith.constant 0 : index
    %c0_29 = arith.constant 0 : index
    %58 = vector.load %arg13[%c0_28, %c0_29] : memref<1x128xf32, #tpu.memory_space<vmem>>, vector<1x128xf32>
    %c0_30 = arith.constant 0 : index
    %c0_31 = arith.constant 0 : index
    %59 = vector.load %arg14[%c0_30, %c0_31] : memref<1x1xf32, #tpu.memory_space<vmem>>, vector<1x1xf32>
    %60 = math.tanh %56 : vector<8x128xf32>
    %c0_32 = arith.constant 0 : index
    %c0_33 = arith.constant 0 : index
    %c0_34 = arith.constant 0 : index
    %61 = vector.load %arg6[%c0_32, %c0_33, %c0_34] : memref<8x64x128xbf16, #tpu.memory_space<vmem>>, vector<8x64x128xbf16>
    %62 = vector.shape_cast %57 : vector<8x128xf32> to vector<8x1x128xf32>
    %63 = arith.extf %61 : vector<8x64x128xbf16> to vector<8x64x128xf32>
    %64 = vector.broadcast %62 : vector<8x1x128xf32> to vector<8x64x128xf32>
    %65 = arith.addf %63, %64 : vector<8x64x128xf32>
    %66 = math.tanh %65 : vector<8x64x128xf32>
    %67 = vector.broadcast %58 : vector<1x128xf32> to vector<8x128xf32>
    %68 = arith.mulf %60, %67 : vector<8x128xf32>
    %cst_35 = arith.constant dense<0.000000e+00> : vector<8xf32>
    %69 = vector.multi_reduction <add>, %68, %cst_35 [1] : vector<8x128xf32> to vector<8xf32>
    %70 = vector.shape_cast %69 : vector<8xf32> to vector<8x1xf32>
    %71 = vector.broadcast %59 : vector<1x1xf32> to vector<8x1xf32>
    %72 = arith.addf %70, %71 : vector<8x1xf32>
    %73 = vector.shape_cast %58 : vector<1x128xf32> to vector<1x1x128xf32>
    %74 = vector.broadcast %73 : vector<1x1x128xf32> to vector<8x64x128xf32>
    %75 = arith.mulf %66, %74 : vector<8x64x128xf32>
    %cst_36 = arith.constant dense<0.000000e+00> : vector<8x64xf32>
    %76 = vector.multi_reduction <add>, %75, %cst_36 [2] : vector<8x64x128xf32> to vector<8x64xf32>
    %77 = vector.broadcast %59 : vector<1x1xf32> to vector<8x64xf32>
    %78 = arith.addf %76, %77 : vector<8x64xf32>
    %cst_37 = arith.constant -1.000000e+30 : f32
    %79 = vector.broadcast %cst_37 : f32 to vector<8x63xf32>
    %80 = tpu.concatenate %78, %72, %79 in 1 : vector<8x64xf32>, vector<8x1xf32>, vector<8x63xf32> -> vector<8x128xf32>
    %cst_38 = arith.constant dense<0xFF800000> : vector<8xf32>
    %81 = vector.multi_reduction <maximumf>, %80, %cst_38 [1] : vector<8x128xf32> to vector<8xf32>
    %82 = vector.shape_cast %81 : vector<8xf32> to vector<8x1xf32>
    %83 = vector.broadcast %82 : vector<8x1xf32> to vector<8x128xf32>
    %84 = arith.subf %80, %83 : vector<8x128xf32>
    %85 = math.exp %84 : vector<8x128xf32>
    %cst_39 = arith.constant dense<0.000000e+00> : vector<8xf32>
    %86 = vector.multi_reduction <add>, %85, %cst_39 [1] : vector<8x128xf32> to vector<8xf32>
    %87 = vector.shape_cast %86 : vector<8xf32> to vector<8x1xf32>
    %88 = tpu.reciprocal %87 {approx = true} : vector<8x1xf32> -> vector<8x1xf32>
    %89 = vector.extract_strided_slice %85 {offsets = [0, 0], sizes = [8, 64], strides = [1, 1]} : vector<8x128xf32> to vector<8x64xf32>
    %90 = vector.broadcast %88 : vector<8x1xf32> to vector<8x64xf32>
    %91 = arith.mulf %89, %90 : vector<8x64xf32>
    %92 = arith.subf %72, %82 : vector<8x1xf32>
    %93 = math.exp %92 : vector<8x1xf32>
    %94 = arith.mulf %93, %88 : vector<8x1xf32>
    %95 = vector.broadcast %94 : vector<8x1xf32> to vector<8x128xf32>
    %96 = arith.mulf %95, %46 : vector<8x128xf32>
    %97 = vector.shape_cast %91 : vector<8x64xf32> to vector<8x64x1xf32>
    %c0_40 = arith.constant 0 : index
    %c0_41 = arith.constant 0 : index
    %c0_42 = arith.constant 0 : index
    %98 = vector.load %arg5[%c0_40, %c0_41, %c0_42] : memref<8x64x128xbf16, #tpu.memory_space<vmem>>, vector<8x64x128xbf16>
    %99 = arith.extf %98 : vector<8x64x128xbf16> to vector<8x64x128xf32>
    %100 = vector.broadcast %97 : vector<8x64x1xf32> to vector<8x64x128xf32>
    %101 = arith.mulf %100, %99 : vector<8x64x128xf32>
    %cst_43 = arith.constant dense<0.000000e+00> : vector<8x128xf32>
    %102 = vector.multi_reduction <add>, %101, %cst_43 [1] : vector<8x64x128xf32> to vector<8x128xf32>
    %103 = arith.addf %96, %102 : vector<8x128xf32>
    %104 = arith.addf %103, %48 : vector<8x128xf32>
    %105 = arith.truncf %104 : vector<8x128xf32> to vector<8x128xbf16>
    %c0_44 = arith.constant 0 : index
    %c0_45 = arith.constant 0 : index
    %106 = vector.load %arg15[%c0_44, %c0_45] : memref<128x128xbf16, #tpu.memory_space<vmem>>, vector<128x128xbf16>
    %cst_46 = arith.constant dense<0.000000e+00> : vector<8x128xf32>
    %107 = tpu.matmul %105, %106, %cst_46 {dimension_numbers = #tpu.dot_dimension_numbers<[1], [0], [0], [1], [0, 0, 1, 1], [], []>} : vector<8x128xbf16>, vector<128x128xbf16>, vector<8x128xf32> -> vector<8x128xf32>
    %c0_47 = arith.constant 0 : index
    %c0_48 = arith.constant 0 : index
    %108 = vector.load %arg16[%c0_47, %c0_48] : memref<1x128xf32, #tpu.memory_space<vmem>>, vector<1x128xf32>
    %109 = vector.broadcast %108 : vector<1x128xf32> to vector<8x128xf32>
    %110 = arith.addf %107, %109 : vector<8x128xf32>
    %111 = math.tanh %110 : vector<8x128xf32>
    %c0_49 = arith.constant 0 : index
    %c0_50 = arith.constant 0 : index
    %112 = vector.load %arg17[%c0_49, %c0_50] : memref<8x128xf32, #tpu.memory_space<vmem>>, vector<8x128xf32>
    tpu.vector_store %arg17[%c0_49, %c0_50], %111 {strides = array<i32>} : memref<8x128xf32, #tpu.memory_space<vmem>>, vector<8x128xf32>,
    return
  }
  func.func @transform_0(%arg0: i32) -> (i32, i32) {
    %c0_i32 = arith.constant 0 : i32
    %c0_i32_0 = arith.constant 0 : i32
    %c0_i32_1 = arith.constant 0 : i32
    return %c0_i32, %c0_i32_0 : i32, i32
  }
  func.func @transform_1(%arg0: i32) -> (i32, i32) {
    %c0_i32 = arith.constant 0 : i32
    %c0_i32_0 = arith.constant 0 : i32
    %c0_i32_1 = arith.constant 0 : i32
    return %c0_i32, %c0_i32_0 : i32, i32
  }
  func.func @transform_2(%arg0: i32) -> (i32, i32) {
    %c0_i32 = arith.constant 0 : i32
    %c0_i32_0 = arith.constant 0 : i32
    %c0_i32_1 = arith.constant 0 : i32
    return %c0_i32, %c0_i32_0 : i32, i32
  }
  func.func @transform_3(%arg0: i32) -> (i32, i32) {
    %c0_i32 = arith.constant 0 : i32
    %c0_i32_0 = arith.constant 0 : i32
    %c0_i32_1 = arith.constant 0 : i32
    return %c0_i32, %c0_i32_0 : i32, i32
  }
  func.func @transform_4(%arg0: i32) -> (i32, i32, i32) {
    %c0_i32 = arith.constant 0 : i32
    %c0_i32_0 = arith.constant 0 : i32
    %c0_i32_1 = arith.constant 0 : i32
    %c0_i32_2 = arith.constant 0 : i32
    return %c0_i32, %c0_i32_0, %c0_i32_1 : i32, i32, i32
  }
  func.func @transform_5(%arg0: i32) -> (i32, i32, i32) {
    %c0_i32 = arith.constant 0 : i32
    %c0_i32_0 = arith.constant 0 : i32
    %c0_i32_1 = arith.constant 0 : i32
    %c0_i32_2 = arith.constant 0 : i32
    return %c0_i32, %c0_i32_0, %c0_i32_1 : i32, i32, i32
  }
  func.func @transform_6(%arg0: i32) -> (i32, i32) {
    %c0_i32 = arith.constant 0 : i32
    %c0_i32_0 = arith.constant 0 : i32
    %c0_i32_1 = arith.constant 0 : i32
    return %c0_i32, %c0_i32_0 : i32, i32
  }
  func.func @transform_7(%arg0: i32) -> (i32, i32) {
    %c0_i32 = arith.constant 0 : i32
    %c0_i32_0 = arith.constant 0 : i32
    %c0_i32_1 = arith.constant 0 : i32
    return %c0_i32, %c0_i32_0 : i32, i32
  }
  func.func @transform_8(%arg0: i32) -> (i32, i32) {
    %c0_i32 = arith.constant 0 : i32
    %c0_i32_0 = arith.constant 0 : i32
    %c0_i32_1 = arith.constant 0 : i32
    return %c0_i32, %c0_i32_0 : i32, i32
  }
  func.func @transform_9(%arg0: i32) -> (i32, i32) {
    %c0_i32 = arith.constant 0 : i32
    %c0_i32_0 = arith.constant 0 : i32
    %c0_i32_1 = arith.constant 0 : i32
    return %c0_i32, %c0_i32_0 : i32, i32
  }
  func.func @transform_10(%arg0: i32) -> (i32, i32) {
    %c0_i32 = arith.constant 0 : i32
    %c0_i32_0 = arith.constant 0 : i32
    %c0_i32_1 = arith.constant 0 : i32
    return %c0_i32, %c0_i32_0 : i32, i32
  }
  func.func @transform_11(%arg0: i32) -> (i32, i32) {
    %c0_i32 = arith.constant 0 : i32
    %c0_i32_0 = arith.constant 0 : i32
    %c0_i32_1 = arith.constant 0 : i32
    return %c0_i32, %c0_i32_0 : i32, i32
  }
  func.func @transform_12(%arg0: i32) -> (i32, i32) {
    %c0_i32 = arith.constant 0 : i32
    %c0_i32_0 = arith.constant 0 : i32
    %c0_i32_1 = arith.constant 0 : i32
    return %c0_i32, %c0_i32_0 : i32, i32
  }
  func.func @transform_13(%arg0: i32) -> (i32, i32) {
    %c0_i32 = arith.constant 0 : i32
    %c0_i32_0 = arith.constant 0 : i32
    %c0_i32_1 = arith.constant 0 : i32
    return %c0_i32, %c0_i32_0 : i32, i32
  }
  func.func @transform_14(%arg0: i32) -> (i32, i32) {
    %c0_i32 = arith.constant 0 : i32
    %c0_i32_0 = arith.constant 0 : i32
    %c0_i32_1 = arith.constant 0 : i32
    return %c0_i32, %c0_i32_0 : i32, i32
  }
  func.func @transform_15(%arg0: i32) -> (i32, i32) {
    %c0_i32 = arith.constant 0 : i32
    %c0_i32_0 = arith.constant 0 : i32
    %c0_i32_1 = arith.constant 0 : i32
    return %c0_i32, %c0_i32_0 : i32, i32
  }
  func.func @transform_16(%arg0: i32) -> (i32, i32) {
    %c0_i32 = arith.constant 0 : i32
    %c0_i32_0 = arith.constant 0 : i32
    %c0_i32_1 = arith.constant 0 : i32
    return %c0_i32, %c0_i32_0 : i32, i32
  }
  func.func @transform_17(%arg0: i32) -> (i32, i32) {
    %c0_i32 = arith.constant 0 : i32
    %c0_i32_0 = arith.constant 0 : i32
    %c0_i32_1 = arith.constant 0 : i32
    return %c0_i32, %c0_i32_0 : i32, i32
  }
  func.func @transform_18(%arg0: i32) -> (i32, i32) {
    %c0_i32 = arith.constant 0 : i32
    %c0_i32_0 = arith.constant 0 : i32
    %c0_i32_1 = arith.constant 0 : i32
    return %c0_i32, %c0_i32_0 : i32, i32
  }
}

</mosaic_0001>

<llo_original>
// kernel: ada_att_core.1
$region0: #{ada_att_core.1}
  #allocation0 [shape = 'u32[]', space=smem, size = 0x4, offset = 0x4, fixed_abs, tag = 'smem constant byte address 0x4 - core index']
  #allocation1 [shape = 'u32[144,128]{1,0:T(1,128)}', space=vmem, size = 0x12000, scoped, tag = 'internal scratch']
  #allocation2 [shape = 'f32[1,1]{1,0:T(1,128)S(1)}', space=vmem, size = 0x200, scoped, tag = 'scoped memory for ada_att_core.1']
  %s0 = inlined_call_operand.vmem [shape: f32[8,128], index: 0, kind: input, shape index: {}]
  %s1 = inlined_call_operand.vmem [shape: f32[8,128], index: 1, kind: input, shape index: {}]
  %s2 = inlined_call_operand.vmem [shape: f32[8,128], index: 2, kind: input, shape index: {}, may-alias: {2,17}]
  %s3 = inlined_call_operand.vmem [shape: f32[8,128], index: 3, kind: input, shape index: {}, may-alias: {3,18}]
  %s4 = inlined_call_operand.vmem [shape: bf16[8,64,128], index: 4, kind: input, shape index: {}]
  %s5 = inlined_call_operand.vmem [shape: bf16[8,64,128], index: 5, kind: input, shape index: {}]
  %s6 = inlined_call_operand.vmem [shape: bf16[384,768], index: 6, kind: input, shape index: {}]
  %s7 = inlined_call_operand.vmem [shape: f32[1,768], index: 7, kind: input, shape index: {}]
  %s8 = inlined_call_operand.vmem [shape: bf16[256,256], index: 8, kind: input, shape index: {}]
  %s9 = inlined_call_operand.vmem [shape: f32[1,256], index: 9, kind: input, shape index: {}]
  %s10 = inlined_call_operand.hbm [shape: bf16[256,256], index: 10, kind: input, shape index: {}]
  %s11 = inlined_call_operand.vmem [shape: f32[1,256], index: 11, kind: input, shape index: {}]
  %s12 = inlined_call_operand.vmem [shape: f32[1,128], index: 12, kind: input, shape index: {}]
  %s13 = inlined_call_operand.<no memory space> [shape: f32[1,1], index: 13, kind: input, shape index: {}]
  %s14 = inlined_call_operand.vmem [shape: bf16[128,128], index: 14, kind: input, shape index: {}]
  %s15 = inlined_call_operand.vmem [shape: f32[1,128], index: 15, kind: input, shape index: {}]
  %s16 = inlined_call_operand.hbm [shape: f32[8,128], index: 16, kind: output, shape index: {0}]
  %s17 = inlined_call_operand.vmem [shape: f32[8,128], index: 17, kind: output, shape index: {1}, may-alias: {2,17}]
  %s18 = inlined_call_operand.vmem [shape: f32[8,128], index: 18, kind: output, shape index: {2}, may-alias: {3,18}]
  %19 = xla_tuple %s16, %s17, %s18
  %s20 = sld [smem:[#allocation0]]
  $region94: #{ada_att_core.1} parent=0
    _
  %s22 = ssub.s32 1, %s20
  %s23 = scalar_select 0, %s22, %s20
  %v24 = vstv %s13
  %25 = vst [vmem:[#allocation2] sm:$0x1] %v24
  $region1: #{ada_att_core.1} parent=0
    #allocation3 [shape = 'u8[131072]{0}', space=vmem, size = 0x20000, scoped, tag = 'input window, operand 10, single buffered']
    #allocation4 [shape = 's32[1]{0}', space=sflag, size = 0x4, scoped, tag = 'scoped memory for ada_att_core.1']
    #allocation5 [shape = 's32[1]{0}', space=sflag, size = 0x4, scoped, tag = 'scoped memory for ada_att_core.1']
    #allocation6 [shape = 'u8[4096]{0}', space=vmem, size = 0x1000, scoped, tag = 'output window, operand 0, single buffered']
    %26 = vsyncpa [#allocation4], 0
    %27 = vsyncpa [#allocation5], 0
    // Predicated region
    $region2: #{ada_att_core.1} parent=1 // pred_check
      _
    $region3: #{ada_att_core.1} parent=1 // pred_check_branch
      %29 = sbr.rel (0) target = $region5
    $region4: #{ada_att_core.1} parent=1 // pred_region
      _
    $region5: #{ada_att_core.1} parent=1 // pred_fallthru
      _
    // Predicated region
    $region6: #{ada_att_core.1} parent=1 // pred_check
      _
    $region7: #{ada_att_core.1} parent=1 // pred_check_branch
      %31 = sbr.rel (0) target = $region9
    $region8: #{ada_att_core.1} parent=1 // pred_region
      _
    $region9: #{ada_att_core.1} parent=1 // pred_fallthru
      _
    // Predicated region
    $region10: #{ada_att_core.1} parent=1 // pred_check
      _
    $region11: #{ada_att_core.1} parent=1 // pred_check_branch
      %33 = sbr.rel (0) target = $region13
    $region12: #{ada_att_core.1} parent=1 // pred_region
      _
    $region13: #{ada_att_core.1} parent=1 // pred_fallthru
      _
    // Predicated region
    $region14: #{ada_att_core.1} parent=1 // pred_check
      _
    $region15: #{ada_att_core.1} parent=1 // pred_check_branch
      %35 = sbr.rel (0) target = $region17
    $region16: #{ada_att_core.1} parent=1 // pred_region
      _
    $region17: #{ada_att_core.1} parent=1 // pred_fallthru
      _
    // Predicated region
    $region18: #{ada_att_core.1} parent=1 // pred_check
      _
    $region19: #{ada_att_core.1} parent=1 // pred_check_branch
      %37 = sbr.rel (0) target = $region21
    $region20: #{ada_att_core.1} parent=1 // pred_region
      _
    $region21: #{ada_att_core.1} parent=1 // pred_fallthru
      _
    // Predicated region
    $region22: #{ada_att_core.1} parent=1 // pred_check
      _
    $region23: #{ada_att_core.1} parent=1 // pred_check_branch
      %39 = sbr.rel (0) target = $region25
    $region24: #{ada_att_core.1} parent=1 // pred_region
      _
    $region25: #{ada_att_core.1} parent=1 // pred_fallthru
      _
    // Predicated region
    $region26: #{ada_att_core.1} parent=1 // pred_check
      _
    $region27: #{ada_att_core.1} parent=1 // pred_check_branch
      %41 = sbr.rel (0) target = $region29
    $region28: #{ada_att_core.1} parent=1 // pred_region
      _
    $region29: #{ada_att_core.1} parent=1 // pred_fallthru
      _
    // Predicated region
    $region30: #{ada_att_core.1} parent=1 // pred_check
      _
    $region31: #{ada_att_core.1} parent=1 // pred_check_branch
      %43 = sbr.rel (0) target = $region33
    $region32: #{ada_att_core.1} parent=1 // pred_region
      _
    $region33: #{ada_att_core.1} parent=1 // pred_fallthru
      _
    // Predicated region
    $region34: #{ada_att_core.1} parent=1 // pred_check
      _
    $region35: #{ada_att_core.1} parent=1 // pred_check_branch
      %45 = sbr.rel (0) target = $region37
    $region36: #{ada_att_core.1} parent=1 // pred_region
      _
    $region37: #{ada_att_core.1} parent=1 // pred_fallthru
      _
    // Predicated region
    $region38: #{ada_att_core.1} parent=1 // pred_check
      _
    $region39: #{ada_att_core.1} parent=1 // pred_check_branch
      %47 = sbr.rel (0) target = $region41
    $region40: #{ada_att_core.1} parent=1 // pred_region
      _
    $region41: #{ada_att_core.1} parent=1 // pred_fallthru
      _
    // Predicated region
    $region42: #{ada_att_core.1} parent=1 // pred_check
      _
    $region43: #{ada_att_core.1} parent=1 // pred_check_branch
      %49 = sbr.rel (0) target = $region45
    $region44: #{ada_att_core.1} parent=1 // pred_region
      %s51 = ssub.s32 4096, 4096
      %52 = vsyncadd [#allocation4], %s51
      %s53 = sshll.u32 [#allocation3], 4
      %s54 = int_to_ptr.vmem [resolvable:$true] %s53
      %59 = dma.hbm_to_vmem [thread:$0]  %s10, 4096, %s54, [#allocation4], 128, 128, 8
    $region45: #{ada_att_core.1} parent=1 // pred_fallthru
      _
    // Predicated region
    $region46: #{ada_att_core.1} parent=1 // pred_check
      _
    $region47: #{ada_att_core.1} parent=1 // pred_check_branch
      %61 = sbr.rel (0) target = $region49
    $region48: #{ada_att_core.1} parent=1 // pred_region
      _
    $region49: #{ada_att_core.1} parent=1 // pred_fallthru
      _
    // Predicated region
    $region50: #{ada_att_core.1} parent=1 // pred_check
      _
    $region51: #{ada_att_core.1} parent=1 // pred_check_branch
      %63 = sbr.rel (0) target = $region53
    $region52: #{ada_att_core.1} parent=1 // pred_region
      _
    $region53: #{ada_att_core.1} parent=1 // pred_fallthru
      _
    // Predicated region
    $region54: #{ada_att_core.1} parent=1 // pred_check
      _
    $region55: #{ada_att_core.1} parent=1 // pred_check_branch
      %65 = sbr.rel (0) target = $region57
    $region56: #{ada_att_core.1} parent=1 // pred_region
      _
    $region57: #{ada_att_core.1} parent=1 // pred_fallthru
      _
    // Predicated region
    $region58: #{ada_att_core.1} parent=1 // pred_check
      _
    $region59: #{ada_att_core.1} parent=1 // pred_check_branch
      %67 = sbr.rel (0) target = $region61
    $region60: #{ada_att_core.1} parent=1 // pred_region
      _
    $region61: #{ada_att_core.1} parent=1 // pred_fallthru
      _
    // Predicated region
    $region62: #{ada_att_core.1} parent=1 // pred_check
      _
    $region63: #{ada_att_core.1} parent=1 // pred_check_branch
      %69 = sbr.rel (0) target = $region65
    $region64: #{ada_att_core.1} parent=1 // pred_region
      _
    $region65: #{ada_att_core.1} parent=1 // pred_fallthru
      _
    // Predicated region
    $region66: #{ada_att_core.1} parent=1 // pred_check
      _
    $region67: #{ada_att_core.1} parent=1 // pred_check_branch
      %71 = sbr.rel (0) target = $region69
    $region68: #{ada_att_core.1} parent=1 // pred_region
      %72 = dma.done [#allocation4], 4096
    $region69: #{ada_att_core.1} parent=1 // pred_fallthru
      _
    %v74 = vld [vmem:[%s0] sm:$0xff]
    %v75 = vld [vmem:[%s1] sm:$0xff]
    %v76 = vld [vmem:[%s2] sm:$0xff]
    %v77 = vld [vmem:[%s3] sm:$0xff]
    %v78 = vpack.c.bf16 %v74, %v74
    %v79 = vpack.c.bf16 %v75, %v75
    %v80 = vpack.c.bf16 %v76, %v76
    %v81 = vld [vmem:[%s6] sm:$0xff]
    %v82 = vld [vmem:[%s6 + $0x8] sm:$0xff]
    %v83 = vld [vmem:[%s6 + $0x10] sm:$0xff]
    %v84 = vld [vmem:[%s6 + $0x18] sm:$0xff]
    %v85 = vld [vmem:[%s6 + $0x20] sm:$0xff]
    %v86 = vld [vmem:[%s6 + $0x28] sm:$0xff]
    %v87 = vld [vmem:[%s6 + $0x30] sm:$0xff]
    %v88 = vld [vmem:[%s6 + $0x38] sm:$0xff]
    %v89 = vld [vmem:[%s6 + $0x40] sm:$0xff]
    %v90 = vld [vmem:[%s6 + $0x48] sm:$0xff]
    %v91 = vld [vmem:[%s6 + $0x50] sm:$0xff]
    %v92 = vld [vmem:[%s6 + $0x58] sm:$0xff]
    %v93 = vld [vmem:[%s6 + $0x60] sm:$0xff]
    %v94 = vld [vmem:[%s6 + $0x68] sm:$0xff]
    %v95 = vld [vmem:[%s6 + $0x70] sm:$0xff]
    %v96 = vld [vmem:[%s6 + $0x78] sm:$0xff]
    %v97 = vld [vmem:[%s6 + $0x80] sm:$0xff]
    %v98 = vld [vmem:[%s6 + $0x88] sm:$0xff]
    %v99 = vld [vmem:[%s6 + $0x90] sm:$0xff]
    %v100 = vld [vmem:[%s6 + $0x98] sm:$0xff]
    %v101 = vld [vmem:[%s6 + $0xa0] sm:$0xff]
    %v102 = vld [vmem:[%s6 + $0xa8] sm:$0xff]
    %v103 = vld [vmem:[%s6 + $0xb0] sm:$0xff]
    %v104 = vld [vmem:[%s6 + $0xb8] sm:$0xff]
    %v105 = vld [vmem:[%s6 + $0xc0] sm:$0xff]
    %v106 = vld [vmem:[%s6 + $0xc8] sm:$0xff]
    %v107 = vld [vmem:[%s6 + $0xd0] sm:$0xff]
    %v108 = vld [vmem:[%s6 + $0xd8] sm:$0xff]
    %v109 = vld [vmem:[%s6 + $0xe0] sm:$0xff]
    %v110 = vld [vmem:[%s6 + $0xe8] sm:$0xff]
    %v111 = vld [vmem:[%s6 + $0xf0] sm:$0xff]
    %v112 = vld [vmem:[%s6 + $0xf8] sm:$0xff]
    %v113 = vld [vmem:[%s6 + $0x100] sm:$0xff]
    %v114 = vld [vmem:[%s6 + $0x108] sm:$0xff]
    %v115 = vld [vmem:[%s6 + $0x110] sm:$0xff]
    %v116 = vld [vmem:[%s6 + $0x118] sm:$0xff]
    %v117 = vld [vmem:[%s6 + $0x120] sm:$0xff]
    %v118 = vld [vmem:[%s6 + $0x128] sm:$0xff]
    %v119 = vld [vmem:[%s6 + $0x130] sm:$0xff]
    %v120 = vld [vmem:[%s6 + $0x138] sm:$0xff]
    %v121 = vld [vmem:[%s6 + $0x140] sm:$0xff]
    %v122 = vld [vmem:[%s6 + $0x148] sm:$0xff]
    %v123 = vld [vmem:[%s6 + $0x150] sm:$0xff]
    %v124 = vld [vmem:[%s6 + $0x158] sm:$0xff]
    %v125 = vld [vmem:[%s6 + $0x160] sm:$0xff]
    %v126 = vld [vmem:[%s6 + $0x168] sm:$0xff]
    %v127 = vld [vmem:[%s6 + $0x170] sm:$0xff]
    %v128 = vld [vmem:[%s6 + $0x178] sm:$0xff]
    %v129 = vld [vmem:[%s6 + $0x180] sm:$0xff]
    %v130 = vld [vmem:[%s6 + $0x188] sm:$0xff]
    %v131 = vld [vmem:[%s6 + $0x190] sm:$0xff]
    %v132 = vld [vmem:[%s6 + $0x198] sm:$0xff]
    %v133 = vld [vmem:[%s6 + $0x1a0] sm:$0xff]
    %v134 = vld [vmem:[%s6 + $0x1a8] sm:$0xff]
    %v135 = vld [vmem:[%s6 + $0x1b0] sm:$0xff]
    %v136 = vld [vmem:[%s6 + $0x1b8] sm:$0xff]
    %v137 = vld [vmem:[%s6 + $0x1c0] sm:$0xff]
    %v138 = vld [vmem:[%s6 + $0x1c8] sm:$0xff]
    %v139 = vld [vmem:[%s6 + $0x1d0] sm:$0xff]
    %v140 = vld [vmem:[%s6 + $0x1d8] sm:$0xff]
    %v141 = vld [vmem:[%s6 + $0x1e0] sm:$0xff]
    %v142 = vld [vmem:[%s6 + $0x1e8] sm:$0xff]
    %v143 = vld [vmem:[%s6 + $0x1f0] sm:$0xff]
    %v144 = vld [vmem:[%s6 + $0x1f8] sm:$0xff]
    %v145 = vld [vmem:[%s6 + $0x200] sm:$0xff]
    %v146 = vld [vmem:[%s6 + $0x208] sm:$0xff]
    %v147 = vld [vmem:[%s6 + $0x210] sm:$0xff]
    %v148 = vld [vmem:[%s6 + $0x218] sm:$0xff]
    %v149 = vld [vmem:[%s6 + $0x220] sm:$0xff]
    %v150 = vld [vmem:[%s6 + $0x228] sm:$0xff]
    %v151 = vld [vmem:[%s6 + $0x230] sm:$0xff]
    %v152 = vld [vmem:[%s6 + $0x238] sm:$0xff]
    %v153 = vld [vmem:[%s6 + $0x240] sm:$0xff]
    %v154 = vld [vmem:[%s6 + $0x248] sm:$0xff]
    %v155 = vld [vmem:[%s6 + $0x250] sm:$0xff]
    %v156 = vld [vmem:[%s6 + $0x258] sm:$0xff]
    %v157 = vld [vmem:[%s6 + $0x260] sm:$0xff]
    %v158 = vld [vmem:[%s6 + $0x268] sm:$0xff]
    %v159 = vld [vmem:[%s6 + $0x270] sm:$0xff]
    %v160 = vld [vmem:[%s6 + $0x278] sm:$0xff]
    %v161 = vld [vmem:[%s6 + $0x280] sm:$0xff]
    %v162 = vld [vmem:[%s6 + $0x288] sm:$0xff]
    %v163 = vld [vmem:[%s6 + $0x290] sm:$0xff]
    %v164 = vld [vmem:[%s6 + $0x298] sm:$0xff]
    %v165 = vld [vmem:[%s6 + $0x2a0] sm:$0xff]
    %v166 = vld [vmem:[%s6 + $0x2a8] sm:$0xff]
    %v167 = vld [vmem:[%s6 + $0x2b0] sm:$0xff]
    %v168 = vld [vmem:[%s6 + $0x2b8] sm:$0xff]
    %v169 = vld [vmem:[%s6 + $0x2c0] sm:$0xff]
    %v170 = vld [vmem:[%s6 + $0x2c8] sm:$0xff]
    %v171 = vld [vmem:[%s6 + $0x2d0] sm:$0xff]
    %v172 = vld [vmem:[%s6 + $0x2d8] sm:$0xff]
    %v173 = vld [vmem:[%s6 + $0x2e0] sm:$0xff]
    %v174 = vld [vmem:[%s6 + $0x2e8] sm:$0xff]
    %v175 = vld [vmem:[%s6 + $0x2f0] sm:$0xff]
    %v176 = vld [vmem:[%s6 + $0x2f8] sm:$0xff]
    %v177 = vld [vmem:[%s6 + $0x300] sm:$0xff]
    %v178 = vld [vmem:[%s6 + $0x308] sm:$0xff]
    %v179 = vld [vmem:[%s6 + $0x310] sm:$0xff]
    %v180 = vld [vmem:[%s6 + $0x318] sm:$0xff]
    %v181 = vld [vmem:[%s6 + $0x320] sm:$0xff]
    %v182 = vld [vmem:[%s6 + $0x328] sm:$0xff]
    %v183 = vld [vmem:[%s6 + $0x330] sm:$0xff]
    %v184 = vld [vmem:[%s6 + $0x338] sm:$0xff]
    %v185 = vld [vmem:[%s6 + $0x340] sm:$0xff]
    %v186 = vld [vmem:[%s6 + $0x348] sm:$0xff]
    %v187 = vld [vmem:[%s6 + $0x350] sm:$0xff]
    %v188 = vld [vmem:[%s6 + $0x358] sm:$0xff]
    %v189 = vld [vmem:[%s6 + $0x360] sm:$0xff]
    %v190 = vld [vmem:[%s6 + $0x368] sm:$0xff]
    %v191 = vld [vmem:[%s6 + $0x370] sm:$0xff]
    %v192 = vld [vmem:[%s6 + $0x378] sm:$0xff]
    %v193 = vld [vmem:[%s6 + $0x380] sm:$0xff]
    %v194 = vld [vmem:[%s6 + $0x388] sm:$0xff]
    %v195 = vld [vmem:[%s6 + $0x390] sm:$0xff]
    %v196 = vld [vmem:[%s6 + $0x398] sm:$0xff]
    %v197 = vld [vmem:[%s6 + $0x3a0] sm:$0xff]
    %v198 = vld [vmem:[%s6 + $0x3a8] sm:$0xff]
    %v199 = vld [vmem:[%s6 + $0x3b0] sm:$0xff]
    %v200 = vld [vmem:[%s6 + $0x3b8] sm:$0xff]
    %v201 = vld [vmem:[%s6 + $0x3c0] sm:$0xff]
    %v202 = vld [vmem:[%s6 + $0x3c8] sm:$0xff]
    %v203 = vld [vmem:[%s6 + $0x3d0] sm:$0xff]
    %v204 = vld [vmem:[%s6 + $0x3d8] sm:$0xff]
    %v205 = vld [vmem:[%s6 + $0x3e0] sm:$0xff]
    %v206 = vld [vmem:[%s6 + $0x3e8] sm:$0xff]
    %v207 = vld [vmem:[%s6 + $0x3f0] sm:$0xff]
    %v208 = vld [vmem:[%s6 + $0x3f8] sm:$0xff]
    %v209 = vld [vmem:[%s6 + $0x400] sm:$0xff]
    %v210 = vld [vmem:[%s6 + $0x408] sm:$0xff]
    %v211 = vld [vmem:[%s6 + $0x410] sm:$0xff]
    %v212 = vld [vmem:[%s6 + $0x418] sm:$0xff]
    %v213 = vld [vmem:[%s6 + $0x420] sm:$0xff]
    %v214 = vld [vmem:[%s6 + $0x428] sm:$0xff]
    %v215 = vld [vmem:[%s6 + $0x430] sm:$0xff]
    %v216 = vld [vmem:[%s6 + $0x438] sm:$0xff]
    %v217 = vld [vmem:[%s6 + $0x440] sm:$0xff]
    %v218 = vld [vmem:[%s6 + $0x448] sm:$0xff]
    %v219 = vld [vmem:[%s6 + $0x450] sm:$0xff]
    %v220 = vld [vmem:[%s6 + $0x458] sm:$0xff]
    %v221 = vld [vmem:[%s6 + $0x460] sm:$0xff]
    %v222 = vld [vmem:[%s6 + $0x468] sm:$0xff]
    %v223 = vld [vmem:[%s6 + $0x470] sm:$0xff]
    %v224 = vld [vmem:[%s6 + $0x478] sm:$0xff]
    %v225 = vld [vmem:[%s7] sm:$0x3f]
    %v227 = vlaneseq
    %v228 = vshrl.u32 %v227, 7
    %v229 = vsub.s32 0, %v228
    %v230 = vrot.slane %v225, %v229
    %v231 = vlaneseq
    %v232 = vshrl.u32 %v231, 7
    %v233 = vsub.s32 1, %v232
    %v234 = vrot.slane %v225, %v233
    %v235 = vlaneseq
    %v236 = vshrl.u32 %v235, 7
    %v237 = vsub.s32 2, %v236
    %v238 = vrot.slane %v225, %v237
    %v239 = vlaneseq
    %v240 = vshrl.u32 %v239, 7
    %v241 = vsub.s32 3, %v240
    %v242 = vrot.slane %v225, %v241
    %v243 = vlaneseq
    %v244 = vshrl.u32 %v243, 7
    %v245 = vsub.s32 4, %v244
    %v246 = vrot.slane %v225, %v245
    %v247 = vlaneseq
    %v248 = vshrl.u32 %v247, 7
    %v249 = vsub.s32 5, %v248
    %v250 = vrot.slane %v225, %v249
    %v401 = vunpack.c.l.b16 %v81
    %v402 = vunpack.c.h.b16 %v81
    %v403 = vunpack.c.l.b16 %v82
    %v404 = vunpack.c.h.b16 %v82
    %v405 = vunpack.c.l.b16 %v83
    %v406 = vunpack.c.h.b16 %v83
    %v407 = vunpack.c.l.b16 %v84
    %v408 = vunpack.c.h.b16 %v84
    %v409 = vunpack.c.l.b16 %v85
    %v410 = vunpack.c.h.b16 %v85
    %v411 = vunpack.c.l.b16 %v86
    %v412 = vunpack.c.h.b16 %v86
    %v413 = vunpack.c.l.b16 %v87
    %v414 = vunpack.c.h.b16 %v87
    %v415 = vunpack.c.l.b16 %v88
    %v416 = vunpack.c.h.b16 %v88
    %v417 = vunpack.c.l.b16 %v89
    %v418 = vunpack.c.h.b16 %v89
    %v419 = vunpack.c.l.b16 %v90
    %v420 = vunpack.c.h.b16 %v90
    %v421 = vunpack.c.l.b16 %v91
    %v422 = vunpack.c.h.b16 %v91
    %v423 = vunpack.c.l.b16 %v92
    %v424 = vunpack.c.h.b16 %v92
    %v425 = vunpack.c.l.b16 %v93
    %v426 = vunpack.c.h.b16 %v93
    %v427 = vunpack.c.l.b16 %v94
    %v428 = vunpack.c.h.b16 %v94
    %v429 = vunpack.c.l.b16 %v95
    %v430 = vunpack.c.h.b16 %v95
    %v431 = vunpack.c.l.b16 %v96
    %v432 = vunpack.c.h.b16 %v96
    %v433 = vunpack.c.l.b16 %v97
    %v434 = vunpack.c.h.b16 %v97
    %v435 = vunpack.c.l.b16 %v98
    %v436 = vunpack.c.h.b16 %v98
    %v437 = vunpack.c.l.b16 %v99
    %v438 = vunpack.c.h.b16 %v99
    %v439 = vunpack.c.l.b16 %v100
    %v440 = vunpack.c.h.b16 %v100
    %v441 = vunpack.c.l.b16 %v101
    %v442 = vunpack.c.h.b16 %v101
    %v443 = vunpack.c.l.b16 %v102
    %v444 = vunpack.c.h.b16 %v102
    %v445 = vunpack.c.l.b16 %v103
    %v446 = vunpack.c.h.b16 %v103
    %v447 = vunpack.c.l.b16 %v104
    %v448 = vunpack.c.h.b16 %v104
    %v449 = vunpack.c.l.b16 %v105
    %v450 = vunpack.c.h.b16 %v105
    %v451 = vunpack.c.l.b16 %v106
    %v452 = vunpack.c.h.b16 %v106
    %v453 = vunpack.c.l.b16 %v107
    %v454 = vunpack.c.h.b16 %v107
    %v455 = vunpack.c.l.b16 %v108
    %v456 = vunpack.c.h.b16 %v108
    %v457 = vunpack.c.l.b16 %v109
    %v458 = vunpack.c.h.b16 %v109
    %v459 = vunpack.c.l.b16 %v110
    %v460 = vunpack.c.h.b16 %v110
    %v461 = vunpack.c.l.b16 %v111
    %v462 = vunpack.c.h.b16 %v111
    %v463 = vunpack.c.l.b16 %v112
    %v464 = vunpack.c.h.b16 %v112
    %v465 = vunpack.c.l.b16 %v113
    %v466 = vunpack.c.h.b16 %v113
    %v467 = vunpack.c.l.b16 %v114
    %v468 = vunpack.c.h.b16 %v114
    %v469 = vunpack.c.l.b16 %v115
    %v470 = vunpack.c.h.b16 %v115
    %v471 = vunpack.c.l.b16 %v116
    %v472 = vunpack.c.h.b16 %v116
    %v473 = vunpack.c.l.b16 %v117
    %v474 = vunpack.c.h.b16 %v117
    %v475 = vunpack.c.l.b16 %v118
    %v476 = vunpack.c.h.b16 %v118
    %v477 = vunpack.c.l.b16 %v119
    %v478 = vunpack.c.h.b16 %v119
    %v479 = vunpack.c.l.b16 %v120
    %v480 = vunpack.c.h.b16 %v120
    %v481 = vunpack.c.l.b16 %v121
    %v482 = vunpack.c.h.b16 %v121
    %v483 = vunpack.c.l.b16 %v122
    %v484 = vunpack.c.h.b16 %v122
    %v485 = vunpack.c.l.b16 %v123
    %v486 = vunpack.c.h.b16 %v123
    %v487 = vunpack.c.l.b16 %v124
    %v488 = vunpack.c.h.b16 %v124
    %v489 = vunpack.c.l.b16 %v125
    %v490 = vunpack.c.h.b16 %v125
    %v491 = vunpack.c.l.b16 %v126
    %v492 = vunpack.c.h.b16 %v126
    %v493 = vunpack.c.l.b16 %v127
    %v494 = vunpack.c.h.b16 %v127
    %v495 = vunpack.c.l.b16 %v128
    %v496 = vunpack.c.h.b16 %v128
    %v497 = vunpack.c.l.b16 %v129
    %v498 = vunpack.c.h.b16 %v129
    %v499 = vunpack.c.l.b16 %v130
    %v500 = vunpack.c.h.b16 %v130
    %v501 = vunpack.c.l.b16 %v131
    %v502 = vunpack.c.h.b16 %v131
    %v503 = vunpack.c.l.b16 %v132
    %v504 = vunpack.c.h.b16 %v132
    %v505 = vunpack.c.l.b16 %v133
    %v506 = vunpack.c.h.b16 %v133
    %v507 = vunpack.c.l.b16 %v134
    %v508 = vunpack.c.h.b16 %v134
    %v509 = vunpack.c.l.b16 %v135
    %v510 = vunpack.c.h.b16 %v135
    %v511 = vunpack.c.l.b16 %v136
    %v512 = vunpack.c.h.b16 %v136
    %v513 = vunpack.c.l.b16 %v137
    %v514 = vunpack.c.h.b16 %v137
    %v515 = vunpack.c.l.b16 %v138
    %v516 = vunpack.c.h.b16 %v138
    %v517 = vunpack.c.l.b16 %v139
    %v518 = vunpack.c.h.b16 %v139
    %v519 = vunpack.c.l.b16 %v140
    %v520 = vunpack.c.h.b16 %v140
    %v521 = vunpack.c.l.b16 %v141
    %v522 = vunpack.c.h.b16 %v141
    %v523 = vunpack.c.l.b16 %v142
    %v524 = vunpack.c.h.b16 %v142
    %v525 = vunpack.c.l.b16 %v143
    %v526 = vunpack.c.h.b16 %v143
    %v527 = vunpack.c.l.b16 %v144
    %v528 = vunpack.c.h.b16 %v144
    %v529 = vunpack.c.l.b16 %v145
    %v530 = vunpack.c.h.b16 %v145
    %v531 = vunpack.c.l.b16 %v146
    %v532 = vunpack.c.h.b16 %v146
    %v533 = vunpack.c.l.b16 %v147
    %v534 = vunpack.c.h.b16 %v147
    %v535 = vunpack.c.l.b16 %v148
    %v536 = vunpack.c.h.b16 %v148
    %v537 = vunpack.c.l.b16 %v149
    %v538 = vunpack.c.h.b16 %v149
    %v539 = vunpack.c.l.b16 %v150
    %v540 = vunpack.c.h.b16 %v150
    %v541 = vunpack.c.l.b16 %v151
    %v542 = vunpack.c.h.b16 %v151
    %v543 = vunpack.c.l.b16 %v152
    %v544 = vunpack.c.h.b16 %v152
    %v545 = vunpack.c.l.b16 %v153
    %v546 = vunpack.c.h.b16 %v153
    %v547 = vunpack.c.l.b16 %v154
    %v548 = vunpack.c.h.b16 %v154
    %v549 = vunpack.c.l.b16 %v155
    %v550 = vunpack.c.h.b16 %v155
    %v551 = vunpack.c.l.b16 %v156
    %v552 = vunpack.c.h.b16 %v156
    %v553 = vunpack.c.l.b16 %v157
    %v554 = vunpack.c.h.b16 %v157
    %v555 = vunpack.c.l.b16 %v158
    %v556 = vunpack.c.h.b16 %v158
    %v557 = vunpack.c.l.b16 %v159
    %v558 = vunpack.c.h.b16 %v159
    %v559 = vunpack.c.l.b16 %v160
    %v560 = vunpack.c.h.b16 %v160
    %v561 = vunpack.c.l.b16 %v161
    %v562 = vunpack.c.h.b16 %v161
    %v563 = vunpack.c.l.b16 %v162
    %v564 = vunpack.c.h.b16 %v162
    %v565 = vunpack.c.l.b16 %v163
    %v566 = vunpack.c.h.b16 %v163
    %v567 = vunpack.c.l.b16 %v164
    %v568 = vunpack.c.h.b16 %v164
    %v569 = vunpack.c.l.b16 %v165
    %v570 = vunpack.c.h.b16 %v165
    %v571 = vunpack.c.l.b16 %v166
    %v572 = vunpack.c.h.b16 %v166
    %v573 = vunpack.c.l.b16 %v167
    %v574 = vunpack.c.h.b16 %v167
    %v575 = vunpack.c.l.b16 %v168
    %v576 = vunpack.c.h.b16 %v168
    %v577 = vunpack.c.l.b16 %v169
    %v578 = vunpack.c.h.b16 %v169
    %v579 = vunpack.c.l.b16 %v170
    %v580 = vunpack.c.h.b16 %v170
    %v581 = vunpack.c.l.b16 %v171
    %v582 = vunpack.c.h.b16 %v171
    %v583 = vunpack.c.l.b16 %v172
    %v584 = vunpack.c.h.b16 %v172
    %v585 = vunpack.c.l.b16 %v173
    %v586 = vunpack.c.h.b16 %v173
    %v587 = vunpack.c.l.b16 %v174
    %v588 = vunpack.c.h.b16 %v174
    %v589 = vunpack.c.l.b16 %v175
    %v590 = vunpack.c.h.b16 %v175
    %v591 = vunpack.c.l.b16 %v176
    %v592 = vunpack.c.h.b16 %v176
    %v593 = vunpack.c.l.b16 %v177
    %v594 = vunpack.c.h.b16 %v177
    %v595 = vunpack.c.l.b16 %v178
    %v596 = vunpack.c.h.b16 %v178
    %v597 = vunpack.c.l.b16 %v179
    %v598 = vunpack.c.h.b16 %v179
    %v599 = vunpack.c.l.b16 %v180
    %v600 = vunpack.c.h.b16 %v180
    %v601 = vunpack.c.l.b16 %v181
    %v602 = vunpack.c.h.b16 %v181
    %v603 = vunpack.c.l.b16 %v182
    %v604 = vunpack.c.h.b16 %v182
    %v605 = vunpack.c.l.b16 %v183
    %v606 = vunpack.c.h.b16 %v183
    %v607 = vunpack.c.l.b16 %v184
    %v608 = vunpack.c.h.b16 %v184
    %v609 = vunpack.c.l.b16 %v185
    %v610 = vunpack.c.h.b16 %v185
    %v611 = vunpack.c.l.b16 %v186
    %v612 = vunpack.c.h.b16 %v186
    %v613 = vunpack.c.l.b16 %v187
    %v614 = vunpack.c.h.b16 %v187
    %v615 = vunpack.c.l.b16 %v188
    %v616 = vunpack.c.h.b16 %v188
    %v617 = vunpack.c.l.b16 %v189
    %v618 = vunpack.c.h.b16 %v189
    %v619 = vunpack.c.l.b16 %v190
    %v620 = vunpack.c.h.b16 %v190
    %v621 = vunpack.c.l.b16 %v191
    %v622 = vunpack.c.h.b16 %v191
    %v623 = vunpack.c.l.b16 %v192
    %v624 = vunpack.c.h.b16 %v192
    %v625 = vunpack.c.l.b16 %v193
    %v626 = vunpack.c.h.b16 %v193
    %v627 = vunpack.c.l.b16 %v194
    %v628 = vunpack.c.h.b16 %v194
    %v629 = vunpack.c.l.b16 %v195
    %v630 = vunpack.c.h.b16 %v195
    %v631 = vunpack.c.l.b16 %v196
    %v632 = vunpack.c.h.b16 %v196
    %v633 = vunpack.c.l.b16 %v197
    %v634 = vunpack.c.h.b16 %v197
    %v635 = vunpack.c.l.b16 %v198
    %v636 = vunpack.c.h.b16 %v198
    %v637 = vunpack.c.l.b16 %v199
    %v638 = vunpack.c.h.b16 %v199
    %v639 = vunpack.c.l.b16 %v200
    %v640 = vunpack.c.h.b16 %v200
    %v641 = vunpack.c.l.b16 %v201
    %v642 = vunpack.c.h.b16 %v201
    %v643 = vunpack.c.l.b16 %v202
    %v644 = vunpack.c.h.b16 %v202
    %v645 = vunpack.c.l.b16 %v203
    %v646 = vunpack.c.h.b16 %v203
    %v647 = vunpack.c.l.b16 %v204
    %v648 = vunpack.c.h.b16 %v204
    %v649 = vunpack.c.l.b16 %v205
    %v650 = vunpack.c.h.b16 %v205
    %v651 = vunpack.c.l.b16 %v206
    %v652 = vunpack.c.h.b16 %v206
    %v653 = vunpack.c.l.b16 %v207
    %v654 = vunpack.c.h.b16 %v207
    %v655 = vunpack.c.l.b16 %v208
    %v656 = vunpack.c.h.b16 %v208
    %v657 = vunpack.c.l.b16 %v209
    %v658 = vunpack.c.h.b16 %v209
    %v659 = vunpack.c.l.b16 %v210
    %v660 = vunpack.c.h.b16 %v210
    %v661 = vunpack.c.l.b16 %v211
    %v662 = vunpack.c.h.b16 %v211
    %v663 = vunpack.c.l.b16 %v212
    %v664 = vunpack.c.h.b16 %v212
    %v665 = vunpack.c.l.b16 %v213
    %v666 = vunpack.c.h.b16 %v213
    %v667 = vunpack.c.l.b16 %v214
    %v668 = vunpack.c.h.b16 %v214
    %v669 = vunpack.c.l.b16 %v215
    %v670 = vunpack.c.h.b16 %v215
    %v671 = vunpack.c.l.b16 %v216
    %v672 = vunpack.c.h.b16 %v216
    %v673 = vunpack.c.l.b16 %v217
    %v674 = vunpack.c.h.b16 %v217
    %v675 = vunpack.c.l.b16 %v218
    %v676 = vunpack.c.h.b16 %v218
    %v677 = vunpack.c.l.b16 %v219
    %v678 = vunpack.c.h.b16 %v219
    %v679 = vunpack.c.l.b16 %v220
    %v680 = vunpack.c.h.b16 %v220
    %v681 = vunpack.c.l.b16 %v221
    %v682 = vunpack.c.h.b16 %v221
    %v683 = vunpack.c.l.b16 %v222
    %v684 = vunpack.c.h.b16 %v222
    %v685 = vunpack.c.l.b16 %v223
    %v686 = vunpack.c.h.b16 %v223
    %v687 = vunpack.c.l.b16 %v224
    %v688 = vunpack.c.h.b16 %v224
    %v689 = vpack.c.b16 %v407, %v401
    %v690 = vpack.c.b16 %v408, %v402
    %v691 = vpack.c.b16 %v409, %v403
    %v692 = vpack.c.b16 %v410, %v404
    %v693 = vpack.c.b16 %v411, %v405
    %v694 = vpack.c.b16 %v412, %v406
    %v695 = vpack.c.b16 %v419, %v413
    %v696 = vpack.c.b16 %v420, %v414
    %v697 = vpack.c.b16 %v421, %v415
    %v698 = vpack.c.b16 %v422, %v416
    %v699 = vpack.c.b16 %v423, %v417
    %v700 = vpack.c.b16 %v424, %v418
    %v701 = vpack.c.b16 %v431, %v425
    %v702 = vpack.c.b16 %v432, %v426
    %v703 = vpack.c.b16 %v433, %v427
    %v704 = vpack.c.b16 %v434, %v428
    %v705 = vpack.c.b16 %v435, %v429
    %v706 = vpack.c.b16 %v436, %v430
    %v707 = vpack.c.b16 %v443, %v437
    %v708 = vpack.c.b16 %v444, %v438
    %v709 = vpack.c.b16 %v445, %v439
    %v710 = vpack.c.b16 %v446, %v440
    %v711 = vpack.c.b16 %v447, %v441
    %v712 = vpack.c.b16 %v448, %v442
    %v713 = vpack.c.b16 %v455, %v449
    %v714 = vpack.c.b16 %v456, %v450
    %v715 = vpack.c.b16 %v457, %v451
    %v716 = vpack.c.b16 %v458, %v452
    %v717 = vpack.c.b16 %v459, %v453
    %v718 = vpack.c.b16 %v460, %v454
    %v719 = vpack.c.b16 %v467, %v461
    %v720 = vpack.c.b16 %v468, %v462
    %v721 = vpack.c.b16 %v469, %v463
    %v722 = vpack.c.b16 %v470, %v464
    %v723 = vpack.c.b16 %v471, %v465
    %v724 = vpack.c.b16 %v472, %v466
    %v725 = vpack.c.b16 %v479, %v473
    %v726 = vpack.c.b16 %v480, %v474
    %v727 = vpack.c.b16 %v481, %v475
    %v728 = vpack.c.b16 %v482, %v476
    %v729 = vpack.c.b16 %v483, %v477
    %v730 = vpack.c.b16 %v484, %v478
    %v731 = vpack.c.b16 %v491, %v485
    %v732 = vpack.c.b16 %v492, %v486
    %v733 = vpack.c.b16 %v493, %v487
    %v734 = vpack.c.b16 %v494, %v488
    %v735 = vpack.c.b16 %v495, %v489
    %v736 = vpack.c.b16 %v496, %v490
    %v737 = vpack.c.b16 %v503, %v497
    %v738 = vpack.c.b16 %v504, %v498
    %v739 = vpack.c.b16 %v505, %v499
    %v740 = vpack.c.b16 %v506, %v500
    %v741 = vpack.c.b16 %v507, %v501
    %v742 = vpack.c.b16 %v508, %v502
    %v743 = vpack.c.b16 %v515, %v509
    %v744 = vpack.c.b16 %v516, %v510
    %v745 = vpack.c.b16 %v517, %v511
    %v746 = vpack.c.b16 %v518, %v512
    %v747 = vpack.c.b16 %v519, %v513
    %v748 = vpack.c.b16 %v520, %v514
    %v749 = vpack.c.b16 %v527, %v521
    %v750 = vpack.c.b16 %v528, %v522
    %v751 = vpack.c.b16 %v529, %v523
    %v752 = vpack.c.b16 %v530, %v524
    %v753 = vpack.c.b16 %v531, %v525
    %v754 = vpack.c.b16 %v532, %v526
    %v755 = vpack.c.b16 %v539, %v533
    %v756 = vpack.c.b16 %v540, %v534
    %v757 = vpack.c.b16 %v541, %v535
    %v758 = vpack.c.b16 %v542, %v536
    %v759 = vpack.c.b16 %v543, %v537
    %v760 = vpack.c.b16 %v544, %v538
    %v761 = vpack.c.b16 %v551, %v545
    %v762 = vpack.c.b16 %v552, %v546
    %v763 = vpack.c.b16 %v553, %v547
    %v764 = vpack.c.b16 %v554, %v548
    %v765 = vpack.c.b16 %v555, %v549
    %v766 = vpack.c.b16 %v556, %v550
    %v767 = vpack.c.b16 %v563, %v557
    %v768 = vpack.c.b16 %v564, %v558
    %v769 = vpack.c.b16 %v565, %v559
    %v770 = vpack.c.b16 %v566, %v560
    %v771 = vpack.c.b16 %v567, %v561
    %v772 = vpack.c.b16 %v568, %v562
    %v773 = vpack.c.b16 %v575, %v569
    %v774 = vpack.c.b16 %v576, %v570
    %v775 = vpack.c.b16 %v577, %v571
    %v776 = vpack.c.b16 %v578, %v572
    %v777 = vpack.c.b16 %v579, %v573
    %v778 = vpack.c.b16 %v580, %v574
    %v779 = vpack.c.b16 %v587, %v581
    %v780 = vpack.c.b16 %v588, %v582
    %v781 = vpack.c.b16 %v589, %v583
    %v782 = vpack.c.b16 %v590, %v584
    %v783 = vpack.c.b16 %v591, %v585
    %v784 = vpack.c.b16 %v592, %v586
    %v785 = vpack.c.b16 %v599, %v593
    %v786 = vpack.c.b16 %v600, %v594
    %v787 = vpack.c.b16 %v601, %v595
    %v788 = vpack.c.b16 %v602, %v596
    %v789 = vpack.c.b16 %v603, %v597
    %v790 = vpack.c.b16 %v604, %v598
    %v791 = vpack.c.b16 %v611, %v605
    %v792 = vpack.c.b16 %v612, %v606
    %v793 = vpack.c.b16 %v613, %v607
    %v794 = vpack.c.b16 %v614, %v608
    %v795 = vpack.c.b16 %v615, %v609
    %v796 = vpack.c.b16 %v616, %v610
    %v797 = vpack.c.b16 %v623, %v617
    %v798 = vpack.c.b16 %v624, %v618
    %v799 = vpack.c.b16 %v625, %v619
    %v800 = vpack.c.b16 %v626, %v620
    %v801 = vpack.c.b16 %v627, %v621
    %v802 = vpack.c.b16 %v628, %v622
    %v803 = vpack.c.b16 %v635, %v629
    %v804 = vpack.c.b16 %v636, %v630
    %v805 = vpack.c.b16 %v637, %v631
    %v806 = vpack.c.b16 %v638, %v632
    %v807 = vpack.c.b16 %v639, %v633
    %v808 = vpack.c.b16 %v640, %v634
    %v809 = vpack.c.b16 %v647, %v641
    %v810 = vpack.c.b16 %v648, %v642
    %v811 = vpack.c.b16 %v649, %v643
    %v812 = vpack.c.b16 %v650, %v644
    %v813 = vpack.c.b16 %v651, %v645
    %v814 = vpack.c.b16 %v652, %v646
    %v815 = vpack.c.b16 %v659, %v653
    %v816 = vpack.c.b16 %v660, %v654
    %v817 = vpack.c.b16 %v661, %v655
    %v818 = vpack.c.b16 %v662, %v656
    %v819 = vpack.c.b16 %v663, %v657
    %v820 = vpack.c.b16 %v664, %v658
    %v821 = vpack.c.b16 %v671, %v665
    %v822 = vpack.c.b16 %v672, %v666
    %v823 = vpack.c.b16 %v673, %v667
    %v824 = vpack.c.b16 %v674, %v668
    %v825 = vpack.c.b16 %v675, %v669
    %v826 = vpack.c.b16 %v676, %v670
    %v827 = vpack.c.b16 %v683, %v677
    %v828 = vpack.c.b16 %v684, %v678
    %v829 = vpack.c.b16 %v685, %v679
    %v830 = vpack.c.b16 %v686, %v680
    %v831 = vpack.c.b16 %v687, %v681
    %v832 = vpack.c.b16 %v688, %v682
    %977 = vmatprep.subr.bf16.mxu0 %v690
    %978 = vmatpush1.bf16.msra.mxu0 %v689
    %979 = vmatprep.subr.bf16.mxu0 %v696
    %980 = vmatpush1.bf16.msra.mxu0 %v695
    %981 = vmatprep.subr.bf16.mxu0 %v702
    %982 = vmatpush1.bf16.msra.mxu0 %v701
    %983 = vmatprep.subr.bf16.mxu0 %v708
    %984 = vmatpush1.bf16.msra.mxu0 %v707
    %985 = vmatprep.subr.bf16.mxu0 %v714
    %986 = vmatpush1.bf16.msra.mxu0 %v713
    %987 = vmatprep.subr.bf16.mxu0 %v720
    %988 = vmatpush1.bf16.msra.mxu0 %v719
    %989 = vmatprep.subr.bf16.mxu0 %v726
    %990 = vmatpush1.bf16.msra.mxu0 %v725
    %991 = vmatprep.subr.bf16.mxu0 %v732
    %992 = vmatpush1.bf16.msra.mxu0 %v731
    %993 = vmatprep.subr.bf16.mxu0 %v738
    %994 = vmatpush1.bf16.msra.mxu0 %v737
    %995 = vmatprep.subr.bf16.mxu0 %v744
    %996 = vmatpush1.bf16.msra.mxu0 %v743
    %997 = vmatprep.subr.bf16.mxu0 %v750
    %998 = vmatpush1.bf16.msra.mxu0 %v749
    %999 = vmatprep.subr.bf16.mxu0 %v756
    %1000 = vmatpush1.bf16.msra.mxu0 %v755
    %1001 = vmatprep.subr.bf16.mxu0 %v762
    %1002 = vmatpush1.bf16.msra.mxu0 %v761
    %1003 = vmatprep.subr.bf16.mxu0 %v768
    %1004 = vmatpush1.bf16.msra.mxu0 %v767
    %1005 = vmatprep.subr.bf16.mxu0 %v774
    %1006 = vmatpush1.bf16.msra.mxu0 %v773
    %1007 = vmatprep.subr.bf16.mxu0 %v780
    %1008 = vmatpush1.bf16.msra.mxu0 %v779
    %1009 = vmatprep.mubr.bf16.mxu0 %v79
    %1010 = vmatmul.mubr.bf16.gmra.mrb[0].mxu0 %v78
    %v1011 = vpop.f32.mrb[0].mxu0
    %v1012 = vadd.f32 %v230, %v1011
    %v1013 = vpop.f32.mrb[0].mxu0
    %v1014 = vadd.f32 %v234, %v1013
    %v1015 = vpop.f32.mrb[0].mxu0
    %v1016 = vpop.f32.mrb[0].mxu0
    %1017 = vdwg.mxu0
    %1018 = vmatprep.subr.bf16.mxu0 %v786
    %1019 = vmatpush1.bf16.msra.mxu0 %v785
    %1020 = vmatprep.subr.bf16.mxu0 %v792
    %1021 = vmatpush1.bf16.msra.mxu0 %v791
    %1022 = vmatprep.subr.bf16.mxu0 %v798
    %1023 = vmatpush1.bf16.msra.mxu0 %v797
    %1024 = vmatprep.subr.bf16.mxu0 %v804
    %1025 = vmatpush1.bf16.msra.mxu0 %v803
    %1026 = vmatprep.subr.bf16.mxu0 %v810
    %1027 = vmatpush1.bf16.msra.mxu0 %v809
    %1028 = vmatprep.subr.bf16.mxu0 %v816
    %1029 = vmatpush1.bf16.msra.mxu0 %v815
    %1030 = vmatprep.subr.bf16.mxu0 %v822
    %1031 = vmatpush1.bf16.msra.mxu0 %v821
    %1032 = vmatprep.subr.bf16.mxu0 %v828
    %1033 = vmatpush1.bf16.msra.mxu0 %v827
    %1034 = vmatprep.subr.bf16.mxu0 0
    %1035 = vmatpush1.bf16.msra.mxu0 0
    %1036 = vmatprep.subr.bf16.mxu0 0
    %1037 = vmatpush1.bf16.msra.mxu0 0
    %1038 = vmatprep.subr.bf16.mxu0 0
    %1039 = vmatpush1.bf16.msra.mxu0 0
    %1040 = vmatprep.subr.bf16.mxu0 0
    %1041 = vmatpush1.bf16.msra.mxu0 0
    %1042 = vmatprep.subr.bf16.mxu0 0
    %1043 = vmatpush1.bf16.msra.mxu0 0
    %1044 = vmatprep.subr.bf16.mxu0 0
    %1045 = vmatpush1.bf16.msra.mxu0 0
    %1046 = vmatprep.subr.bf16.mxu0 0
    %1047 = vmatpush1.bf16.msra.mxu0 0
    %1048 = vmatprep.subr.bf16.mxu0 0
    %1049 = vmatpush1.bf16.msra.mxu0 0
    %1050 = vmatprep.mubr.bf16.mxu0 0
    %1051 = vmatmul.mubr.bf16.gmra.mrb[0].mxu0 %v80
    %v1052 = vpop.f32.mrb[0].mxu0
    %v1053 = vadd.f32 %v1012, %v1052
    %v1054 = vpop.f32.mrb[0].mxu0
    %v1055 = vadd.f32 %v1014, %v1054
    %v1056 = vpop.f32.mrb[0].mxu0
    %v1057 = vpop.f32.mrb[0].mxu0
    %1058 = vdwg.mxu0
    %1059 = vmatprep.subr.bf16.mxu0 %v692
    %1060 = vmatpush1.bf16.msra.mxu0 %v691
    %1061 = vmatprep.subr.bf16.mxu0 %v698
    %1062 = vmatpush1.bf16.msra.mxu0 %v697
    %1063 = vmatprep.subr.bf16.mxu0 %v704
    %1064 = vmatpush1.bf16.msra.mxu0 %v703
    %1065 = vmatprep.subr.bf16.mxu0 %v710
    %1066 = vmatpush1.bf16.msra.mxu0 %v709
    %1067 = vmatprep.subr.bf16.mxu0 %v716
    %1068 = vmatpush1.bf16.msra.mxu0 %v715
    %1069 = vmatprep.subr.bf16.mxu0 %v722
    %1070 = vmatpush1.bf16.msra.mxu0 %v721
    %1071 = vmatprep.subr.bf16.mxu0 %v728
    %1072 = vmatpush1.bf16.msra.mxu0 %v727
    %1073 = vmatprep.subr.bf16.mxu0 %v734
    %1074 = vmatpush1.bf16.msra.mxu0 %v733
    %1075 = vmatprep.subr.bf16.mxu0 %v740
    %1076 = vmatpush1.bf16.msra.mxu0 %v739
    %1077 = vmatprep.subr.bf16.mxu0 %v746
    %1078 = vmatpush1.bf16.msra.mxu0 %v745
    %1079 = vmatprep.subr.bf16.mxu0 %v752
    %1080 = vmatpush1.bf16.msra.mxu0 %v751
    %1081 = vmatprep.subr.bf16.mxu0 %v758
    %1082 = vmatpush1.bf16.msra.mxu0 %v757
    %1083 = vmatprep.subr.bf16.mxu0 %v764
    %1084 = vmatpush1.bf16.msra.mxu0 %v763
    %1085 = vmatprep.subr.bf16.mxu0 %v770
    %1086 = vmatpush1.bf16.msra.mxu0 %v769
    %1087 = vmatprep.subr.bf16.mxu0 %v776
    %1088 = vmatpush1.bf16.msra.mxu0 %v775
    %1089 = vmatprep.subr.bf16.mxu0 %v782
    %1090 = vmatpush1.bf16.msra.mxu0 %v781
    %1091 = vmatprep.mubr.bf16.mxu0 %v79
    %1092 = vmatmul.mubr.bf16.gmra.mrb[0].mxu0 %v78
    %v1093 = vpop.f32.mrb[0].mxu0
    %v1094 = vadd.f32 %v238, %v1093
    %v1095 = vpop.f32.mrb[0].mxu0
    %v1096 = vadd.f32 %v242, %v1095
    %v1097 = vpop.f32.mrb[0].mxu0
    %v1098 = vpop.f32.mrb[0].mxu0
    %1099 = vdwg.mxu0
    %1100 = vmatprep.subr.bf16.mxu0 %v788
    %1101 = vmatpush1.bf16.msra.mxu0 %v787
    %1102 = vmatprep.subr.bf16.mxu0 %v794
    %1103 = vmatpush1.bf16.msra.mxu0 %v793
    %1104 = vmatprep.subr.bf16.mxu0 %v800
    %1105 = vmatpush1.bf16.msra.mxu0 %v799
    %1106 = vmatprep.subr.bf16.mxu0 %v806
    %1107 = vmatpush1.bf16.msra.mxu0 %v805
    %1108 = vmatprep.subr.bf16.mxu0 %v812
    %1109 = vmatpush1.bf16.msra.mxu0 %v811
    %1110 = vmatprep.subr.bf16.mxu0 %v818
    %1111 = vmatpush1.bf16.msra.mxu0 %v817
    %1112 = vmatprep.subr.bf16.mxu0 %v824
    %1113 = vmatpush1.bf16.msra.mxu0 %v823
    %1114 = vmatprep.subr.bf16.mxu0 %v830
    %1115 = vmatpush1.bf16.msra.mxu0 %v829
    %1116 = vmatprep.subr.bf16.mxu0 0
    %1117 = vmatpush1.bf16.msra.mxu0 0
    %1118 = vmatprep.subr.bf16.mxu0 0
    %1119 = vmatpush1.bf16.msra.mxu0 0
    %1120 = vmatprep.subr.bf16.mxu0 0
    %1121 = vmatpush1.bf16.msra.mxu0 0
    %1122 = vmatprep.subr.bf16.mxu0 0
    %1123 = vmatpush1.bf16.msra.mxu0 0
    %1124 = vmatprep.subr.bf16.mxu0 0
    %1125 = vmatpush1.bf16.msra.mxu0 0
    %1126 = vmatprep.subr.bf16.mxu0 0
    %1127 = vmatpush1.bf16.msra.mxu0 0
    %1128 = vmatprep.subr.bf16.mxu0 0
    %1129 = vmatpush1.bf16.msra.mxu0 0
    %1130 = vmatprep.subr.bf16.mxu0 0
    %1131 = vmatpush1.bf16.msra.mxu0 0
    %1132 = vmatprep.mubr.bf16.mxu0 0
    %1133 = vmatmul.mubr.bf16.gmra.mrb[0].mxu0 %v80
    %v1134 = vpop.f32.mrb[0].mxu0
    %v1135 = vadd.f32 %v1094, %v1134
    %v1136 = vpop.f32.mrb[0].mxu0
    %v1137 = vadd.f32 %v1096, %v1136
    %v1138 = vpop.f32.mrb[0].mxu0
    %v1139 = vpop.f32.mrb[0].mxu0
    %1140 = vdwg.mxu0
    %1141 = vmatprep.subr.bf16.mxu0 %v694
    %1142 = vmatpush1.bf16.msra.mxu0 %v693
    %1143 = vmatprep.subr.bf16.mxu0 %v700
    %1144 = vmatpush1.bf16.msra.mxu0 %v699
    %1145 = vmatprep.subr.bf16.mxu0 %v706
    %1146 = vmatpush1.bf16.msra.mxu0 %v705
    %1147 = vmatprep.subr.bf16.mxu0 %v712
    %1148 = vmatpush1.bf16.msra.mxu0 %v711
    %1149 = vmatprep.subr.bf16.mxu0 %v718
    %1150 = vmatpush1.bf16.msra.mxu0 %v717
    %1151 = vmatprep.subr.bf16.mxu0 %v724
    %1152 = vmatpush1.bf16.msra.mxu0 %v723
    %1153 = vmatprep.subr.bf16.mxu0 %v730
    %1154 = vmatpush1.bf16.msra.mxu0 %v729
    %1155 = vmatprep.subr.bf16.mxu0 %v736
    %1156 = vmatpush1.bf16.msra.mxu0 %v735
    %1157 = vmatprep.subr.bf16.mxu0 %v742
    %1158 = vmatpush1.bf16.msra.mxu0 %v741
    %1159 = vmatprep.subr.bf16.mxu0 %v748
    %1160 = vmatpush1.bf16.msra.mxu0 %v747
    %1161 = vmatprep.subr.bf16.mxu0 %v754
    %1162 = vmatpush1.bf16.msra.mxu0 %v753
    %1163 = vmatprep.subr.bf16.mxu0 %v760
    %1164 = vmatpush1.bf16.msra.mxu0 %v759
    %1165 = vmatprep.subr.bf16.mxu0 %v766
    %1166 = vmatpush1.bf16.msra.mxu0 %v765
    %1167 = vmatprep.subr.bf16.mxu0 %v772
    %1168 = vmatpush1.bf16.msra.mxu0 %v771
    %1169 = vmatprep.subr.bf16.mxu0 %v778
    %1170 = vmatpush1.bf16.msra.mxu0 %v777
    %1171 = vmatprep.subr.bf16.mxu0 %v784
    %1172 = vmatpush1.bf16.msra.mxu0 %v783
    %1173 = vmatprep.mubr.bf16.mxu0 %v79
    %1174 = vmatmul.mubr.bf16.gmra.mrb[0].mxu0 %v78
    %v1175 = vpop.f32.mrb[0].mxu0
    %v1176 = vadd.f32 %v246, %v1175
    %v1177 = vpop.f32.mrb[0].mxu0
    %v1178 = vadd.f32 %v250, %v1177
    %v1179 = vpop.f32.mrb[0].mxu0
    %v1180 = vpop.f32.mrb[0].mxu0
    %1181 = vdwg.mxu0
    %1182 = vmatprep.subr.bf16.mxu0 %v790
    %1183 = vmatpush1.bf16.msra.mxu0 %v789
    %1184 = vmatprep.subr.bf16.mxu0 %v796
    %1185 = vmatpush1.bf16.msra.mxu0 %v795
    %1186 = vmatprep.subr.bf16.mxu0 %v802
    %1187 = vmatpush1.bf16.msra.mxu0 %v801
    %1188 = vmatprep.subr.bf16.mxu0 %v808
    %1189 = vmatpush1.bf16.msra.mxu0 %v807
    %1190 = vmatprep.subr.bf16.mxu0 %v814
    %1191 = vmatpush1.bf16.msra.mxu0 %v813
    %1192 = vmatprep.subr.bf16.mxu0 %v820
    %1193 = vmatpush1.bf16.msra.mxu0 %v819
    %1194 = vmatprep.subr.bf16.mxu0 %v826
    %1195 = vmatpush1.bf16.msra.mxu0 %v825
    %1196 = vmatprep.subr.bf16.mxu0 %v832
    %1197 = vmatpush1.bf16.msra.mxu0 %v831
    %1198 = vmatprep.subr.bf16.mxu0 0
    %1199 = vmatpush1.bf16.msra.mxu0 0
    %1200 = vmatprep.subr.bf16.mxu0 0
    %1201 = vmatpush1.bf16.msra.mxu0 0
    %1202 = vmatprep.subr.bf16.mxu0 0
    %1203 = vmatpush1.bf16.msra.mxu0 0
    %1204 = vmatprep.subr.bf16.mxu0 0
    %1205 = vmatpush1.bf16.msra.mxu0 0
    %1206 = vmatprep.subr.bf16.mxu0 0
    %1207 = vmatpush1.bf16.msra.mxu0 0
    %1208 = vmatprep.subr.bf16.mxu0 0
    %1209 = vmatpush1.bf16.msra.mxu0 0
    %1210 = vmatprep.subr.bf16.mxu0 0
    %1211 = vmatpush1.bf16.msra.mxu0 0
    %1212 = vmatprep.subr.bf16.mxu0 0
    %1213 = vmatpush1.bf16.msra.mxu0 0
    %1214 = vmatprep.mubr.bf16.mxu0 0
    %1215 = vmatmul.mubr.bf16.gmra.mrb[0].mxu0 %v80
    %v1216 = vpop.f32.mrb[0].mxu0
    %v1217 = vadd.f32 %v1176, %v1216
    %v1218 = vpop.f32.mrb[0].mxu0
    %v1219 = vadd.f32 %v1178, %v1218
    %v1220 = vpop.f32.mrb[0].mxu0
    %v1221 = vpop.f32.mrb[0].mxu0
    %1222 = vdwg.mxu0
    %v1223 = vxor.u32 %v1053, 2147483648
    %v1224 = vxor.u32 %v1055, 2147483648
    %v1225 = vxor.u32 %v1135, 2147483648
    %v1226 = vmul.f32 %v1223, 1.442695
    %v1227 = vpow.pop %v1226
    %v1228 = vmul.f32 %v1224, 1.442695
    %v1229 = vpow.pop %v1228
    %v1230 = vmul.f32 %v1225, 1.442695
    %v1231 = vpow.pop %v1230
    %v1232 = vadd.f32 %v1227, 1.0
    %v1233 = vadd.f32 %v1229, 1.0
    %v1234 = vadd.f32 %v1231, 1.0
    %v1235 = vrcp.pop %v1232
    %v1236 = vmul.f32 1.0, %v1235
    %v1237 = vrcp.pop %v1233
    %v1238 = vmul.f32 1.0, %v1237
    %v1239 = vrcp.pop %v1234
    %v1240 = vmul.f32 1.0, %v1239
    %v1241 = vmax.f32 %v1137, %v1217
    %v1242 = vmul.f32 %v1238, %v77
    %v1243 = vmul.f32 %v1236, %v1241
    %v1244 = vadd.f32 %v1242, %v1243
    %v1245 = vtanh.pop %v1244
    %v1246 = vmul.f32 %v1240, %v1245
    %v1247 = vxor.u32 %v1219, 2147483648
    %v1248 = vmul.f32 %v1247, 1.442695
    %v1249 = vpow.pop %v1248
    %v1250 = vadd.f32 %v1249, 1.0
    %v1251 = vrcp.pop %v1250
    %v1252 = vmul.f32 1.0, %v1251
    %v1253 = vmul.f32 %v1252, %v1245
    %1254 = vst [vmem:[%s17] sm:$0xff] %v1246
    %1255 = vst [vmem:[%s18] sm:$0xff] %v1244
    %v1256 = vpack.c.bf16 %v1253, %v1253
    %v1257 = vpack.c.bf16 %v1246, %v1246
    %v1258 = vld [vmem:[%s8] sm:$0xff]
    %v1259 = vld [vmem:[%s8 + $0x8] sm:$0xff]
    %v1260 = vld [vmem:[%s8 + $0x10] sm:$0xff]
    %v1261 = vld [vmem:[%s8 + $0x18] sm:$0xff]
    %v1262 = vld [vmem:[%s8 + $0x20] sm:$0xff]
    %v1263 = vld [vmem:[%s8 + $0x28] sm:$0xff]
    %v1264 = vld [vmem:[%s8 + $0x30] sm:$0xff]
    %v1265 = vld [vmem:[%s8 + $0x38] sm:$0xff]
    %v1266 = vld [vmem:[%s8 + $0x40] sm:$0xff]
    %v1267 = vld [vmem:[%s8 + $0x48] sm:$0xff]
    %v1268 = vld [vmem:[%s8 + $0x50] sm:$0xff]
    %v1269 = vld [vmem:[%s8 + $0x58] sm:$0xff]
    %v1270 = vld [vmem:[%s8 + $0x60] sm:$0xff]
    %v1271 = vld [vmem:[%s8 + $0x68] sm:$0xff]
    %v1272 = vld [vmem:[%s8 + $0x70] sm:$0xff]
    %v1273 = vld [vmem:[%s8 + $0x78] sm:$0xff]
    %v1274 = vld [vmem:[%s8 + $0x80] sm:$0xff]
    %v1275 = vld [vmem:[%s8 + $0x88] sm:$0xff]
    %v1276 = vld [vmem:[%s8 + $0x90] sm:$0xff]
    %v1277 = vld [vmem:[%s8 + $0x98] sm:$0xff]
    %v1278 = vld [vmem:[%s8 + $0xa0] sm:$0xff]
    %v1279 = vld [vmem:[%s8 + $0xa8] sm:$0xff]
    %v1280 = vld [vmem:[%s8 + $0xb0] sm:$0xff]
    %v1281 = vld [vmem:[%s8 + $0xb8] sm:$0xff]
    %v1282 = vld [vmem:[%s8 + $0xc0] sm:$0xff]
    %v1283 = vld [vmem:[%s8 + $0xc8] sm:$0xff]
    %v1284 = vld [vmem:[%s8 + $0xd0] sm:$0xff]
    %v1285 = vld [vmem:[%s8 + $0xd8] sm:$0xff]
    %v1286 = vld [vmem:[%s8 + $0xe0] sm:$0xff]
    %v1287 = vld [vmem:[%s8 + $0xe8] sm:$0xff]
    %v1288 = vld [vmem:[%s8 + $0xf0] sm:$0xff]
    %v1289 = vld [vmem:[%s8 + $0xf8] sm:$0xff]
    %v1290 = vld [vmem:[%s9] sm:$0x3]
    %v1292 = vlaneseq
    %v1293 = vshrl.u32 %v1292, 7
    %v1294 = vsub.s32 0, %v1293
    %v1295 = vrot.slane %v1290, %v1294
    %v1296 = vlaneseq
    %v1297 = vshrl.u32 %v1296, 7
    %v1298 = vsub.s32 1, %v1297
    %v1299 = vrot.slane %v1290, %v1298
    %v1334 = vunpack.c.l.b16 %v1258
    %v1335 = vunpack.c.h.b16 %v1258
    %v1336 = vunpack.c.l.b16 %v1259
    %v1337 = vunpack.c.h.b16 %v1259
    %v1338 = vunpack.c.l.b16 %v1260
    %v1339 = vunpack.c.h.b16 %v1260
    %v1340 = vunpack.c.l.b16 %v1261
    %v1341 = vunpack.c.h.b16 %v1261
    %v1342 = vunpack.c.l.b16 %v1262
    %v1343 = vunpack.c.h.b16 %v1262
    %v1344 = vunpack.c.l.b16 %v1263
    %v1345 = vunpack.c.h.b16 %v1263
    %v1346 = vunpack.c.l.b16 %v1264
    %v1347 = vunpack.c.h.b16 %v1264
    %v1348 = vunpack.c.l.b16 %v1265
    %v1349 = vunpack.c.h.b16 %v1265
    %v1350 = vunpack.c.l.b16 %v1266
    %v1351 = vunpack.c.h.b16 %v1266
    %v1352 = vunpack.c.l.b16 %v1267
    %v1353 = vunpack.c.h.b16 %v1267
    %v1354 = vunpack.c.l.b16 %v1268
    %v1355 = vunpack.c.h.b16 %v1268
    %v1356 = vunpack.c.l.b16 %v1269
    %v1357 = vunpack.c.h.b16 %v1269
    %v1358 = vunpack.c.l.b16 %v1270
    %v1359 = vunpack.c.h.b16 %v1270
    %v1360 = vunpack.c.l.b16 %v1271
    %v1361 = vunpack.c.h.b16 %v1271
    %v1362 = vunpack.c.l.b16 %v1272
    %v1363 = vunpack.c.h.b16 %v1272
    %v1364 = vunpack.c.l.b16 %v1273
    %v1365 = vunpack.c.h.b16 %v1273
    %v1366 = vunpack.c.l.b16 %v1274
    %v1367 = vunpack.c.h.b16 %v1274
    %v1368 = vunpack.c.l.b16 %v1275
    %v1369 = vunpack.c.h.b16 %v1275
    %v1370 = vunpack.c.l.b16 %v1276
    %v1371 = vunpack.c.h.b16 %v1276
    %v1372 = vunpack.c.l.b16 %v1277
    %v1373 = vunpack.c.h.b16 %v1277
    %v1374 = vunpack.c.l.b16 %v1278
    %v1375 = vunpack.c.h.b16 %v1278
    %v1376 = vunpack.c.l.b16 %v1279
    %v1377 = vunpack.c.h.b16 %v1279
    %v1378 = vunpack.c.l.b16 %v1280
    %v1379 = vunpack.c.h.b16 %v1280
    %v1380 = vunpack.c.l.b16 %v1281
    %v1381 = vunpack.c.h.b16 %v1281
    %v1382 = vunpack.c.l.b16 %v1282
    %v1383 = vunpack.c.h.b16 %v1282
    %v1384 = vunpack.c.l.b16 %v1283
    %v1385 = vunpack.c.h.b16 %v1283
    %v1386 = vunpack.c.l.b16 %v1284
    %v1387 = vunpack.c.h.b16 %v1284
    %v1388 = vunpack.c.l.b16 %v1285
    %v1389 = vunpack.c.h.b16 %v1285
    %v1390 = vunpack.c.l.b16 %v1286
    %v1391 = vunpack.c.h.b16 %v1286
    %v1392 = vunpack.c.l.b16 %v1287
    %v1393 = vunpack.c.h.b16 %v1287
    %v1394 = vunpack.c.l.b16 %v1288
    %v1395 = vunpack.c.h.b16 %v1288
    %v1396 = vunpack.c.l.b16 %v1289
    %v1397 = vunpack.c.h.b16 %v1289
    %v1398 = vpack.c.b16 %v1336, %v1334
    %v1399 = vpack.c.b16 %v1337, %v1335
    %v1400 = vpack.c.b16 %v1340, %v1338
    %v1401 = vpack.c.b16 %v1341, %v1339
    %v1402 = vpack.c.b16 %v1344, %v1342
    %v1403 = vpack.c.b16 %v1345, %v1343
    %v1404 = vpack.c.b16 %v1348, %v1346
    %v1405 = vpack.c.b16 %v1349, %v1347
    %v1406 = vpack.c.b16 %v1352, %v1350
    %v1407 = vpack.c.b16 %v1353, %v1351
    %v1408 = vpack.c.b16 %v1356, %v1354
    %v1409 = vpack.c.b16 %v1357, %v1355
    %v1410 = vpack.c.b16 %v1360, %v1358
    %v1411 = vpack.c.b16 %v1361, %v1359
    %v1412 = vpack.c.b16 %v1364, %v1362
    %v1413 = vpack.c.b16 %v1365, %v1363
    %v1414 = vpack.c.b16 %v1368, %v1366
    %v1415 = vpack.c.b16 %v1369, %v1367
    %v1416 = vpack.c.b16 %v1372, %v1370
    %v1417 = vpack.c.b16 %v1373, %v1371
    %v1418 = vpack.c.b16 %v1376, %v1374
    %v1419 = vpack.c.b16 %v1377, %v1375
    %v1420 = vpack.c.b16 %v1380, %v1378
    %v1421 = vpack.c.b16 %v1381, %v1379
    %v1422 = vpack.c.b16 %v1384, %v1382
    %v1423 = vpack.c.b16 %v1385, %v1383
    %v1424 = vpack.c.b16 %v1388, %v1386
    %v1425 = vpack.c.b16 %v1389, %v1387
    %v1426 = vpack.c.b16 %v1392, %v1390
    %v1427 = vpack.c.b16 %v1393, %v1391
    %v1428 = vpack.c.b16 %v1396, %v1394
    %v1429 = vpack.c.b16 %v1397, %v1395
    %1462 = vmatprep.subr.bf16.mxu0 %v1399
    %1463 = vmatpush1.bf16.msra.mxu0 %v1398
    %1464 = vmatprep.subr.bf16.mxu0 %v1401
    %1465 = vmatpush1.bf16.msra.mxu0 %v1400
    %1466 = vmatprep.subr.bf16.mxu0 %v1403
    %1467 = vmatpush1.bf16.msra.mxu0 %v1402
    %1468 = vmatprep.subr.bf16.mxu0 %v1405
    %1469 = vmatpush1.bf16.msra.mxu0 %v1404
    %1470 = vmatprep.subr.bf16.mxu0 %v1407
    %1471 = vmatpush1.bf16.msra.mxu0 %v1406
    %1472 = vmatprep.subr.bf16.mxu0 %v1409
    %1473 = vmatpush1.bf16.msra.mxu0 %v1408
    %1474 = vmatprep.subr.bf16.mxu0 %v1411
    %1475 = vmatpush1.bf16.msra.mxu0 %v1410
    %1476 = vmatprep.subr.bf16.mxu0 %v1413
    %1477 = vmatpush1.bf16.msra.mxu0 %v1412
    %1478 = vmatprep.subr.bf16.mxu0 %v1415
    %1479 = vmatpush1.bf16.msra.mxu0 %v1414
    %1480 = vmatprep.subr.bf16.mxu0 %v1417
    %1481 = vmatpush1.bf16.msra.mxu0 %v1416
    %1482 = vmatprep.subr.bf16.mxu0 %v1419
    %1483 = vmatpush1.bf16.msra.mxu0 %v1418
    %1484 = vmatprep.subr.bf16.mxu0 %v1421
    %1485 = vmatpush1.bf16.msra.mxu0 %v1420
    %1486 = vmatprep.subr.bf16.mxu0 %v1423
    %1487 = vmatpush1.bf16.msra.mxu0 %v1422
    %1488 = vmatprep.subr.bf16.mxu0 %v1425
    %1489 = vmatpush1.bf16.msra.mxu0 %v1424
    %1490 = vmatprep.subr.bf16.mxu0 %v1427
    %1491 = vmatpush1.bf16.msra.mxu0 %v1426
    %1492 = vmatprep.subr.bf16.mxu0 %v1429
    %1493 = vmatpush1.bf16.msra.mxu0 %v1428
    %1494 = vmatprep.mubr.bf16.mxu0 %v1257
    %1495 = vmatmul.mubr.bf16.gmra.mrb[0].mxu0 %v1256
    %v1496 = vpop.f32.mrb[0].mxu0
    %v1497 = vadd.f32 %v1295, %v1496
    %v1498 = vpop.f32.mrb[0].mxu0
    %v1499 = vadd.f32 %v1299, %v1498
    %v1500 = vpop.f32.mrb[0].mxu0
    %v1501 = vpop.f32.mrb[0].mxu0
    %1502 = vdwg.mxu0
    %v1503 = vmax.f32 %v1497, 0.0
    %v1504 = vtanh.pop %v1499
    %v1505 = vpack.c.bf16 %v1503, %v1503
    %v1506 = vpack.c.bf16 %v1504, %v1504
    %v1507 = vld [vmem:[#allocation3] sm:$0xff]
    %v1508 = vld [vmem:[#allocation3 + $0x8] sm:$0xff]
    %v1509 = vld [vmem:[#allocation3 + $0x10] sm:$0xff]
    %v1510 = vld [vmem:[#allocation3 + $0x18] sm:$0xff]
    %v1511 = vld [vmem:[#allocation3 + $0x20] sm:$0xff]
    %v1512 = vld [vmem:[#allocation3 + $0x28] sm:$0xff]
    %v1513 = vld [vmem:[#allocation3 + $0x30] sm:$0xff]
    %v1514 = vld [vmem:[#allocation3 + $0x38] sm:$0xff]
    %v1515 = vld [vmem:[#allocation3 + $0x40] sm:$0xff]
    %v1516 = vld [vmem:[#allocation3 + $0x48] sm:$0xff]
    %v1517 = vld [vmem:[#allocation3 + $0x50] sm:$0xff]
    %v1518 = vld [vmem:[#allocation3 + $0x58] sm:$0xff]
    %v1519 = vld [vmem:[#allocation3 + $0x60] sm:$0xff]
    %v1520 = vld [vmem:[#allocation3 + $0x68] sm:$0xff]
    %v1521 = vld [vmem:[#allocation3 + $0x70] sm:$0xff]
    %v1522 = vld [vmem:[#allocation3 + $0x78] sm:$0xff]
    %v1523 = vld [vmem:[#allocation3 + $0x80] sm:$0xff]
    %v1524 = vld [vmem:[#allocation3 + $0x88] sm:$0xff]
    %v1525 = vld [vmem:[#allocation3 + $0x90] sm:$0xff]
    %v1526 = vld [vmem:[#allocation3 + $0x98] sm:$0xff]
    %v1527 = vld [vmem:[#allocation3 + $0xa0] sm:$0xff]
    %v1528 = vld [vmem:[#allocation3 + $0xa8] sm:$0xff]
    %v1529 = vld [vmem:[#allocation3 + $0xb0] sm:$0xff]
    %v1530 = vld [vmem:[#allocation3 + $0xb8] sm:$0xff]
    %v1531 = vld [vmem:[#allocation3 + $0xc0] sm:$0xff]
    %v1532 = vld [vmem:[#allocation3 + $0xc8] sm:$0xff]
    %v1533 = vld [vmem:[#allocation3 + $0xd0] sm:$0xff]
    %v1534 = vld [vmem:[#allocation3 + $0xd8] sm:$0xff]
    %v1535 = vld [vmem:[#allocation3 + $0xe0] sm:$0xff]
    %v1536 = vld [vmem:[#allocation3 + $0xe8] sm:$0xff]
    %v1537 = vld [vmem:[#allocation3 + $0xf0] sm:$0xff]
    %v1538 = vld [vmem:[#allocation3 + $0xf8] sm:$0xff]
    %v1539 = vld [vmem:[%s11] sm:$0x3]
    %v1541 = vlaneseq
    %v1542 = vshrl.u32 %v1541, 7
    %v1543 = vsub.s32 0, %v1542
    %v1544 = vrot.slane %v1539, %v1543
    %v1545 = vlaneseq
    %v1546 = vshrl.u32 %v1545, 7
    %v1547 = vsub.s32 1, %v1546
    %v1548 = vrot.slane %v1539, %v1547
    %v1583 = vunpack.c.l.b16 %v1507
    %v1584 = vunpack.c.h.b16 %v1507
    %v1585 = vunpack.c.l.b16 %v1508
    %v1586 = vunpack.c.h.b16 %v1508
    %v1587 = vunpack.c.l.b16 %v1509
    %v1588 = vunpack.c.h.b16 %v1509
    %v1589 = vunpack.c.l.b16 %v1510
    %v1590 = vunpack.c.h.b16 %v1510
    %v1591 = vunpack.c.l.b16 %v1511
    %v1592 = vunpack.c.h.b16 %v1511
    %v1593 = vunpack.c.l.b16 %v1512
    %v1594 = vunpack.c.h.b16 %v1512
    %v1595 = vunpack.c.l.b16 %v1513
    %v1596 = vunpack.c.h.b16 %v1513
    %v1597 = vunpack.c.l.b16 %v1514
    %v1598 = vunpack.c.h.b16 %v1514
    %v1599 = vunpack.c.l.b16 %v1515
    %v1600 = vunpack.c.h.b16 %v1515
    %v1601 = vunpack.c.l.b16 %v1516
    %v1602 = vunpack.c.h.b16 %v1516
    %v1603 = vunpack.c.l.b16 %v1517
    %v1604 = vunpack.c.h.b16 %v1517
    %v1605 = vunpack.c.l.b16 %v1518
    %v1606 = vunpack.c.h.b16 %v1518
    %v1607 = vunpack.c.l.b16 %v1519
    %v1608 = vunpack.c.h.b16 %v1519
    %v1609 = vunpack.c.l.b16 %v1520
    %v1610 = vunpack.c.h.b16 %v1520
    %v1611 = vunpack.c.l.b16 %v1521
    %v1612 = vunpack.c.h.b16 %v1521
    %v1613 = vunpack.c.l.b16 %v1522
    %v1614 = vunpack.c.h.b16 %v1522
    %v1615 = vunpack.c.l.b16 %v1523
    %v1616 = vunpack.c.h.b16 %v1523
    %v1617 = vunpack.c.l.b16 %v1524
    %v1618 = vunpack.c.h.b16 %v1524
    %v1619 = vunpack.c.l.b16 %v1525
    %v1620 = vunpack.c.h.b16 %v1525
    %v1621 = vunpack.c.l.b16 %v1526
    %v1622 = vunpack.c.h.b16 %v1526
    %v1623 = vunpack.c.l.b16 %v1527
    %v1624 = vunpack.c.h.b16 %v1527
    %v1625 = vunpack.c.l.b16 %v1528
    %v1626 = vunpack.c.h.b16 %v1528
    %v1627 = vunpack.c.l.b16 %v1529
    %v1628 = vunpack.c.h.b16 %v1529
    %v1629 = vunpack.c.l.b16 %v1530
    %v1630 = vunpack.c.h.b16 %v1530
    %v1631 = vunpack.c.l.b16 %v1531
    %v1632 = vunpack.c.h.b16 %v1531
    %v1633 = vunpack.c.l.b16 %v1532
    %v1634 = vunpack.c.h.b16 %v1532
    %v1635 = vunpack.c.l.b16 %v1533
    %v1636 = vunpack.c.h.b16 %v1533
    %v1637 = vunpack.c.l.b16 %v1534
    %v1638 = vunpack.c.h.b16 %v1534
    %v1639 = vunpack.c.l.b16 %v1535
    %v1640 = vunpack.c.h.b16 %v1535
    %v1641 = vunpack.c.l.b16 %v1536
    %v1642 = vunpack.c.h.b16 %v1536
    %v1643 = vunpack.c.l.b16 %v1537
    %v1644 = vunpack.c.h.b16 %v1537
    %v1645 = vunpack.c.l.b16 %v1538
    %v1646 = vunpack.c.h.b16 %v1538
    %v1647 = vpack.c.b16 %v1585, %v1583
    %v1648 = vpack.c.b16 %v1586, %v1584
    %v1649 = vpack.c.b16 %v1589, %v1587
    %v1650 = vpack.c.b16 %v1590, %v1588
    %v1651 = vpack.c.b16 %v1593, %v1591
    %v1652 = vpack.c.b16 %v1594, %v1592
    %v1653 = vpack.c.b16 %v1597, %v1595
    %v1654 = vpack.c.b16 %v1598, %v1596
    %v1655 = vpack.c.b16 %v1601, %v1599
    %v1656 = vpack.c.b16 %v1602, %v1600
    %v1657 = vpack.c.b16 %v1605, %v1603
    %v1658 = vpack.c.b16 %v1606, %v1604
    %v1659 = vpack.c.b16 %v1609, %v1607
    %v1660 = vpack.c.b16 %v1610, %v1608
    %v1661 = vpack.c.b16 %v1613, %v1611
    %v1662 = vpack.c.b16 %v1614, %v1612
    %v1663 = vpack.c.b16 %v1617, %v1615
    %v1664 = vpack.c.b16 %v1618, %v1616
    %v1665 = vpack.c.b16 %v1621, %v1619
    %v1666 = vpack.c.b16 %v1622, %v1620
    %v1667 = vpack.c.b16 %v1625, %v1623
    %v1668 = vpack.c.b16 %v1626, %v1624
    %v1669 = vpack.c.b16 %v1629, %v1627
    %v1670 = vpack.c.b16 %v1630, %v1628
    %v1671 = vpack.c.b16 %v1633, %v1631
    %v1672 = vpack.c.b16 %v1634, %v1632
    %v1673 = vpack.c.b16 %v1637, %v1635
    %v1674 = vpack.c.b16 %v1638, %v1636
    %v1675 = vpack.c.b16 %v1641, %v1639
    %v1676 = vpack.c.b16 %v1642, %v1640
    %v1677 = vpack.c.b16 %v1645, %v1643
    %v1678 = vpack.c.b16 %v1646, %v1644
    %1711 = vmatprep.subr.bf16.mxu0 %v1648
    %1712 = vmatpush1.bf16.msra.mxu0 %v1647
    %1713 = vmatprep.subr.bf16.mxu0 %v1650
    %1714 = vmatpush1.bf16.msra.mxu0 %v1649
    %1715 = vmatprep.subr.bf16.mxu0 %v1652
    %1716 = vmatpush1.bf16.msra.mxu0 %v1651
    %1717 = vmatprep.subr.bf16.mxu0 %v1654
    %1718 = vmatpush1.bf16.msra.mxu0 %v1653
    %1719 = vmatprep.subr.bf16.mxu0 %v1656
    %1720 = vmatpush1.bf16.msra.mxu0 %v1655
    %1721 = vmatprep.subr.bf16.mxu0 %v1658
    %1722 = vmatpush1.bf16.msra.mxu0 %v1657
    %1723 = vmatprep.subr.bf16.mxu0 %v1660
    %1724 = vmatpush1.bf16.msra.mxu0 %v1659
    %1725 = vmatprep.subr.bf16.mxu0 %v1662
    %1726 = vmatpush1.bf16.msra.mxu0 %v1661
    %1727 = vmatprep.subr.bf16.mxu0 %v1664
    %1728 = vmatpush1.bf16.msra.mxu0 %v1663
    %1729 = vmatprep.subr.bf16.mxu0 %v1666
    %1730 = vmatpush1.bf16.msra.mxu0 %v1665
    %1731 = vmatprep.subr.bf16.mxu0 %v1668
    %1732 = vmatpush1.bf16.msra.mxu0 %v1667
    %1733 = vmatprep.subr.bf16.mxu0 %v1670
    %1734 = vmatpush1.bf16.msra.mxu0 %v1669
    %1735 = vmatprep.subr.bf16.mxu0 %v1672
    %1736 = vmatpush1.bf16.msra.mxu0 %v1671
    %1737 = vmatprep.subr.bf16.mxu0 %v1674
    %1738 = vmatpush1.bf16.msra.mxu0 %v1673
    %1739 = vmatprep.subr.bf16.mxu0 %v1676
    %1740 = vmatpush1.bf16.msra.mxu0 %v1675
    %1741 = vmatprep.subr.bf16.mxu0 %v1678
    %1742 = vmatpush1.bf16.msra.mxu0 %v1677
    %1743 = vmatprep.mubr.bf16.mxu0 %v1506
    %1744 = vmatmul.mubr.bf16.gmra.mrb[0].mxu0 %v1505
    %v1745 = vpop.f32.mrb[0].mxu0
    %v1746 = vadd.f32 %v1544, %v1745
    %v1747 = vpop.f32.mrb[0].mxu0
    %v1748 = vadd.f32 %v1548, %v1747
    %v1749 = vpop.f32.mrb[0].mxu0
    %v1750 = vpop.f32.mrb[0].mxu0
    %1751 = vdwg.mxu0
    %v1752 = vld [vmem:[%s12] sm:$0x1]
    %v1753 = vld [vmem:[#allocation2] sm:$0x1]
    %v1754 = vtanh.pop %v1746
    %v1755 = vld [vmem:[%s5] sm:$0xf]
    %v1756 = vld [vmem:[%s5 + $0x4] sm:$0xf]
    %v1757 = vld [vmem:[%s5 + $0x8] sm:$0xf]
    %v1758 = vld [vmem:[%s5 + $0xc] sm:$0xf]
    %v1759 = vld [vmem:[%s5 + $0x10] sm:$0xf]
    %v1760 = vld [vmem:[%s5 + $0x14] sm:$0xf]
    %v1761 = vld [vmem:[%s5 + $0x18] sm:$0xf]
    %v1762 = vld [vmem:[%s5 + $0x1c] sm:$0xf]
    %v1763 = vld [vmem:[%s5 + $0x20] sm:$0xf]
    %v1764 = vld [vmem:[%s5 + $0x24] sm:$0xf]
    %v1765 = vld [vmem:[%s5 + $0x28] sm:$0xf]
    %v1766 = vld [vmem:[%s5 + $0x2c] sm:$0xf]
    %v1767 = vld [vmem:[%s5 + $0x30] sm:$0xf]
    %v1768 = vld [vmem:[%s5 + $0x34] sm:$0xf]
    %v1769 = vld [vmem:[%s5 + $0x38] sm:$0xf]
    %v1770 = vld [vmem:[%s5 + $0x3c] sm:$0xf]
    %v1771 = vld [vmem:[%s5 + $0x40] sm:$0xf]
    %v1772 = vld [vmem:[%s5 + $0x44] sm:$0xf]
    %v1773 = vld [vmem:[%s5 + $0x48] sm:$0xf]
    %v1774 = vld [vmem:[%s5 + $0x4c] sm:$0xf]
    %v1775 = vld [vmem:[%s5 + $0x50] sm:$0xf]
    %v1776 = vld [vmem:[%s5 + $0x54] sm:$0xf]
    %v1777 = vld [vmem:[%s5 + $0x58] sm:$0xf]
    %v1778 = vld [vmem:[%s5 + $0x5c] sm:$0xf]
    %v1779 = vld [vmem:[%s5 + $0x60] sm:$0xf]
    %v1780 = vld [vmem:[%s5 + $0x64] sm:$0xf]
    %v1781 = vld [vmem:[%s5 + $0x68] sm:$0xf]
    %v1782 = vld [vmem:[%s5 + $0x6c] sm:$0xf]
    %v1783 = vld [vmem:[%s5 + $0x70] sm:$0xf]
    %v1784 = vld [vmem:[%s5 + $0x74] sm:$0xf]
    %v1785 = vld [vmem:[%s5 + $0x78] sm:$0xf]
    %v1786 = vld [vmem:[%s5 + $0x7c] sm:$0xf]
    %v1787 = vld [vmem:[%s5 + $0x80] sm:$0xf]
    %v1788 = vld [vmem:[%s5 + $0x84] sm:$0xf]
    %v1789 = vld [vmem:[%s5 + $0x88] sm:$0xf]
    %v1790 = vld [vmem:[%s5 + $0x8c] sm:$0xf]
    %v1791 = vld [vmem:[%s5 + $0x90] sm:$0xf]
    %v1792 = vld [vmem:[%s5 + $0x94] sm:$0xf]
    %v1793 = vld [vmem:[%s5 + $0x98] sm:$0xf]
    %v1794 = vld [vmem:[%s5 + $0x9c] sm:$0xf]
    %v1795 = vld [vmem:[%s5 + $0xa0] sm:$0xf]
    %v1796 = vld [vmem:[%s5 + $0xa4] sm:$0xf]
    %v1797 = vld [vmem:[%s5 + $0xa8] sm:$0xf]
    %v1798 = vld [vmem:[%s5 + $0xac] sm:$0xf]
    %v1799 = vld [vmem:[%s5 + $0xb0] sm:$0xf]
    %v1800 = vld [vmem:[%s5 + $0xb4] sm:$0xf]
    %v1801 = vld [vmem:[%s5 + $0xb8] sm:$0xf]
    %v1802 = vld [vmem:[%s5 + $0xbc] sm:$0xf]
    %v1803 = vld [vmem:[%s5 + $0xc0] sm:$0xf]
    %v1804 = vld [vmem:[%s5 + $0xc4] sm:$0xf]
    %v1805 = vld [vmem:[%s5 + $0xc8] sm:$0xf]
    %v1806 = vld [vmem:[%s5 + $0xcc] sm:$0xf]
    %v1807 = vld [vmem:[%s5 + $0xd0] sm:$0xf]
    %v1808 = vld [vmem:[%s5 + $0xd4] sm:$0xf]
    %v1809 = vld [vmem:[%s5 + $0xd8] sm:$0xf]
    %v1810 = vld [vmem:[%s5 + $0xdc] sm:$0xf]
    %v1811 = vld [vmem:[%s5 + $0xe0] sm:$0xf]
    %v1812 = vld [vmem:[%s5 + $0xe4] sm:$0xf]
    %v1813 = vld [vmem:[%s5 + $0xe8] sm:$0xf]
    %v1814 = vld [vmem:[%s5 + $0xec] sm:$0xf]
    %v1815 = vld [vmem:[%s5 + $0xf0] sm:$0xf]
    %v1816 = vld [vmem:[%s5 + $0xf4] sm:$0xf]
    %v1817 = vld [vmem:[%s5 + $0xf8] sm:$0xf]
    %v1818 = vld [vmem:[%s5 + $0xfc] sm:$0xf]
    %v1820 = vcombine.high %v1748, %v1748
    %v1822 = vunpack.c.l.s4 1966171168
    %v1823 = vunpack.c.0.s8 %v1822
    %v1824 = vlaneseq
    %v1825 = vshrl.u32 %v1824, 7
    %v1826 = vsub.s32 %v1823, %v1825
    %v1827 = vrot.slane %v1748, %v1826
    %v1829 = vunpack.c.l.s4 1966171168
    %v1830 = vunpack.c.0.s8 %v1829
    %v1831 = vlaneseq
    %v1832 = vshrl.u32 %v1831, 7
    %v1833 = vsub.s32 %v1830, %v1832
    %v1834 = vrot.slane %v1820, %v1833
    %v1835 = vcombine.high %v1827, %v1827
    %v1836 = vcombine.high %v1834, %v1834
    %v1838 = vunpack.c.l.s4 1966171168
    %v1839 = vunpack.c.0.s8 %v1838
    %v1840 = vlaneseq
    %v1841 = vshrl.u32 %v1840, 7
    %v1842 = vsub.s32 %v1839, %v1841
    %v1843 = vrot.slane %v1827, %v1842
    %v1845 = vunpack.c.l.s4 1966171168
    %v1846 = vunpack.c.0.s8 %v1845
    %v1847 = vlaneseq
    %v1848 = vshrl.u32 %v1847, 7
    %v1849 = vsub.s32 %v1846, %v1848
    %v1850 = vrot.slane %v1834, %v1849
    %v1852 = vunpack.c.l.s4 1966171168
    %v1853 = vunpack.c.0.s8 %v1852
    %v1854 = vlaneseq
    %v1855 = vshrl.u32 %v1854, 7
    %v1856 = vsub.s32 %v1853, %v1855
    %v1857 = vrot.slane %v1835, %v1856
    %v1859 = vunpack.c.l.s4 1966171168
    %v1860 = vunpack.c.0.s8 %v1859
    %v1861 = vlaneseq
    %v1862 = vshrl.u32 %v1861, 7
    %v1863 = vsub.s32 %v1860, %v1862
    %v1864 = vrot.slane %v1836, %v1863
    %v1865 = vcombine.high %v1843, %v1843
    %v1866 = vcombine.high %v1850, %v1850
    %v1867 = vcombine.high %v1857, %v1857
    %v1868 = vcombine.high %v1864, %v1864
    %v1869 = vunpack.c.l.bf16 %v1755
    %v1870 = vunpack.c.l.bf16 %v1756
    %v1871 = vunpack.c.l.bf16 %v1757
    %v1872 = vunpack.c.l.bf16 %v1758
    %v1873 = vunpack.c.l.bf16 %v1759
    %v1874 = vunpack.c.l.bf16 %v1760
    %v1875 = vunpack.c.l.bf16 %v1761
    %v1876 = vunpack.c.l.bf16 %v1762
    %v1877 = vunpack.c.l.bf16 %v1763
    %v1878 = vunpack.c.l.bf16 %v1764
    %v1879 = vunpack.c.l.bf16 %v1765
    %v1880 = vunpack.c.l.bf16 %v1766
    %v1881 = vunpack.c.l.bf16 %v1767
    %v1882 = vunpack.c.l.bf16 %v1768
    %v1883 = vunpack.c.l.bf16 %v1769
    %v1884 = vunpack.c.l.bf16 %v1770
    %v1885 = vunpack.c.l.bf16 %v1771
    %v1886 = vunpack.c.l.bf16 %v1772
    %v1887 = vunpack.c.l.bf16 %v1773
    %v1888 = vunpack.c.l.bf16 %v1774
    %v1889 = vunpack.c.l.bf16 %v1775
    %v1890 = vunpack.c.l.bf16 %v1776
    %v1891 = vunpack.c.l.bf16 %v1777
    %v1892 = vunpack.c.l.bf16 %v1778
    %v1893 = vunpack.c.l.bf16 %v1779
    %v1894 = vunpack.c.l.bf16 %v1780
    %v1895 = vunpack.c.l.bf16 %v1781
    %v1896 = vunpack.c.l.bf16 %v1782
    %v1897 = vunpack.c.l.bf16 %v1783
    %v1898 = vunpack.c.l.bf16 %v1784
    %v1899 = vunpack.c.l.bf16 %v1785
    %v1900 = vunpack.c.l.bf16 %v1786
    %v1901 = vunpack.c.l.bf16 %v1787
    %v1902 = vunpack.c.l.bf16 %v1788
    %v1903 = vunpack.c.l.bf16 %v1789
    %v1904 = vunpack.c.l.bf16 %v1790
    %v1905 = vunpack.c.l.bf16 %v1791
    %v1906 = vunpack.c.l.bf16 %v1792
    %v1907 = vunpack.c.l.bf16 %v1793
    %v1908 = vunpack.c.l.bf16 %v1794
    %v1909 = vunpack.c.l.bf16 %v1795
    %v1910 = vunpack.c.l.bf16 %v1796
    %v1911 = vunpack.c.l.bf16 %v1797
    %v1912 = vunpack.c.l.bf16 %v1798
    %v1913 = vunpack.c.l.bf16 %v1799
    %v1914 = vunpack.c.l.bf16 %v1800
    %v1915 = vunpack.c.l.bf16 %v1801
    %v1916 = vunpack.c.l.bf16 %v1802
    %v1917 = vunpack.c.l.bf16 %v1803
    %v1918 = vunpack.c.l.bf16 %v1804
    %v1919 = vunpack.c.l.bf16 %v1805
    %v1920 = vunpack.c.l.bf16 %v1806
    %v1921 = vunpack.c.l.bf16 %v1807
    %v1922 = vunpack.c.l.bf16 %v1808
    %v1923 = vunpack.c.l.bf16 %v1809
    %v1924 = vunpack.c.l.bf16 %v1810
    %v1925 = vunpack.c.l.bf16 %v1811
    %v1926 = vunpack.c.l.bf16 %v1812
    %v1927 = vunpack.c.l.bf16 %v1813
    %v1928 = vunpack.c.l.bf16 %v1814
    %v1929 = vunpack.c.l.bf16 %v1815
    %v1930 = vunpack.c.l.bf16 %v1816
    %v1931 = vunpack.c.l.bf16 %v1817
    %v1932 = vunpack.c.l.bf16 %v1818
    %v1933 = vlaneseq
    %v1934 = vshrl.u32 %v1933, 7
    %v1935 = vsub.s32 0, %v1934
    %v1936 = vrot.slane %v1843, %v1935
    %v1937 = vlaneseq
    %v1938 = vshrl.u32 %v1937, 7
    %v1939 = vsub.s32 0, %v1938
    %v1940 = vrot.slane %v1857, %v1939
    %v1941 = vlaneseq
    %v1942 = vshrl.u32 %v1941, 7
    %v1943 = vsub.s32 0, %v1942
    %v1944 = vrot.slane %v1865, %v1943
    %v1945 = vlaneseq
    %v1946 = vshrl.u32 %v1945, 7
    %v1947 = vsub.s32 0, %v1946
    %v1948 = vrot.slane %v1867, %v1947
    %v1949 = vlaneseq
    %v1950 = vshrl.u32 %v1949, 7
    %v1951 = vsub.s32 0, %v1950
    %v1952 = vrot.slane %v1850, %v1951
    %v1953 = vlaneseq
    %v1954 = vshrl.u32 %v1953, 7
    %v1955 = vsub.s32 0, %v1954
    %v1956 = vrot.slane %v1864, %v1955
    %v1957 = vlaneseq
    %v1958 = vshrl.u32 %v1957, 7
    %v1959 = vsub.s32 0, %v1958
    %v1960 = vrot.slane %v1866, %v1959
    %v1961 = vlaneseq
    %v1962 = vshrl.u32 %v1961, 7
    %v1963 = vsub.s32 0, %v1962
    %v1964 = vrot.slane %v1868, %v1963
    %v1973 = vadd.f32 %v1869, %v1936
    %v1974 = vadd.f32 %v1870, %v1936
    %v1975 = vadd.f32 %v1871, %v1936
    %v1976 = vadd.f32 %v1872, %v1936
    %v1977 = vadd.f32 %v1873, %v1936
    %v1978 = vadd.f32 %v1874, %v1936
    %v1979 = vadd.f32 %v1875, %v1936
    %v1980 = vadd.f32 %v1876, %v1936
    %v1981 = vadd.f32 %v1877, %v1940
    %v1982 = vadd.f32 %v1878, %v1940
    %v1983 = vadd.f32 %v1879, %v1940
    %v1984 = vadd.f32 %v1880, %v1940
    %v1985 = vadd.f32 %v1881, %v1940
    %v1986 = vadd.f32 %v1882, %v1940
    %v1987 = vadd.f32 %v1883, %v1940
    %v1988 = vadd.f32 %v1884, %v1940
    %v1989 = vadd.f32 %v1885, %v1944
    %v1990 = vadd.f32 %v1886, %v1944
    %v1991 = vadd.f32 %v1887, %v1944
    %v1992 = vadd.f32 %v1888, %v1944
    %v1993 = vadd.f32 %v1889, %v1944
    %v1994 = vadd.f32 %v1890, %v1944
    %v1995 = vadd.f32 %v1891, %v1944
    %v1996 = vadd.f32 %v1892, %v1944
    %v1997 = vadd.f32 %v1893, %v1948
    %v1998 = vadd.f32 %v1894, %v1948
    %v1999 = vadd.f32 %v1895, %v1948
    %v2000 = vadd.f32 %v1896, %v1948
    %v2001 = vadd.f32 %v1897, %v1948
    %v2002 = vadd.f32 %v1898, %v1948
    %v2003 = vadd.f32 %v1899, %v1948
    %v2004 = vadd.f32 %v1900, %v1948
    %v2005 = vadd.f32 %v1901, %v1952
    %v2006 = vadd.f32 %v1902, %v1952
    %v2007 = vadd.f32 %v1903, %v1952
    %v2008 = vadd.f32 %v1904, %v1952
    %v2009 = vadd.f32 %v1905, %v1952
    %v2010 = vadd.f32 %v1906, %v1952
    %v2011 = vadd.f32 %v1907, %v1952
    %v2012 = vadd.f32 %v1908, %v1952
    %v2013 = vadd.f32 %v1909, %v1956
    %v2014 = vadd.f32 %v1910, %v1956
    %v2015 = vadd.f32 %v1911, %v1956
    %v2016 = vadd.f32 %v1912, %v1956
    %v2017 = vadd.f32 %v1913, %v1956
    %v2018 = vadd.f32 %v1914, %v1956
    %v2019 = vadd.f32 %v1915, %v1956
    %v2020 = vadd.f32 %v1916, %v1956
    %v2021 = vadd.f32 %v1917, %v1960
    %v2022 = vadd.f32 %v1918, %v1960
    %v2023 = vadd.f32 %v1919, %v1960
    %v2024 = vadd.f32 %v1920, %v1960
    %v2025 = vadd.f32 %v1921, %v1960
    %v2026 = vadd.f32 %v1922, %v1960
    %v2027 = vadd.f32 %v1923, %v1960
    %v2028 = vadd.f32 %v1924, %v1960
    %v2029 = vadd.f32 %v1925, %v1964
    %v2030 = vadd.f32 %v1926, %v1964
    %v2031 = vadd.f32 %v1927, %v1964
    %v2032 = vadd.f32 %v1928, %v1964
    %v2033 = vadd.f32 %v1929, %v1964
    %v2034 = vadd.f32 %v1930, %v1964
    %v2035 = vadd.f32 %v1931, %v1964
    %v2036 = vadd.f32 %v1932, %v1964
    %v2037 = vtanh.pop %v1973
    %v2038 = vtanh.pop %v1974
    %v2039 = vtanh.pop %v1975
    %v2040 = vtanh.pop %v1976
    %v2041 = vtanh.pop %v1977
    %v2042 = vtanh.pop %v1978
    %v2043 = vtanh.pop %v1979
    %v2044 = vtanh.pop %v1980
    %v2045 = vtanh.pop %v1981
    %v2046 = vtanh.pop %v1982
    %v2047 = vtanh.pop %v1983
    %v2048 = vtanh.pop %v1984
    %v2049 = vtanh.pop %v1985
    %v2050 = vtanh.pop %v1986
    %v2051 = vtanh.pop %v1987
    %v2052 = vtanh.pop %v1988
    %v2053 = vtanh.pop %v1989
    %v2054 = vtanh.pop %v1990
    %v2055 = vtanh.pop %v1991
    %v2056 = vtanh.pop %v1992
    %v2057 = vtanh.pop %v1993
    %v2058 = vtanh.pop %v1994
    %v2059 = vtanh.pop %v1995
    %v2060 = vtanh.pop %v1996
    %v2061 = vtanh.pop %v1997
    %v2062 = vtanh.pop %v1998
    %v2063 = vtanh.pop %v1999
    %v2064 = vtanh.pop %v2000
    %v2065 = vtanh.pop %v2001
    %v2066 = vtanh.pop %v2002
    %v2067 = vtanh.pop %v2003
    %v2068 = vtanh.pop %v2004
    %v2069 = vtanh.pop %v2005
    %v2070 = vtanh.pop %v2006
    %v2071 = vtanh.pop %v2007
    %v2072 = vtanh.pop %v2008
    %v2073 = vtanh.pop %v2009
    %v2074 = vtanh.pop %v2010
    %v2075 = vtanh.pop %v2011
    %v2076 = vtanh.pop %v2012
    %v2077 = vtanh.pop %v2013
    %v2078 = vtanh.pop %v2014
    %v2079 = vtanh.pop %v2015
    %v2080 = vtanh.pop %v2016
    %v2081 = vtanh.pop %v2017
    %v2082 = vtanh.pop %v2018
    %v2083 = vtanh.pop %v2019
    %v2084 = vtanh.pop %v2020
    %v2085 = vtanh.pop %v2021
    %v2086 = vtanh.pop %v2022
    %v2087 = vtanh.pop %v2023
    %v2088 = vtanh.pop %v2024
    %v2089 = vtanh.pop %v2025
    %v2090 = vtanh.pop %v2026
    %v2091 = vtanh.pop %v2027
    %v2092 = vtanh.pop %v2028
    %v2093 = vtanh.pop %v2029
    %v2094 = vtanh.pop %v2030
    %v2095 = vtanh.pop %v2031
    %v2096 = vtanh.pop %v2032
    %v2097 = vtanh.pop %v2033
    %v2098 = vtanh.pop %v2034
    %v2099 = vtanh.pop %v2035
    %v2100 = vtanh.pop %v2036
    %v2102 = vlaneseq
    %v2103 = vshrl.u32 %v2102, 7
    %v2104 = vsub.s32 0, %v2103
    %v2105 = vrot.slane %v1752, %v2104
    %v2107 = vmul.f32 %v1754, %v2105
    %2108 = vadd.xlane.f32.xlu0 %v2107
    %v2109 = vpop.xlane.xlu0 %2108
    %v2111 = vlaneseq
    %v2112 = vshrl.u32 %v2111, 7
    %v2113 = vsub.s32 0, %v2112
    %v2114 = vrot.slane %v1753, %v2113
    %v2116 = vadd.f32 %v2109, %v2114
    %v2117 = vmul.f32 %v2037, %v2105
    %v2118 = vmul.f32 %v2038, %v2105
    %v2119 = vmul.f32 %v2039, %v2105
    %v2120 = vmul.f32 %v2040, %v2105
    %v2121 = vmul.f32 %v2041, %v2105
    %v2122 = vmul.f32 %v2042, %v2105
    %v2123 = vmul.f32 %v2043, %v2105
    %v2124 = vmul.f32 %v2044, %v2105
    %v2125 = vmul.f32 %v2045, %v2105
    %v2126 = vmul.f32 %v2046, %v2105
    %v2127 = vmul.f32 %v2047, %v2105
    %v2128 = vmul.f32 %v2048, %v2105
    %v2129 = vmul.f32 %v2049, %v2105
    %v2130 = vmul.f32 %v2050, %v2105
    %v2131 = vmul.f32 %v2051, %v2105
    %v2132 = vmul.f32 %v2052, %v2105
    %v2133 = vmul.f32 %v2053, %v2105
    %v2134 = vmul.f32 %v2054, %v2105
    %v2135 = vmul.f32 %v2055, %v2105
    %v2136 = vmul.f32 %v2056, %v2105
    %v2137 = vmul.f32 %v2057, %v2105
    %v2138 = vmul.f32 %v2058, %v2105
    %v2139 = vmul.f32 %v2059, %v2105
    %v2140 = vmul.f32 %v2060, %v2105
    %v2141 = vmul.f32 %v2061, %v2105
    %v2142 = vmul.f32 %v2062, %v2105
    %v2143 = vmul.f32 %v2063, %v2105
    %v2144 = vmul.f32 %v2064, %v2105
    %v2145 = vmul.f32 %v2065, %v2105
    %v2146 = vmul.f32 %v2066, %v2105
    %v2147 = vmul.f32 %v2067, %v2105
    %v2148 = vmul.f32 %v2068, %v2105
    %v2149 = vmul.f32 %v2069, %v2105
    %v2150 = vmul.f32 %v2070, %v2105
    %v2151 = vmul.f32 %v2071, %v2105
    %v2152 = vmul.f32 %v2072, %v2105
    %v2153 = vmul.f32 %v2073, %v2105
    %v2154 = vmul.f32 %v2074, %v2105
    %v2155 = vmul.f32 %v2075, %v2105
    %v2156 = vmul.f32 %v2076, %v2105
    %v2157 = vmul.f32 %v2077, %v2105
    %v2158 = vmul.f32 %v2078, %v2105
    %v2159 = vmul.f32 %v2079, %v2105
    %v2160 = vmul.f32 %v2080, %v2105
    %v2161 = vmul.f32 %v2081, %v2105
    %v2162 = vmul.f32 %v2082, %v2105
    %v2163 = vmul.f32 %v2083, %v2105
    %v2164 = vmul.f32 %v2084, %v2105
    %v2165 = vmul.f32 %v2085, %v2105
    %v2166 = vmul.f32 %v2086, %v2105
    %v2167 = vmul.f32 %v2087, %v2105
    %v2168 = vmul.f32 %v2088, %v2105
    %v2169 = vmul.f32 %v2089, %v2105
    %v2170 = vmul.f32 %v2090, %v2105
    %v2171 = vmul.f32 %v2091, %v2105
    %v2172 = vmul.f32 %v2092, %v2105
    %v2173 = vmul.f32 %v2093, %v2105
    %v2174 = vmul.f32 %v2094, %v2105
    %v2175 = vmul.f32 %v2095, %v2105
    %v2176 = vmul.f32 %v2096, %v2105
    %v2177 = vmul.f32 %v2097, %v2105
    %v2178 = vmul.f32 %v2098, %v2105
    %v2179 = vmul.f32 %v2099, %v2105
    %v2180 = vmul.f32 %v2100, %v2105
    %2181 = vadd.xlane.f32.xlu0 %v2117
    %v2182 = vpop.xlane.xlu0 %2181
    %2183 = vadd.xlane.f32.xlu0 %v2118
    %v2184 = vpop.xlane.xlu0 %2183
    %2185 = vadd.xlane.f32.xlu0 %v2119
    %v2186 = vpop.xlane.xlu0 %2185
    %2187 = vadd.xlane.f32.xlu0 %v2120
    %v2188 = vpop.xlane.xlu0 %2187
    %2189 = vadd.xlane.f32.xlu0 %v2121
    %v2190 = vpop.xlane.xlu0 %2189
    %2191 = vadd.xlane.f32.xlu0 %v2122
    %v2192 = vpop.xlane.xlu0 %2191
    %2193 = vadd.xlane.f32.xlu0 %v2123
    %v2194 = vpop.xlane.xlu0 %2193
    %2195 = vadd.xlane.f32.xlu0 %v2124
    %v2196 = vpop.xlane.xlu0 %2195
    %2197 = vadd.xlane.f32.xlu0 %v2125
    %v2198 = vpop.xlane.xlu0 %2197
    %2199 = vadd.xlane.f32.xlu0 %v2126
    %v2200 = vpop.xlane.xlu0 %2199
    %2201 = vadd.xlane.f32.xlu0 %v2127
    %v2202 = vpop.xlane.xlu0 %2201
    %2203 = vadd.xlane.f32.xlu0 %v2128
    %v2204 = vpop.xlane.xlu0 %2203
    %2205 = vadd.xlane.f32.xlu0 %v2129
    %v2206 = vpop.xlane.xlu0 %2205
    %2207 = vadd.xlane.f32.xlu0 %v2130
    %v2208 = vpop.xlane.xlu0 %2207
    %2209 = vadd.xlane.f32.xlu0 %v2131
    %v2210 = vpop.xlane.xlu0 %2209
    %2211 = vadd.xlane.f32.xlu0 %v2132
    %v2212 = vpop.xlane.xlu0 %2211
    %2213 = vadd.xlane.f32.xlu0 %v2133
    %v2214 = vpop.xlane.xlu0 %2213
    %2215 = vadd.xlane.f32.xlu0 %v2134
    %v2216 = vpop.xlane.xlu0 %2215
    %2217 = vadd.xlane.f32.xlu0 %v2135
    %v2218 = vpop.xlane.xlu0 %2217
    %2219 = vadd.xlane.f32.xlu0 %v2136
    %v2220 = vpop.xlane.xlu0 %2219
    %2221 = vadd.xlane.f32.xlu0 %v2137
    %v2222 = vpop.xlane.xlu0 %2221
    %2223 = vadd.xlane.f32.xlu0 %v2138
    %v2224 = vpop.xlane.xlu0 %2223
    %2225 = vadd.xlane.f32.xlu0 %v2139
    %v2226 = vpop.xlane.xlu0 %2225
    %2227 = vadd.xlane.f32.xlu0 %v2140
    %v2228 = vpop.xlane.xlu0 %2227
    %2229 = vadd.xlane.f32.xlu0 %v2141
    %v2230 = vpop.xlane.xlu0 %2229
    %2231 = vadd.xlane.f32.xlu0 %v2142
    %v2232 = vpop.xlane.xlu0 %2231
    %2233 = vadd.xlane.f32.xlu0 %v2143
    %v2234 = vpop.xlane.xlu0 %2233
    %2235 = vadd.xlane.f32.xlu0 %v2144
    %v2236 = vpop.xlane.xlu0 %2235
    %2237 = vadd.xlane.f32.xlu0 %v2145
    %v2238 = vpop.xlane.xlu0 %2237
    %2239 = vadd.xlane.f32.xlu0 %v2146
    %v2240 = vpop.xlane.xlu0 %2239
    %2241 = vadd.xlane.f32.xlu0 %v2147
    %v2242 = vpop.xlane.xlu0 %2241
    %2243 = vadd.xlane.f32.xlu0 %v2148
    %v2244 = vpop.xlane.xlu0 %2243
    %2245 = vadd.xlane.f32.xlu0 %v2149
    %v2246 = vpop.xlane.xlu0 %2245
    %2247 = vadd.xlane.f32.xlu0 %v2150
    %v2248 = vpop.xlane.xlu0 %2247
    %2249 = vadd.xlane.f32.xlu0 %v2151
    %v2250 = vpop.xlane.xlu0 %2249
    %2251 = vadd.xlane.f32.xlu0 %v2152
    %v2252 = vpop.xlane.xlu0 %2251
    %2253 = vadd.xlane.f32.xlu0 %v2153
    %v2254 = vpop.xlane.xlu0 %2253
    %2255 = vadd.xlane.f32.xlu0 %v2154
    %v2256 = vpop.xlane.xlu0 %2255
    %2257 = vadd.xlane.f32.xlu0 %v2155
    %v2258 = vpop.xlane.xlu0 %2257
    %2259 = vadd.xlane.f32.xlu0 %v2156
    %v2260 = vpop.xlane.xlu0 %2259
    %2261 = vadd.xlane.f32.xlu0 %v2157
    %v2262 = vpop.xlane.xlu0 %2261
    %2263 = vadd.xlane.f32.xlu0 %v2158
    %v2264 = vpop.xlane.xlu0 %2263
    %2265 = vadd.xlane.f32.xlu0 %v2159
    %v2266 = vpop.xlane.xlu0 %2265
    %2267 = vadd.xlane.f32.xlu0 %v2160
    %v2268 = vpop.xlane.xlu0 %2267
    %2269 = vadd.xlane.f32.xlu0 %v2161
    %v2270 = vpop.xlane.xlu0 %2269
    %2271 = vadd.xlane.f32.xlu0 %v2162
    %v2272 = vpop.xlane.xlu0 %2271
    %2273 = vadd.xlane.f32.xlu0 %v2163
    %v2274 = vpop.xlane.xlu0 %2273
    %2275 = vadd.xlane.f32.xlu0 %v2164
    %v2276 = vpop.xlane.xlu0 %2275
    %2277 = vadd.xlane.f32.xlu0 %v2165
    %v2278 = vpop.xlane.xlu0 %2277
    %2279 = vadd.xlane.f32.xlu0 %v2166
    %v2280 = vpop.xlane.xlu0 %2279
    %2281 = vadd.xlane.f32.xlu0 %v2167
    %v2282 = vpop.xlane.xlu0 %2281
    %2283 = vadd.xlane.f32.xlu0 %v2168
    %v2284 = vpop.xlane.xlu0 %2283
    %2285 = vadd.xlane.f32.xlu0 %v2169
    %v2286 = vpop.xlane.xlu0 %2285
    %2287 = vadd.xlane.f32.xlu0 %v2170
    %v2288 = vpop.xlane.xlu0 %2287
    %2289 = vadd.xlane.f32.xlu0 %v2171
    %v2290 = vpop.xlane.xlu0 %2289
    %2291 = vadd.xlane.f32.xlu0 %v2172
    %v2292 = vpop.xlane.xlu0 %2291
    %2293 = vadd.xlane.f32.xlu0 %v2173
    %v2294 = vpop.xlane.xlu0 %2293
    %2295 = vadd.xlane.f32.xlu0 %v2174
    %v2296 = vpop.xlane.xlu0 %2295
    %2297 = vadd.xlane.f32.xlu0 %v2175
    %v2298 = vpop.xlane.xlu0 %2297
    %2299 = vadd.xlane.f32.xlu0 %v2176
    %v2300 = vpop.xlane.xlu0 %2299
    %2301 = vadd.xlane.f32.xlu0 %v2177
    %v2302 = vpop.xlane.xlu0 %2301
    %2303 = vadd.xlane.f32.xlu0 %v2178
    %v2304 = vpop.xlane.xlu0 %2303
    %2305 = vadd.xlane.f32.xlu0 %v2179
    %v2306 = vpop.xlane.xlu0 %2305
    %2307 = vadd.xlane.f32.xlu0 %v2180
    %v2308 = vpop.xlane.xlu0 %2307
    %2309 = vset.pattern.permute.xlu0 0
    %2310 = vperm.xlu0 %2309, %v2114
    %v2311 = vpop.permute.xlu0 %2310
    %v2313 = vadd.f32 %v2182, %v2311
    %v2314 = vadd.f32 %v2184, %v2311
    %v2315 = vadd.f32 %v2186, %v2311
    %v2316 = vadd.f32 %v2188, %v2311
    %v2317 = vadd.f32 %v2190, %v2311
    %v2318 = vadd.f32 %v2192, %v2311
    %v2319 = vadd.f32 %v2194, %v2311
    %v2320 = vadd.f32 %v2196, %v2311
    %v2321 = vadd.f32 %v2198, %v2311
    %v2322 = vadd.f32 %v2200, %v2311
    %v2323 = vadd.f32 %v2202, %v2311
    %v2324 = vadd.f32 %v2204, %v2311
    %v2325 = vadd.f32 %v2206, %v2311
    %v2326 = vadd.f32 %v2208, %v2311
    %v2327 = vadd.f32 %v2210, %v2311
    %v2328 = vadd.f32 %v2212, %v2311
    %v2329 = vadd.f32 %v2214, %v2311
    %v2330 = vadd.f32 %v2216, %v2311
    %v2331 = vadd.f32 %v2218, %v2311
    %v2332 = vadd.f32 %v2220, %v2311
    %v2333 = vadd.f32 %v2222, %v2311
    %v2334 = vadd.f32 %v2224, %v2311
    %v2335 = vadd.f32 %v2226, %v2311
    %v2336 = vadd.f32 %v2228, %v2311
    %v2337 = vadd.f32 %v2230, %v2311
    %v2338 = vadd.f32 %v2232, %v2311
    %v2339 = vadd.f32 %v2234, %v2311
    %v2340 = vadd.f32 %v2236, %v2311
    %v2341 = vadd.f32 %v2238, %v2311
    %v2342 = vadd.f32 %v2240, %v2311
    %v2343 = vadd.f32 %v2242, %v2311
    %v2344 = vadd.f32 %v2244, %v2311
    %v2345 = vadd.f32 %v2246, %v2311
    %v2346 = vadd.f32 %v2248, %v2311
    %v2347 = vadd.f32 %v2250, %v2311
    %v2348 = vadd.f32 %v2252, %v2311
    %v2349 = vadd.f32 %v2254, %v2311
    %v2350 = vadd.f32 %v2256, %v2311
    %v2351 = vadd.f32 %v2258, %v2311
    %v2352 = vadd.f32 %v2260, %v2311
    %v2353 = vadd.f32 %v2262, %v2311
    %v2354 = vadd.f32 %v2264, %v2311
    %v2355 = vadd.f32 %v2266, %v2311
    %v2356 = vadd.f32 %v2268, %v2311
    %v2357 = vadd.f32 %v2270, %v2311
    %v2358 = vadd.f32 %v2272, %v2311
    %v2359 = vadd.f32 %v2274, %v2311
    %v2360 = vadd.f32 %v2276, %v2311
    %v2361 = vadd.f32 %v2278, %v2311
    %v2362 = vadd.f32 %v2280, %v2311
    %v2363 = vadd.f32 %v2282, %v2311
    %v2364 = vadd.f32 %v2284, %v2311
    %v2365 = vadd.f32 %v2286, %v2311
    %v2366 = vadd.f32 %v2288, %v2311
    %v2367 = vadd.f32 %v2290, %v2311
    %v2368 = vadd.f32 %v2292, %v2311
    %v2369 = vadd.f32 %v2294, %v2311
    %v2370 = vadd.f32 %v2296, %v2311
    %v2371 = vadd.f32 %v2298, %v2311
    %v2372 = vadd.f32 %v2300, %v2311
    %v2373 = vadd.f32 %v2302, %v2311
    %v2374 = vadd.f32 %v2304, %v2311
    %v2375 = vadd.f32 %v2306, %v2311
    %v2376 = vadd.f32 %v2308, %v2311
    %v2441 = vlaneseq
    %v2442 = vand.u32 %v2441, 127
    %v2443 = vlaneseq
    %v2444 = vshrl.u32 %v2443, 7
    %v2445 = vsub.s32 %v2442, %v2444
    %v2446 = vrot.slane %v2313, %v2445
    %v2447 = vadd.s32 %v2442, 4294967288
    %v2448 = vlaneseq
    %v2449 = vshrl.u32 %v2448, 7
    %v2450 = vsub.s32 %v2447, %v2449
    %v2451 = vrot.slane %v2314, %v2450
    %vm2452 = vcmask 130112
    %v2453 = vsel %vm2452, %v2451, %v2446
    %v2454 = vadd.s32 %v2442, 4294967280
    %v2455 = vlaneseq
    %v2456 = vshrl.u32 %v2455, 7
    %v2457 = vsub.s32 %v2454, %v2456
    %v2458 = vrot.slane %v2315, %v2457
    %vm2459 = vcmask 195712
    %v2460 = vsel %vm2459, %v2458, %v2453
    %v2461 = vadd.s32 %v2442, 4294967272
    %v2462 = vlaneseq
    %v2463 = vshrl.u32 %v2462, 7
    %v2464 = vsub.s32 %v2461, %v2463
    %v2465 = vrot.slane %v2316, %v2464
    %vm2466 = vcmask 261312
    %v2467 = vsel %vm2466, %v2465, %v2460
    %v2468 = vadd.s32 %v2442, 4294967264
    %v2469 = vlaneseq
    %v2470 = vshrl.u32 %v2469, 7
    %v2471 = vsub.s32 %v2468, %v2470
    %v2472 = vrot.slane %v2317, %v2471
    %vm2473 = vcmask 326912
    %v2474 = vsel %vm2473, %v2472, %v2467
    %v2475 = vadd.s32 %v2442, 4294967256
    %v2476 = vlaneseq
    %v2477 = vshrl.u32 %v2476, 7
    %v2478 = vsub.s32 %v2475, %v2477
    %v2479 = vrot.slane %v2318, %v2478
    %vm2480 = vcmask 392512
    %v2481 = vsel %vm2480, %v2479, %v2474
    %v2482 = vadd.s32 %v2442, 4294967248
    %v2483 = vlaneseq
    %v2484 = vshrl.u32 %v2483, 7
    %v2485 = vsub.s32 %v2482, %v2484
    %v2486 = vrot.slane %v2319, %v2485
    %vm2487 = vcmask 458112
    %v2488 = vsel %vm2487, %v2486, %v2481
    %v2489 = vadd.s32 %v2442, 4294967240
    %v2490 = vlaneseq
    %v2491 = vshrl.u32 %v2490, 7
    %v2492 = vsub.s32 %v2489, %v2491
    %v2493 = vrot.slane %v2320, %v2492
    %vm2494 = vcmask 523712
    %v2495 = vsel %vm2494, %v2493, %v2488
    %v2496 = vlaneseq
    %v2497 = vshrl.u32 %v2496, 7
    %v2498 = vsub.s32 %v2442, %v2497
    %v2499 = vrot.slane %v2321, %v2498
    %v2500 = vlaneseq
    %v2501 = vshrl.u32 %v2500, 7
    %v2502 = vsub.s32 %v2447, %v2501
    %v2503 = vrot.slane %v2322, %v2502
    %v2504 = vsel %vm2452, %v2503, %v2499
    %v2505 = vlaneseq
    %v2506 = vshrl.u32 %v2505, 7
    %v2507 = vsub.s32 %v2454, %v2506
    %v2508 = vrot.slane %v2323, %v2507
    %v2509 = vsel %vm2459, %v2508, %v2504
    %v2510 = vlaneseq
    %v2511 = vshrl.u32 %v2510, 7
    %v2512 = vsub.s32 %v2461, %v2511
    %v2513 = vrot.slane %v2324, %v2512
    %v2514 = vsel %vm2466, %v2513, %v2509
    %v2515 = vlaneseq
    %v2516 = vshrl.u32 %v2515, 7
    %v2517 = vsub.s32 %v2468, %v2516
    %v2518 = vrot.slane %v2325, %v2517
    %v2519 = vsel %vm2473, %v2518, %v2514
    %v2520 = vlaneseq
    %v2521 = vshrl.u32 %v2520, 7
    %v2522 = vsub.s32 %v2475, %v2521
    %v2523 = vrot.slane %v2326, %v2522
    %v2524 = vsel %vm2480, %v2523, %v2519
    %v2525 = vlaneseq
    %v2526 = vshrl.u32 %v2525, 7
    %v2527 = vsub.s32 %v2482, %v2526
    %v2528 = vrot.slane %v2327, %v2527
    %v2529 = vsel %vm2487, %v2528, %v2524
    %v2530 = vlaneseq
    %v2531 = vshrl.u32 %v2530, 7
    %v2532 = vsub.s32 %v2489, %v2531
    %v2533 = vrot.slane %v2328, %v2532
    %v2534 = vsel %vm2494, %v2533, %v2529
    %v2535 = vlaneseq
    %v2536 = vshrl.u32 %v2535, 7
    %v2537 = vsub.s32 %v2442, %v2536
    %v2538 = vrot.slane %v2329, %v2537
    %v2539 = vlaneseq
    %v2540 = vshrl.u32 %v2539, 7
    %v2541 = vsub.s32 %v2447, %v2540
    %v2542 = vrot.slane %v2330, %v2541
    %v2543 = vsel %vm2452, %v2542, %v2538
    %v2544 = vlaneseq
    %v2545 = vshrl.u32 %v2544, 7
    %v2546 = vsub.s32 %v2454, %v2545
    %v2547 = vrot.slane %v2331, %v2546
    %v2548 = vsel %vm2459, %v2547, %v2543
    %v2549 = vlaneseq
    %v2550 = vshrl.u32 %v2549, 7
    %v2551 = vsub.s32 %v2461, %v2550
    %v2552 = vrot.slane %v2332, %v2551
    %v2553 = vsel %vm2466, %v2552, %v2548
    %v2554 = vlaneseq
    %v2555 = vshrl.u32 %v2554, 7
    %v2556 = vsub.s32 %v2468, %v2555
    %v2557 = vrot.slane %v2333, %v2556
    %v2558 = vsel %vm2473, %v2557, %v2553
    %v2559 = vlaneseq
    %v2560 = vshrl.u32 %v2559, 7
    %v2561 = vsub.s32 %v2475, %v2560
    %v2562 = vrot.slane %v2334, %v2561
    %v2563 = vsel %vm2480, %v2562, %v2558
    %v2564 = vlaneseq
    %v2565 = vshrl.u32 %v2564, 7
    %v2566 = vsub.s32 %v2482, %v2565
    %v2567 = vrot.slane %v2335, %v2566
    %v2568 = vsel %vm2487, %v2567, %v2563
    %v2569 = vlaneseq
    %v2570 = vshrl.u32 %v2569, 7
    %v2571 = vsub.s32 %v2489, %v2570
    %v2572 = vrot.slane %v2336, %v2571
    %v2573 = vsel %vm2494, %v2572, %v2568
    %v2574 = vlaneseq
    %v2575 = vshrl.u32 %v2574, 7
    %v2576 = vsub.s32 %v2442, %v2575
    %v2577 = vrot.slane %v2337, %v2576
    %v2578 = vlaneseq
    %v2579 = vshrl.u32 %v2578, 7
    %v2580 = vsub.s32 %v2447, %v2579
    %v2581 = vrot.slane %v2338, %v2580
    %v2582 = vsel %vm2452, %v2581, %v2577
    %v2583 = vlaneseq
    %v2584 = vshrl.u32 %v2583, 7
    %v2585 = vsub.s32 %v2454, %v2584
    %v2586 = vrot.slane %v2339, %v2585
    %v2587 = vsel %vm2459, %v2586, %v2582
    %v2588 = vlaneseq
    %v2589 = vshrl.u32 %v2588, 7
    %v2590 = vsub.s32 %v2461, %v2589
    %v2591 = vrot.slane %v2340, %v2590
    %v2592 = vsel %vm2466, %v2591, %v2587
    %v2593 = vlaneseq
    %v2594 = vshrl.u32 %v2593, 7
    %v2595 = vsub.s32 %v2468, %v2594
    %v2596 = vrot.slane %v2341, %v2595
    %v2597 = vsel %vm2473, %v2596, %v2592
    %v2598 = vlaneseq
    %v2599 = vshrl.u32 %v2598, 7
    %v2600 = vsub.s32 %v2475, %v2599
    %v2601 = vrot.slane %v2342, %v2600
    %v2602 = vsel %vm2480, %v2601, %v2597
    %v2603 = vlaneseq
    %v2604 = vshrl.u32 %v2603, 7
    %v2605 = vsub.s32 %v2482, %v2604
    %v2606 = vrot.slane %v2343, %v2605
    %v2607 = vsel %vm2487, %v2606, %v2602
    %v2608 = vlaneseq
    %v2609 = vshrl.u32 %v2608, 7
    %v2610 = vsub.s32 %v2489, %v2609
    %v2611 = vrot.slane %v2344, %v2610
    %v2612 = vsel %vm2494, %v2611, %v2607
    %v2613 = vlaneseq
    %v2614 = vshrl.u32 %v2613, 7
    %v2615 = vsub.s32 %v2442, %v2614
    %v2616 = vrot.slane %v2345, %v2615
    %v2617 = vlaneseq
    %v2618 = vshrl.u32 %v2617, 7
    %v2619 = vsub.s32 %v2447, %v2618
    %v2620 = vrot.slane %v2346, %v2619
    %v2621 = vsel %vm2452, %v2620, %v2616
    %v2622 = vlaneseq
    %v2623 = vshrl.u32 %v2622, 7
    %v2624 = vsub.s32 %v2454, %v2623
    %v2625 = vrot.slane %v2347, %v2624
    %v2626 = vsel %vm2459, %v2625, %v2621
    %v2627 = vlaneseq
    %v2628 = vshrl.u32 %v2627, 7
    %v2629 = vsub.s32 %v2461, %v2628
    %v2630 = vrot.slane %v2348, %v2629
    %v2631 = vsel %vm2466, %v2630, %v2626
    %v2632 = vlaneseq
    %v2633 = vshrl.u32 %v2632, 7
    %v2634 = vsub.s32 %v2468, %v2633
    %v2635 = vrot.slane %v2349, %v2634
    %v2636 = vsel %vm2473, %v2635, %v2631
    %v2637 = vlaneseq
    %v2638 = vshrl.u32 %v2637, 7
    %v2639 = vsub.s32 %v2475, %v2638
    %v2640 = vrot.slane %v2350, %v2639
    %v2641 = vsel %vm2480, %v2640, %v2636
    %v2642 = vlaneseq
    %v2643 = vshrl.u32 %v2642, 7
    %v2644 = vsub.s32 %v2482, %v2643
    %v2645 = vrot.slane %v2351, %v2644
    %v2646 = vsel %vm2487, %v2645, %v2641
    %v2647 = vlaneseq
    %v2648 = vshrl.u32 %v2647, 7
    %v2649 = vsub.s32 %v2489, %v2648
    %v2650 = vrot.slane %v2352, %v2649
    %v2651 = vsel %vm2494, %v2650, %v2646
    %v2652 = vlaneseq
    %v2653 = vshrl.u32 %v2652, 7
    %v2654 = vsub.s32 %v2442, %v2653
    %v2655 = vrot.slane %v2353, %v2654
    %v2656 = vlaneseq
    %v2657 = vshrl.u32 %v2656, 7
    %v2658 = vsub.s32 %v2447, %v2657
    %v2659 = vrot.slane %v2354, %v2658
    %v2660 = vsel %vm2452, %v2659, %v2655
    %v2661 = vlaneseq
    %v2662 = vshrl.u32 %v2661, 7
    %v2663 = vsub.s32 %v2454, %v2662
    %v2664 = vrot.slane %v2355, %v2663
    %v2665 = vsel %vm2459, %v2664, %v2660
    %v2666 = vlaneseq
    %v2667 = vshrl.u32 %v2666, 7
    %v2668 = vsub.s32 %v2461, %v2667
    %v2669 = vrot.slane %v2356, %v2668
    %v2670 = vsel %vm2466, %v2669, %v2665
    %v2671 = vlaneseq
    %v2672 = vshrl.u32 %v2671, 7
    %v2673 = vsub.s32 %v2468, %v2672
    %v2674 = vrot.slane %v2357, %v2673
    %v2675 = vsel %vm2473, %v2674, %v2670
    %v2676 = vlaneseq
    %v2677 = vshrl.u32 %v2676, 7
    %v2678 = vsub.s32 %v2475, %v2677
    %v2679 = vrot.slane %v2358, %v2678
    %v2680 = vsel %vm2480, %v2679, %v2675
    %v2681 = vlaneseq
    %v2682 = vshrl.u32 %v2681, 7
    %v2683 = vsub.s32 %v2482, %v2682
    %v2684 = vrot.slane %v2359, %v2683
    %v2685 = vsel %vm2487, %v2684, %v2680
    %v2686 = vlaneseq
    %v2687 = vshrl.u32 %v2686, 7
    %v2688 = vsub.s32 %v2489, %v2687
    %v2689 = vrot.slane %v2360, %v2688
    %v2690 = vsel %vm2494, %v2689, %v2685
    %v2691 = vlaneseq
    %v2692 = vshrl.u32 %v2691, 7
    %v2693 = vsub.s32 %v2442, %v2692
    %v2694 = vrot.slane %v2361, %v2693
    %v2695 = vlaneseq
    %v2696 = vshrl.u32 %v2695, 7
    %v2697 = vsub.s32 %v2447, %v2696
    %v2698 = vrot.slane %v2362, %v2697
    %v2699 = vsel %vm2452, %v2698, %v2694
    %v2700 = vlaneseq
    %v2701 = vshrl.u32 %v2700, 7
    %v2702 = vsub.s32 %v2454, %v2701
    %v2703 = vrot.slane %v2363, %v2702
    %v2704 = vsel %vm2459, %v2703, %v2699
    %v2705 = vlaneseq
    %v2706 = vshrl.u32 %v2705, 7
    %v2707 = vsub.s32 %v2461, %v2706
    %v2708 = vrot.slane %v2364, %v2707
    %v2709 = vsel %vm2466, %v2708, %v2704
    %v2710 = vlaneseq
    %v2711 = vshrl.u32 %v2710, 7
    %v2712 = vsub.s32 %v2468, %v2711
    %v2713 = vrot.slane %v2365, %v2712
    %v2714 = vsel %vm2473, %v2713, %v2709
    %v2715 = vlaneseq
    %v2716 = vshrl.u32 %v2715, 7
    %v2717 = vsub.s32 %v2475, %v2716
    %v2718 = vrot.slane %v2366, %v2717
    %v2719 = vsel %vm2480, %v2718, %v2714
    %v2720 = vlaneseq
    %v2721 = vshrl.u32 %v2720, 7
    %v2722 = vsub.s32 %v2482, %v2721
    %v2723 = vrot.slane %v2367, %v2722
    %v2724 = vsel %vm2487, %v2723, %v2719
    %v2725 = vlaneseq
    %v2726 = vshrl.u32 %v2725, 7
    %v2727 = vsub.s32 %v2489, %v2726
    %v2728 = vrot.slane %v2368, %v2727
    %v2729 = vsel %vm2494, %v2728, %v2724
    %v2730 = vlaneseq
    %v2731 = vshrl.u32 %v2730, 7
    %v2732 = vsub.s32 %v2442, %v2731
    %v2733 = vrot.slane %v2369, %v2732
    %v2734 = vlaneseq
    %v2735 = vshrl.u32 %v2734, 7
    %v2736 = vsub.s32 %v2447, %v2735
    %v2737 = vrot.slane %v2370, %v2736
    %v2738 = vsel %vm2452, %v2737, %v2733
    %v2739 = vlaneseq
    %v2740 = vshrl.u32 %v2739, 7
    %v2741 = vsub.s32 %v2454, %v2740
    %v2742 = vrot.slane %v2371, %v2741
    %v2743 = vsel %vm2459, %v2742, %v2738
    %v2744 = vlaneseq
    %v2745 = vshrl.u32 %v2744, 7
    %v2746 = vsub.s32 %v2461, %v2745
    %v2747 = vrot.slane %v2372, %v2746
    %v2748 = vsel %vm2466, %v2747, %v2743
    %v2749 = vlaneseq
    %v2750 = vshrl.u32 %v2749, 7
    %v2751 = vsub.s32 %v2468, %v2750
    %v2752 = vrot.slane %v2373, %v2751
    %v2753 = vsel %vm2473, %v2752, %v2748
    %v2754 = vlaneseq
    %v2755 = vshrl.u32 %v2754, 7
    %v2756 = vsub.s32 %v2475, %v2755
    %v2757 = vrot.slane %v2374, %v2756
    %v2758 = vsel %vm2480, %v2757, %v2753
    %v2759 = vlaneseq
    %v2760 = vshrl.u32 %v2759, 7
    %v2761 = vsub.s32 %v2482, %v2760
    %v2762 = vrot.slane %v2375, %v2761
    %v2763 = vsel %vm2487, %v2762, %v2758
    %v2764 = vlaneseq
    %v2765 = vshrl.u32 %v2764, 7
    %v2766 = vsub.s32 %v2489, %v2765
    %v2767 = vrot.slane %v2376, %v2766
    %v2768 = vsel %vm2494, %v2767, %v2763
    %vm2769 = vcmask 1041409
    %v2770 = vsel %vm2769, %v2534, %v2495
    %vm2771 = vcmask 1042434
    %v2772 = vsel %vm2771, %v2573, %v2770
    %vm2773 = vcmask 1043459
    %v2774 = vsel %vm2773, %v2612, %v2772
    %vm2775 = vcmask 1044484
    %v2776 = vsel %vm2775, %v2651, %v2774
    %vm2777 = vcmask 1045509
    %v2778 = vsel %vm2777, %v2690, %v2776
    %vm2779 = vcmask 1046534
    %v2780 = vsel %vm2779, %v2729, %v2778
    %vm2781 = vcmask 1047559
    %v2782 = vsel %vm2781, %v2768, %v2780
    %2785 = vrot.lane.b32.xlu0 %v2116, 64
    %v2786 = vpop.permute.xlu0 %2785
    %vm2788 = vcmask 523264
    %v2789 = vsel %vm2788, %v2782, %v2786
    %vm2790 = vcmask 531456
    %v2791 = vsel %vm2790, %v2789, -1e+30
    %2792 = vmax.xlane.f32.xlu0 %v2791
    %v2793 = vpop.xlane.xlu0 %2792
    %v2794 = vsub.f32 %v2791, %v2793
    %v2795 = vmul.f32 %v2794, 1.442695
    %v2796 = vpow.pop %v2795
    %2797 = vadd.xlane.f32.xlu0 %v2796
    %v2798 = vpop.xlane.xlu0 %2797
    %v2799 = vrcp.pop %v2798
    %v2800 = vmul.f32 %v2796, %v2799
    %v2801 = vsub.f32 %v2116, %v2793
    %v2802 = vmul.f32 %v2801, 1.442695
    %v2803 = vpow.pop %v2802
    %v2804 = vmul.f32 %v2803, %v2799
    %2806 = vset.pattern.permute.xlu0 0
    %2807 = vperm.xlu0 %2806, %v2804
    %v2808 = vpop.permute.xlu0 %2807
    %v2810 = vmul.f32 %v2808, %v1503
    %v2811 = vlaneseq
    %v2812 = vshrl.u32 %v2811, 7
    %v2813 = vsub.s32 0, %v2812
    %v2814 = vrot.slane %v2800, %v2813
    %2816 = vbcast.lane.b32.xlu0 %v2814, 256
    %v2817 = vpop.permute.xlu0 %2816
    %s2819 = sor.u32 256, 8
    %2820 = vbcast.lane.b32.xlu0 %v2814, %s2819
    %v2821 = vpop.permute.xlu0 %2820
    %s2823 = sor.u32 256, 16
    %2824 = vbcast.lane.b32.xlu0 %v2814, %s2823
    %v2825 = vpop.permute.xlu0 %2824
    %s2827 = sor.u32 256, 24
    %2828 = vbcast.lane.b32.xlu0 %v2814, %s2827
    %v2829 = vpop.permute.xlu0 %2828
    %s2831 = sor.u32 256, 32
    %2832 = vbcast.lane.b32.xlu0 %v2814, %s2831
    %v2833 = vpop.permute.xlu0 %2832
    %s2835 = sor.u32 256, 40
    %2836 = vbcast.lane.b32.xlu0 %v2814, %s2835
    %v2837 = vpop.permute.xlu0 %2836
    %s2839 = sor.u32 256, 48
    %2840 = vbcast.lane.b32.xlu0 %v2814, %s2839
    %v2841 = vpop.permute.xlu0 %2840
    %s2843 = sor.u32 256, 56
    %2844 = vbcast.lane.b32.xlu0 %v2814, %s2843
    %v2845 = vpop.permute.xlu0 %2844
    %v2846 = vlaneseq
    %v2847 = vshrl.u32 %v2846, 7
    %v2848 = vsub.s32 1, %v2847
    %v2849 = vrot.slane %v2800, %v2848
    %2851 = vbcast.lane.b32.xlu0 %v2849, 256
    %v2852 = vpop.permute.xlu0 %2851
    %s2854 = sor.u32 256, 8
    %2855 = vbcast.lane.b32.xlu0 %v2849, %s2854
    %v2856 = vpop.permute.xlu0 %2855
    %s2858 = sor.u32 256, 16
    %2859 = vbcast.lane.b32.xlu0 %v2849, %s2858
    %v2860 = vpop.permute.xlu0 %2859
    %s2862 = sor.u32 256, 24
    %2863 = vbcast.lane.b32.xlu0 %v2849, %s2862
    %v2864 = vpop.permute.xlu0 %2863
    %s2866 = sor.u32 256, 32
    %2867 = vbcast.lane.b32.xlu0 %v2849, %s2866
    %v2868 = vpop.permute.xlu0 %2867
    %s2870 = sor.u32 256, 40
    %2871 = vbcast.lane.b32.xlu0 %v2849, %s2870
    %v2872 = vpop.permute.xlu0 %2871
    %s2874 = sor.u32 256, 48
    %2875 = vbcast.lane.b32.xlu0 %v2849, %s2874
    %v2876 = vpop.permute.xlu0 %2875
    %s2878 = sor.u32 256, 56
    %2879 = vbcast.lane.b32.xlu0 %v2849, %s2878
    %v2880 = vpop.permute.xlu0 %2879
    %v2881 = vlaneseq
    %v2882 = vshrl.u32 %v2881, 7
    %v2883 = vsub.s32 2, %v2882
    %v2884 = vrot.slane %v2800, %v2883
    %2886 = vbcast.lane.b32.xlu0 %v2884, 256
    %v2887 = vpop.permute.xlu0 %2886
    %s2889 = sor.u32 256, 8
    %2890 = vbcast.lane.b32.xlu0 %v2884, %s2889
    %v2891 = vpop.permute.xlu0 %2890
    %s2893 = sor.u32 256, 16
    %2894 = vbcast.lane.b32.xlu0 %v2884, %s2893
    %v2895 = vpop.permute.xlu0 %2894
    %s2897 = sor.u32 256, 24
    %2898 = vbcast.lane.b32.xlu0 %v2884, %s2897
    %v2899 = vpop.permute.xlu0 %2898
    %s2901 = sor.u32 256, 32
    %2902 = vbcast.lane.b32.xlu0 %v2884, %s2901
    %v2903 = vpop.permute.xlu0 %2902
    %s2905 = sor.u32 256, 40
    %2906 = vbcast.lane.b32.xlu0 %v2884, %s2905
    %v2907 = vpop.permute.xlu0 %2906
    %s2909 = sor.u32 256, 48
    %2910 = vbcast.lane.b32.xlu0 %v2884, %s2909
    %v2911 = vpop.permute.xlu0 %2910
    %s2913 = sor.u32 256, 56
    %2914 = vbcast.lane.b32.xlu0 %v2884, %s2913
    %v2915 = vpop.permute.xlu0 %2914
    %v2916 = vlaneseq
    %v2917 = vshrl.u32 %v2916, 7
    %v2918 = vsub.s32 3, %v2917
    %v2919 = vrot.slane %v2800, %v2918
    %2921 = vbcast.lane.b32.xlu0 %v2919, 256
    %v2922 = vpop.permute.xlu0 %2921
    %s2924 = sor.u32 256, 8
    %2925 = vbcast.lane.b32.xlu0 %v2919, %s2924
    %v2926 = vpop.permute.xlu0 %2925
    %s2928 = sor.u32 256, 16
    %2929 = vbcast.lane.b32.xlu0 %v2919, %s2928
    %v2930 = vpop.permute.xlu0 %2929
    %s2932 = sor.u32 256, 24
    %2933 = vbcast.lane.b32.xlu0 %v2919, %s2932
    %v2934 = vpop.permute.xlu0 %2933
    %s2936 = sor.u32 256, 32
    %2937 = vbcast.lane.b32.xlu0 %v2919, %s2936
    %v2938 = vpop.permute.xlu0 %2937
    %s2940 = sor.u32 256, 40
    %2941 = vbcast.lane.b32.xlu0 %v2919, %s2940
    %v2942 = vpop.permute.xlu0 %2941
    %s2944 = sor.u32 256, 48
    %2945 = vbcast.lane.b32.xlu0 %v2919, %s2944
    %v2946 = vpop.permute.xlu0 %2945
    %s2948 = sor.u32 256, 56
    %2949 = vbcast.lane.b32.xlu0 %v2919, %s2948
    %v2950 = vpop.permute.xlu0 %2949
    %v2951 = vlaneseq
    %v2952 = vshrl.u32 %v2951, 7
    %v2953 = vsub.s32 4, %v2952
    %v2954 = vrot.slane %v2800, %v2953
    %2956 = vbcast.lane.b32.xlu0 %v2954, 256
    %v2957 = vpop.permute.xlu0 %2956
    %s2959 = sor.u32 256, 8
    %2960 = vbcast.lane.b32.xlu0 %v2954, %s2959
    %v2961 = vpop.permute.xlu0 %2960
    %s2963 = sor.u32 256, 16
    %2964 = vbcast.lane.b32.xlu0 %v2954, %s2963
    %v2965 = vpop.permute.xlu0 %2964
    %s2967 = sor.u32 256, 24
    %2968 = vbcast.lane.b32.xlu0 %v2954, %s2967
    %v2969 = vpop.permute.xlu0 %2968
    %s2971 = sor.u32 256, 32
    %2972 = vbcast.lane.b32.xlu0 %v2954, %s2971
    %v2973 = vpop.permute.xlu0 %2972
    %s2975 = sor.u32 256, 40
    %2976 = vbcast.lane.b32.xlu0 %v2954, %s2975
    %v2977 = vpop.permute.xlu0 %2976
    %s2979 = sor.u32 256, 48
    %2980 = vbcast.lane.b32.xlu0 %v2954, %s2979
    %v2981 = vpop.permute.xlu0 %2980
    %s2983 = sor.u32 256, 56
    %2984 = vbcast.lane.b32.xlu0 %v2954, %s2983
    %v2985 = vpop.permute.xlu0 %2984
    %v2986 = vlaneseq
    %v2987 = vshrl.u32 %v2986, 7
    %v2988 = vsub.s32 5, %v2987
    %v2989 = vrot.slane %v2800, %v2988
    %2991 = vbcast.lane.b32.xlu0 %v2989, 256
    %v2992 = vpop.permute.xlu0 %2991
    %s2994 = sor.u32 256, 8
    %2995 = vbcast.lane.b32.xlu0 %v2989, %s2994
    %v2996 = vpop.permute.xlu0 %2995
    %s2998 = sor.u32 256, 16
    %2999 = vbcast.lane.b32.xlu0 %v2989, %s2998
    %v3000 = vpop.permute.xlu0 %2999
    %s3002 = sor.u32 256, 24
    %3003 = vbcast.lane.b32.xlu0 %v2989, %s3002
    %v3004 = vpop.permute.xlu0 %3003
    %s3006 = sor.u32 256, 32
    %3007 = vbcast.lane.b32.xlu0 %v2989, %s3006
    %v3008 = vpop.permute.xlu0 %3007
    %s3010 = sor.u32 256, 40
    %3011 = vbcast.lane.b32.xlu0 %v2989, %s3010
    %v3012 = vpop.permute.xlu0 %3011
    %s3014 = sor.u32 256, 48
    %3015 = vbcast.lane.b32.xlu0 %v2989, %s3014
    %v3016 = vpop.permute.xlu0 %3015
    %s3018 = sor.u32 256, 56
    %3019 = vbcast.lane.b32.xlu0 %v2989, %s3018
    %v3020 = vpop.permute.xlu0 %3019
    %v3021 = vlaneseq
    %v3022 = vshrl.u32 %v3021, 7
    %v3023 = vsub.s32 6, %v3022
    %v3024 = vrot.slane %v2800, %v3023
    %3026 = vbcast.lane.b32.xlu0 %v3024, 256
    %v3027 = vpop.permute.xlu0 %3026
    %s3029 = sor.u32 256, 8
    %3030 = vbcast.lane.b32.xlu0 %v3024, %s3029
    %v3031 = vpop.permute.xlu0 %3030
    %s3033 = sor.u32 256, 16
    %3034 = vbcast.lane.b32.xlu0 %v3024, %s3033
    %v3035 = vpop.permute.xlu0 %3034
    %s3037 = sor.u32 256, 24
    %3038 = vbcast.lane.b32.xlu0 %v3024, %s3037
    %v3039 = vpop.permute.xlu0 %3038
    %s3041 = sor.u32 256, 32
    %3042 = vbcast.lane.b32.xlu0 %v3024, %s3041
    %v3043 = vpop.permute.xlu0 %3042
    %s3045 = sor.u32 256, 40
    %3046 = vbcast.lane.b32.xlu0 %v3024, %s3045
    %v3047 = vpop.permute.xlu0 %3046
    %s3049 = sor.u32 256, 48
    %3050 = vbcast.lane.b32.xlu0 %v3024, %s3049
    %v3051 = vpop.permute.xlu0 %3050
    %s3053 = sor.u32 256, 56
    %3054 = vbcast.lane.b32.xlu0 %v3024, %s3053
    %v3055 = vpop.permute.xlu0 %3054
    %v3056 = vlaneseq
    %v3057 = vshrl.u32 %v3056, 7
    %v3058 = vsub.s32 7, %v3057
    %v3059 = vrot.slane %v2800, %v3058
    %3061 = vbcast.lane.b32.xlu0 %v3059, 256
    %v3062 = vpop.permute.xlu0 %3061
    %s3064 = sor.u32 256, 8
    %3065 = vbcast.lane.b32.xlu0 %v3059, %s3064
    %v3066 = vpop.permute.xlu0 %3065
    %s3068 = sor.u32 256, 16
    %3069 = vbcast.lane.b32.xlu0 %v3059, %s3068
    %v3070 = vpop.permute.xlu0 %3069
    %s3072 = sor.u32 256, 24
    %3073 = vbcast.lane.b32.xlu0 %v3059, %s3072
    %v3074 = vpop.permute.xlu0 %3073
    %s3076 = sor.u32 256, 32
    %3077 = vbcast.lane.b32.xlu0 %v3059, %s3076
    %v3078 = vpop.permute.xlu0 %3077
    %s3080 = sor.u32 256, 40
    %3081 = vbcast.lane.b32.xlu0 %v3059, %s3080
    %v3082 = vpop.permute.xlu0 %3081
    %s3084 = sor.u32 256, 48
    %3085 = vbcast.lane.b32.xlu0 %v3059, %s3084
    %v3086 = vpop.permute.xlu0 %3085
    %s3088 = sor.u32 256, 56
    %3089 = vbcast.lane.b32.xlu0 %v3059, %s3088
    %v3090 = vpop.permute.xlu0 %3089
    %v3091 = vld [vmem:[%s4] sm:$0xf]
    %v3092 = vld [vmem:[%s4 + $0x4] sm:$0xf]
    %v3093 = vld [vmem:[%s4 + $0x8] sm:$0xf]
    %v3094 = vld [vmem:[%s4 + $0xc] sm:$0xf]
    %v3095 = vld [vmem:[%s4 + $0x10] sm:$0xf]
    %v3096 = vld [vmem:[%s4 + $0x14] sm:$0xf]
    %v3097 = vld [vmem:[%s4 + $0x18] sm:$0xf]
    %v3098 = vld [vmem:[%s4 + $0x1c] sm:$0xf]
    %v3099 = vld [vmem:[%s4 + $0x20] sm:$0xf]
    %v3100 = vld [vmem:[%s4 + $0x24] sm:$0xf]
    %v3101 = vld [vmem:[%s4 + $0x28] sm:$0xf]
    %v3102 = vld [vmem:[%s4 + $0x2c] sm:$0xf]
    %v3103 = vld [vmem:[%s4 + $0x30] sm:$0xf]
    %v3104 = vld [vmem:[%s4 + $0x34] sm:$0xf]
    %v3105 = vld [vmem:[%s4 + $0x38] sm:$0xf]
    %v3106 = vld [vmem:[%s4 + $0x3c] sm:$0xf]
    %v3107 = vld [vmem:[%s4 + $0x40] sm:$0xf]
    %v3108 = vld [vmem:[%s4 + $0x44] sm:$0xf]
    %v3109 = vld [vmem:[%s4 + $0x48] sm:$0xf]
    %v3110 = vld [vmem:[%s4 + $0x4c] sm:$0xf]
    %v3111 = vld [vmem:[%s4 + $0x50] sm:$0xf]
    %v3112 = vld [vmem:[%s4 + $0x54] sm:$0xf]
    %v3113 = vld [vmem:[%s4 + $0x58] sm:$0xf]
    %v3114 = vld [vmem:[%s4 + $0x5c] sm:$0xf]
    %v3115 = vld [vmem:[%s4 + $0x60] sm:$0xf]
    %v3116 = vld [vmem:[%s4 + $0x64] sm:$0xf]
    %v3117 = vld [vmem:[%s4 + $0x68] sm:$0xf]
    %v3118 = vld [vmem:[%s4 + $0x6c] sm:$0xf]
    %v3119 = vld [vmem:[%s4 + $0x70] sm:$0xf]
    %v3120 = vld [vmem:[%s4 + $0x74] sm:$0xf]
    %v3121 = vld [vmem:[%s4 + $0x78] sm:$0xf]
    %v3122 = vld [vmem:[%s4 + $0x7c] sm:$0xf]
    %v3123 = vld [vmem:[%s4 + $0x80] sm:$0xf]
    %v3124 = vld [vmem:[%s4 + $0x84] sm:$0xf]
    %v3125 = vld [vmem:[%s4 + $0x88] sm:$0xf]
    %v3126 = vld [vmem:[%s4 + $0x8c] sm:$0xf]
    %v3127 = vld [vmem:[%s4 + $0x90] sm:$0xf]
    %v3128 = vld [vmem:[%s4 + $0x94] sm:$0xf]
    %v3129 = vld [vmem:[%s4 + $0x98] sm:$0xf]
    %v3130 = vld [vmem:[%s4 + $0x9c] sm:$0xf]
    %v3131 = vld [vmem:[%s4 + $0xa0] sm:$0xf]
    %v3132 = vld [vmem:[%s4 + $0xa4] sm:$0xf]
    %v3133 = vld [vmem:[%s4 + $0xa8] sm:$0xf]
    %v3134 = vld [vmem:[%s4 + $0xac] sm:$0xf]
    %v3135 = vld [vmem:[%s4 + $0xb0] sm:$0xf]
    %v3136 = vld [vmem:[%s4 + $0xb4] sm:$0xf]
    %v3137 = vld [vmem:[%s4 + $0xb8] sm:$0xf]
    %v3138 = vld [vmem:[%s4 + $0xbc] sm:$0xf]
    %v3139 = vld [vmem:[%s4 + $0xc0] sm:$0xf]
    %v3140 = vld [vmem:[%s4 + $0xc4] sm:$0xf]
    %v3141 = vld [vmem:[%s4 + $0xc8] sm:$0xf]
    %v3142 = vld [vmem:[%s4 + $0xcc] sm:$0xf]
    %v3143 = vld [vmem:[%s4 + $0xd0] sm:$0xf]
    %v3144 = vld [vmem:[%s4 + $0xd4] sm:$0xf]
    %v3145 = vld [vmem:[%s4 + $0xd8] sm:$0xf]
    %v3146 = vld [vmem:[%s4 + $0xdc] sm:$0xf]
    %v3147 = vld [vmem:[%s4 + $0xe0] sm:$0xf]
    %v3148 = vld [vmem:[%s4 + $0xe4] sm:$0xf]
    %v3149 = vld [vmem:[%s4 + $0xe8] sm:$0xf]
    %v3150 = vld [vmem:[%s4 + $0xec] sm:$0xf]
    %v3151 = vld [vmem:[%s4 + $0xf0] sm:$0xf]
    %v3152 = vld [vmem:[%s4 + $0xf4] sm:$0xf]
    %v3153 = vld [vmem:[%s4 + $0xf8] sm:$0xf]
    %v3154 = vld [vmem:[%s4 + $0xfc] sm:$0xf]
    %v3155 = vunpack.c.l.bf16 %v3091
    %v3156 = vunpack.c.l.bf16 %v3092
    %v3157 = vunpack.c.l.bf16 %v3093
    %v3158 = vunpack.c.l.bf16 %v3094
    %v3159 = vunpack.c.l.bf16 %v3095
    %v3160 = vunpack.c.l.bf16 %v3096
    %v3161 = vunpack.c.l.bf16 %v3097
    %v3162 = vunpack.c.l.bf16 %v3098
    %v3163 = vunpack.c.l.bf16 %v3099
    %v3164 = vunpack.c.l.bf16 %v3100
    %v3165 = vunpack.c.l.bf16 %v3101
    %v3166 = vunpack.c.l.bf16 %v3102
    %v3167 = vunpack.c.l.bf16 %v3103
    %v3168 = vunpack.c.l.bf16 %v3104
    %v3169 = vunpack.c.l.bf16 %v3105
    %v3170 = vunpack.c.l.bf16 %v3106
    %v3171 = vunpack.c.l.bf16 %v3107
    %v3172 = vunpack.c.l.bf16 %v3108
    %v3173 = vunpack.c.l.bf16 %v3109
    %v3174 = vunpack.c.l.bf16 %v3110
    %v3175 = vunpack.c.l.bf16 %v3111
    %v3176 = vunpack.c.l.bf16 %v3112
    %v3177 = vunpack.c.l.bf16 %v3113
    %v3178 = vunpack.c.l.bf16 %v3114
    %v3179 = vunpack.c.l.bf16 %v3115
    %v3180 = vunpack.c.l.bf16 %v3116
    %v3181 = vunpack.c.l.bf16 %v3117
    %v3182 = vunpack.c.l.bf16 %v3118
    %v3183 = vunpack.c.l.bf16 %v3119
    %v3184 = vunpack.c.l.bf16 %v3120
    %v3185 = vunpack.c.l.bf16 %v3121
    %v3186 = vunpack.c.l.bf16 %v3122
    %v3187 = vunpack.c.l.bf16 %v3123
    %v3188 = vunpack.c.l.bf16 %v3124
    %v3189 = vunpack.c.l.bf16 %v3125
    %v3190 = vunpack.c.l.bf16 %v3126
    %v3191 = vunpack.c.l.bf16 %v3127
    %v3192 = vunpack.c.l.bf16 %v3128
    %v3193 = vunpack.c.l.bf16 %v3129
    %v3194 = vunpack.c.l.bf16 %v3130
    %v3195 = vunpack.c.l.bf16 %v3131
    %v3196 = vunpack.c.l.bf16 %v3132
    %v3197 = vunpack.c.l.bf16 %v3133
    %v3198 = vunpack.c.l.bf16 %v3134
    %v3199 = vunpack.c.l.bf16 %v3135
    %v3200 = vunpack.c.l.bf16 %v3136
    %v3201 = vunpack.c.l.bf16 %v3137
    %v3202 = vunpack.c.l.bf16 %v3138
    %v3203 = vunpack.c.l.bf16 %v3139
    %v3204 = vunpack.c.l.bf16 %v3140
    %v3205 = vunpack.c.l.bf16 %v3141
    %v3206 = vunpack.c.l.bf16 %v3142
    %v3207 = vunpack.c.l.bf16 %v3143
    %v3208 = vunpack.c.l.bf16 %v3144
    %v3209 = vunpack.c.l.bf16 %v3145
    %v3210 = vunpack.c.l.bf16 %v3146
    %v3211 = vunpack.c.l.bf16 %v3147
    %v3212 = vunpack.c.l.bf16 %v3148
    %v3213 = vunpack.c.l.bf16 %v3149
    %v3214 = vunpack.c.l.bf16 %v3150
    %v3215 = vunpack.c.l.bf16 %v3151
    %v3216 = vunpack.c.l.bf16 %v3152
    %v3217 = vunpack.c.l.bf16 %v3153
    %v3218 = vunpack.c.l.bf16 %v3154
    %v3219 = vmul.f32 %v2817, %v3155
    %v3220 = vmul.f32 %v2821, %v3156
    %v3221 = vmul.f32 %v2825, %v3157
    %v3222 = vmul.f32 %v2829, %v3158
    %v3223 = vmul.f32 %v2833, %v3159
    %v3224 = vmul.f32 %v2837, %v3160
    %v3225 = vmul.f32 %v2841, %v3161
    %v3226 = vmul.f32 %v2845, %v3162
    %v3227 = vmul.f32 %v2852, %v3163
    %v3228 = vmul.f32 %v2856, %v3164
    %v3229 = vmul.f32 %v2860, %v3165
    %v3230 = vmul.f32 %v2864, %v3166
    %v3231 = vmul.f32 %v2868, %v3167
    %v3232 = vmul.f32 %v2872, %v3168
    %v3233 = vmul.f32 %v2876, %v3169
    %v3234 = vmul.f32 %v2880, %v3170
    %v3235 = vmul.f32 %v2887, %v3171
    %v3236 = vmul.f32 %v2891, %v3172
    %v3237 = vmul.f32 %v2895, %v3173
    %v3238 = vmul.f32 %v2899, %v3174
    %v3239 = vmul.f32 %v2903, %v3175
    %v3240 = vmul.f32 %v2907, %v3176
    %v3241 = vmul.f32 %v2911, %v3177
    %v3242 = vmul.f32 %v2915, %v3178
    %v3243 = vmul.f32 %v2922, %v3179
    %v3244 = vmul.f32 %v2926, %v3180
    %v3245 = vmul.f32 %v2930, %v3181
    %v3246 = vmul.f32 %v2934, %v3182
    %v3247 = vmul.f32 %v2938, %v3183
    %v3248 = vmul.f32 %v2942, %v3184
    %v3249 = vmul.f32 %v2946, %v3185
    %v3250 = vmul.f32 %v2950, %v3186
    %v3251 = vmul.f32 %v2957, %v3187
    %v3252 = vmul.f32 %v2961, %v3188
    %v3253 = vmul.f32 %v2965, %v3189
    %v3254 = vmul.f32 %v2969, %v3190
    %v3255 = vmul.f32 %v2973, %v3191
    %v3256 = vmul.f32 %v2977, %v3192
    %v3257 = vmul.f32 %v2981, %v3193
    %v3258 = vmul.f32 %v2985, %v3194
    %v3259 = vmul.f32 %v2992, %v3195
    %v3260 = vmul.f32 %v2996, %v3196
    %v3261 = vmul.f32 %v3000, %v3197
    %v3262 = vmul.f32 %v3004, %v3198
    %v3263 = vmul.f32 %v3008, %v3199
    %v3264 = vmul.f32 %v3012, %v3200
    %v3265 = vmul.f32 %v3016, %v3201
    %v3266 = vmul.f32 %v3020, %v3202
    %v3267 = vmul.f32 %v3027, %v3203
    %v3268 = vmul.f32 %v3031, %v3204
    %v3269 = vmul.f32 %v3035, %v3205
    %v3270 = vmul.f32 %v3039, %v3206
    %v3271 = vmul.f32 %v3043, %v3207
    %v3272 = vmul.f32 %v3047, %v3208
    %v3273 = vmul.f32 %v3051, %v3209
    %v3274 = vmul.f32 %v3055, %v3210
    %v3275 = vmul.f32 %v3062, %v3211
    %v3276 = vmul.f32 %v3066, %v3212
    %v3277 = vmul.f32 %v3070, %v3213
    %v3278 = vmul.f32 %v3074, %v3214
    %v3279 = vmul.f32 %v3078, %v3215
    %v3280 = vmul.f32 %v3082, %v3216
    %v3281 = vmul.f32 %v3086, %v3217
    %v3282 = vmul.f32 %v3090, %v3218
    %v3283 = vadd.f32 %v3219, %v3220
    %v3284 = vadd.f32 %v3283, %v3221
    %v3285 = vadd.f32 %v3284, %v3222
    %v3286 = vadd.f32 %v3285, %v3223
    %v3287 = vadd.f32 %v3286, %v3224
    %v3288 = vadd.f32 %v3287, %v3225
    %v3289 = vadd.f32 %v3288, %v3226
    %v3290 = vrot.slane %v3289, 4
    %v3291 = vadd.f32 %v3289, %v3290
    %v3292 = vrot.slane %v3291, 2
    %v3293 = vadd.f32 %v3291, %v3292
    %v3294 = vrot.slane %v3293, 1
    %v3295 = vadd.f32 %v3293, %v3294
    %v3296 = vadd.f32 %v3227, %v3228
    %v3297 = vadd.f32 %v3296, %v3229
    %v3298 = vadd.f32 %v3297, %v3230
    %v3299 = vadd.f32 %v3298, %v3231
    %v3300 = vadd.f32 %v3299, %v3232
    %v3301 = vadd.f32 %v3300, %v3233
    %v3302 = vadd.f32 %v3301, %v3234
    %v3303 = vrot.slane %v3302, 4
    %v3304 = vadd.f32 %v3302, %v3303
    %v3305 = vrot.slane %v3304, 2
    %v3306 = vadd.f32 %v3304, %v3305
    %v3307 = vrot.slane %v3306, 1
    %v3308 = vadd.f32 %v3306, %v3307
    %v3309 = vadd.f32 %v3235, %v3236
    %v3310 = vadd.f32 %v3309, %v3237
    %v3311 = vadd.f32 %v3310, %v3238
    %v3312 = vadd.f32 %v3311, %v3239
    %v3313 = vadd.f32 %v3312, %v3240
    %v3314 = vadd.f32 %v3313, %v3241
    %v3315 = vadd.f32 %v3314, %v3242
    %v3316 = vrot.slane %v3315, 4
    %v3317 = vadd.f32 %v3315, %v3316
    %v3318 = vrot.slane %v3317, 2
    %v3319 = vadd.f32 %v3317, %v3318
    %v3320 = vrot.slane %v3319, 1
    %v3321 = vadd.f32 %v3319, %v3320
    %v3322 = vadd.f32 %v3243, %v3244
    %v3323 = vadd.f32 %v3322, %v3245
    %v3324 = vadd.f32 %v3323, %v3246
    %v3325 = vadd.f32 %v3324, %v3247
    %v3326 = vadd.f32 %v3325, %v3248
    %v3327 = vadd.f32 %v3326, %v3249
    %v3328 = vadd.f32 %v3327, %v3250
    %v3329 = vrot.slane %v3328, 4
    %v3330 = vadd.f32 %v3328, %v3329
    %v3331 = vrot.slane %v3330, 2
    %v3332 = vadd.f32 %v3330, %v3331
    %v3333 = vrot.slane %v3332, 1
    %v3334 = vadd.f32 %v3332, %v3333
    %v3335 = vadd.f32 %v3251, %v3252
    %v3336 = vadd.f32 %v3335, %v3253
    %v3337 = vadd.f32 %v3336, %v3254
    %v3338 = vadd.f32 %v3337, %v3255
    %v3339 = vadd.f32 %v3338, %v3256
    %v3340 = vadd.f32 %v3339, %v3257
    %v3341 = vadd.f32 %v3340, %v3258
    %v3342 = vrot.slane %v3341, 4
    %v3343 = vadd.f32 %v3341, %v3342
    %v3344 = vrot.slane %v3343, 2
    %v3345 = vadd.f32 %v3343, %v3344
    %v3346 = vrot.slane %v3345, 1
    %v3347 = vadd.f32 %v3345, %v3346
    %v3348 = vadd.f32 %v3259, %v3260
    %v3349 = vadd.f32 %v3348, %v3261
    %v3350 = vadd.f32 %v3349, %v3262
    %v3351 = vadd.f32 %v3350, %v3263
    %v3352 = vadd.f32 %v3351, %v3264
    %v3353 = vadd.f32 %v3352, %v3265
    %v3354 = vadd.f32 %v3353, %v3266
    %v3355 = vrot.slane %v3354, 4
    %v3356 = vadd.f32 %v3354, %v3355
    %v3357 = vrot.slane %v3356, 2
    %v3358 = vadd.f32 %v3356, %v3357
    %v3359 = vrot.slane %v3358, 1
    %v3360 = vadd.f32 %v3358, %v3359
    %v3361 = vadd.f32 %v3267, %v3268
    %v3362 = vadd.f32 %v3361, %v3269
    %v3363 = vadd.f32 %v3362, %v3270
    %v3364 = vadd.f32 %v3363, %v3271
    %v3365 = vadd.f32 %v3364, %v3272
    %v3366 = vadd.f32 %v3365, %v3273
    %v3367 = vadd.f32 %v3366, %v3274
    %v3368 = vrot.slane %v3367, 4
    %v3369 = vadd.f32 %v3367, %v3368
    %v3370 = vrot.slane %v3369, 2
    %v3371 = vadd.f32 %v3369, %v3370
    %v3372 = vrot.slane %v3371, 1
    %v3373 = vadd.f32 %v3371, %v3372
    %v3374 = vadd.f32 %v3275, %v3276
    %v3375 = vadd.f32 %v3374, %v3277
    %v3376 = vadd.f32 %v3375, %v3278
    %v3377 = vadd.f32 %v3376, %v3279
    %v3378 = vadd.f32 %v3377, %v3280
    %v3379 = vadd.f32 %v3378, %v3281
    %v3380 = vadd.f32 %v3379, %v3282
    %v3381 = vrot.slane %v3380, 4
    %v3382 = vadd.f32 %v3380, %v3381
    %v3383 = vrot.slane %v3382, 2
    %v3384 = vadd.f32 %v3382, %v3383
    %v3385 = vrot.slane %v3384, 1
    %v3386 = vadd.f32 %v3384, %v3385
    %v3395 = vsel %vm2769, %v3308, %v3295
    %v3396 = vsel %vm2771, %v3321, %v3395
    %v3397 = vsel %vm2773, %v3334, %v3396
    %v3398 = vsel %vm2775, %v3347, %v3397
    %v3399 = vsel %vm2777, %v3360, %v3398
    %v3400 = vsel %vm2779, %v3373, %v3399
    %v3401 = vsel %vm2781, %v3386, %v3400
    %v3403 = vadd.f32 %v2810, %v3401
    %v3404 = vadd.f32 %v3403, %v1504
    %v3405 = vpack.c.bf16 %v3404, %v3404
    %v3406 = vld [vmem:[%s14] sm:$0xf]
    %v3407 = vld [vmem:[%s14 + $0x4] sm:$0xf]
    %v3408 = vld [vmem:[%s14 + $0x8] sm:$0xf]
    %v3409 = vld [vmem:[%s14 + $0xc] sm:$0xf]
    %v3410 = vld [vmem:[%s14 + $0x10] sm:$0xf]
    %v3411 = vld [vmem:[%s14 + $0x14] sm:$0xf]
    %v3412 = vld [vmem:[%s14 + $0x18] sm:$0xf]
    %v3413 = vld [vmem:[%s14 + $0x1c] sm:$0xf]
    %v3414 = vld [vmem:[%s14 + $0x20] sm:$0xf]
    %v3415 = vld [vmem:[%s14 + $0x24] sm:$0xf]
    %v3416 = vld [vmem:[%s14 + $0x28] sm:$0xf]
    %v3417 = vld [vmem:[%s14 + $0x2c] sm:$0xf]
    %v3418 = vld [vmem:[%s14 + $0x30] sm:$0xf]
    %v3419 = vld [vmem:[%s14 + $0x34] sm:$0xf]
    %v3420 = vld [vmem:[%s14 + $0x38] sm:$0xf]
    %v3421 = vld [vmem:[%s14 + $0x3c] sm:$0xf]
    %v3422 = vld [vmem:[%s15] sm:$0x1]
    %v3424 = vlaneseq
    %v3425 = vshrl.u32 %v3424, 7
    %v3426 = vsub.s32 0, %v3425
    %v3427 = vrot.slane %v3422, %v3426
    %v3445 = vunpack.c.l.b16 %v3406
    %v3446 = vunpack.c.l.b16 %v3407
    %v3447 = vunpack.c.l.b16 %v3408
    %v3448 = vunpack.c.l.b16 %v3409
    %v3449 = vunpack.c.l.b16 %v3410
    %v3450 = vunpack.c.l.b16 %v3411
    %v3451 = vunpack.c.l.b16 %v3412
    %v3452 = vunpack.c.l.b16 %v3413
    %v3453 = vunpack.c.l.b16 %v3414
    %v3454 = vunpack.c.l.b16 %v3415
    %v3455 = vunpack.c.l.b16 %v3416
    %v3456 = vunpack.c.l.b16 %v3417
    %v3457 = vunpack.c.l.b16 %v3418
    %v3458 = vunpack.c.l.b16 %v3419
    %v3459 = vunpack.c.l.b16 %v3420
    %v3460 = vunpack.c.l.b16 %v3421
    %v3461 = vpack.c.b16 %v3446, %v3445
    %v3462 = vpack.c.b16 %v3448, %v3447
    %v3463 = vpack.c.b16 %v3450, %v3449
    %v3464 = vpack.c.b16 %v3452, %v3451
    %v3465 = vpack.c.b16 %v3454, %v3453
    %v3466 = vpack.c.b16 %v3456, %v3455
    %v3467 = vpack.c.b16 %v3458, %v3457
    %v3468 = vpack.c.b16 %v3460, %v3459
    %3477 = vmatprep.subr.bf16.mxu0 0
    %3478 = vmatpush1.bf16.msra.mxu0 %v3461
    %3479 = vmatprep.subr.bf16.mxu0 0
    %3480 = vmatpush1.bf16.msra.mxu0 %v3462
    %3481 = vmatprep.subr.bf16.mxu0 0
    %3482 = vmatpush1.bf16.msra.mxu0 %v3463
    %3483 = vmatprep.subr.bf16.mxu0 0
    %3484 = vmatpush1.bf16.msra.mxu0 %v3464
    %3485 = vmatprep.subr.bf16.mxu0 0
    %3486 = vmatpush1.bf16.msra.mxu0 %v3465
    %3487 = vmatprep.subr.bf16.mxu0 0
    %3488 = vmatpush1.bf16.msra.mxu0 %v3466
    %3489 = vmatprep.subr.bf16.mxu0 0
    %3490 = vmatpush1.bf16.msra.mxu0 %v3467
    %3491 = vmatprep.subr.bf16.mxu0 0
    %3492 = vmatpush1.bf16.msra.mxu0 %v3468
    %3493 = vmatprep.subr.bf16.mxu0 0
    %3494 = vmatpush1.bf16.msra.mxu0 0
    %3495 = vmatprep.subr.bf16.mxu0 0
    %3496 = vmatpush1.bf16.msra.mxu0 0
    %3497 = vmatprep.subr.bf16.mxu0 0
    %3498 = vmatpush1.bf16.msra.mxu0 0
    %3499 = vmatprep.subr.bf16.mxu0 0
    %3500 = vmatpush1.bf16.msra.mxu0 0
    %3501 = vmatprep.subr.bf16.mxu0 0
    %3502 = vmatpush1.bf16.msra.mxu0 0
    %3503 = vmatprep.subr.bf16.mxu0 0
    %3504 = vmatpush1.bf16.msra.mxu0 0
    %3505 = vmatprep.subr.bf16.mxu0 0
    %3506 = vmatpush1.bf16.msra.mxu0 0
    %3507 = vmatprep.subr.bf16.mxu0 0
    %3508 = vmatpush1.bf16.msra.mxu0 0
    %3509 = vmatprep.mubr.bf16.mxu0 0
    %3510 = vmatmul.mubr.bf16.gmra.mrb[0].mxu0 %v3405
    %v3511 = vpop.f32.mrb[0].mxu0
    %v3512 = vadd.f32 %v3427, %v3511
    %v3513 = vpop.f32.mrb[0].mxu0
    %v3514 = vpop.f32.mrb[0].mxu0
    %v3515 = vpop.f32.mrb[0].mxu0
    %3516 = vdwg.mxu0
    %v3517 = vtanh.pop %v3512
    %3518 = vst [vmem:[#allocation6] sm:$0xff] %v3517
    // Predicated region
    $region70: #{ada_att_core.1} parent=1 // pred_check
      _
    $region71: #{ada_att_core.1} parent=1 // pred_check_branch
      %3520 = sbr.rel (0) target = $region73
    $region72: #{ada_att_core.1} parent=1 // pred_region
      %s3522 = ssub.s32 128, 128
      %3523 = vsyncadd [#allocation5], %s3522
      %s3525 = sshll.u32 [#allocation6], 4
      %s3526 = int_to_ptr.vmem [resolvable:$true] %s3525
      %3528 = dma.vmem_to_hbm [thread:$0]  %s3526, 128, %s16, [#allocation5]
    $region73: #{ada_att_core.1} parent=1 // pred_fallthru
      _
    // Predicated region
    $region74: #{ada_att_core.1} parent=1 // pred_check
      _
    $region75: #{ada_att_core.1} parent=1 // pred_check_branch
      %3530 = sbr.rel (0) target = $region77
    $region76: #{ada_att_core.1} parent=1 // pred_region
      _
    $region77: #{ada_att_core.1} parent=1 // pred_fallthru
      _
    // Predicated region
    $region78: #{ada_att_core.1} parent=1 // pred_check
      _
    $region79: #{ada_att_core.1} parent=1 // pred_check_branch
      %3532 = sbr.rel (0) target = $region81
    $region80: #{ada_att_core.1} parent=1 // pred_region
      _
    $region81: #{ada_att_core.1} parent=1 // pred_fallthru
      _
    // Predicated region
    $region82: #{ada_att_core.1} parent=1 // pred_check
      _
    $region83: #{ada_att_core.1} parent=1 // pred_check_branch
      %3534 = sbr.rel (0) target = $region85
    $region84: #{ada_att_core.1} parent=1 // pred_region
      %3535 = dma.done [#allocation5], 128
    $region85: #{ada_att_core.1} parent=1 // pred_fallthru
      _
    // Predicated region
    $region86: #{ada_att_core.1} parent=1 // pred_check
      _
    $region87: #{ada_att_core.1} parent=1 // pred_check_branch
      %3537 = sbr.rel (0) target = $region89
    $region88: #{ada_att_core.1} parent=1 // pred_region
      _
    $region89: #{ada_att_core.1} parent=1 // pred_fallthru
      _
    // Predicated region
    $region90: #{ada_att_core.1} parent=1 // pred_check
      _
    $region91: #{ada_att_core.1} parent=1 // pred_check_branch
      %3539 = sbr.rel (0) target = $region93
    $region92: #{ada_att_core.1} parent=1 // pred_region
      _
    $region93: #{ada_att_core.1} parent=1 // pred_fallthru
      _
    %3540 = vsyncpa [#allocation4], 1
    %3541 = vsyncpa [#allocation5], 1

</llo_original>
